<compile_context>
chip_gen: v7x
topology: tpu7x:2x2x1
jax: 0.10.0
libtpu: 0.0.40
codegen_flags: <defaults>
</compile_context>

<pallas_src>
import functools

import jax
import jax.numpy as jnp
import numpy as np
from jax.experimental import pallas as pl
from jax.experimental.pallas import tpu as pltpu

_BN_EPS = 1e-5


# ----------------------------------------------------------------------------
# Fused forward kernel (one grid step per nb batch elements).
# ----------------------------------------------------------------------------
def _lowrank_fused_kernel(d_ref, t_ref, mask_ref, w_ref, b_ref, o_ref,
                          act_ref, slab_ref,
                          *, H, W, C, cin, nb, n_layers):
    HW = H * W
    Lt = nb * HW                      # total lane width (pixels of nb images)

    # x = D - T, channel-major: (nb, cin, HW), f32.
    x = d_ref[...].astype(jnp.float32) - t_ref[...].astype(jnp.float32)

    # Stage x into the resident activation buffer (C, nb*HW).  Channels
    # [cin, C) are zeroed every step (cheap) so the zero-padded layer-0 weight
    # rows always see exact zeros -- no reliance on scratch state persisting
    # across grid steps or TensorCores.
    act_ref[cin:C, :] = jnp.zeros((C - cin, Lt), act_ref.dtype)
    for b in range(nb):
        act_ref[0:cin, b * HW:(b + 1) * HW] = x[b].astype(act_ref.dtype)

    # Flattened-pixel offsets of the nine 3x3 taps (di-major, dj-minor order;
    # must match the packed-weight and boundary-mask row order).
    offs = [(di - 1) * W + (dj - 1) for di in range(3) for dj in range(3)]

    slab_dt = slab_ref.dtype
    z = None
    for l in range(n_layers):
        act = act_ref[...]                                    # (C, Lt) f32
        # im2col, channel-major: slab[tap*C + c, p] = act[c, p + off_tap],
        # out-of-image neighbours zeroed by the precomputed 0/1 masks.  The
        # roll wraps only at positions the mask zeroes, so stacking nb images
        # along the lane axis is safe.
        for tap in range(9):
            off = offs[tap]
            if off == 0:                                      # centre tap
                v = act
            else:
                v = pltpu.roll(act, shift=(-off) % Lt, axis=1)
                v = v * mask_ref[tap:tap + 1, :]              # (1, Lt) bcast
            slab_ref[tap * C:(tap + 1) * C, :] = v.astype(slab_dt)

        # One MXU contraction per layer: (C, 9C) x (9C, nb*HW), K = 9*C.
        y = jnp.dot(w_ref[l], slab_ref[...],
                    preferred_element_type=jnp.float32)       # (C, Lt) f32
        y = y + b_ref[l]                                      # (C, 1) bias

        if l < n_layers - 1:
            act_ref[...] = jnp.maximum(y, 0.0).astype(act_ref.dtype)   # ReLU
        else:
            z = y[0:1, :]                                     # final conv, cout=1

    # B = x + convs(x): the single output channel broadcasts over cin.
    for b in range(nb):
        zb = z[:, b * HW:(b + 1) * HW]                        # (1, HW)
        o_ref[b] = (x[b] + zb).astype(o_ref.dtype)            # (cin, HW)


def _tap_boundary_masks(H, W, nb):
    """(9, nb*H*W) float32 0/1 masks: tap (di, dj) is valid at output pixel
    (i, j) iff the input pixel (i+di-1, j+dj-1) lies inside the image."""
    idx = np.arange(H * W)
    row, col = idx // W, idx % W
    rows = []
    for di in range(3):
        for dj in range(3):
            ok = np.ones(H * W, dtype=bool)
            if di == 0:
                ok &= row >= 1
            elif di == 2:
                ok &= row <= H - 2
            if dj == 0:
                ok &= col >= 1
            elif dj == 2:
                ok &= col <= W - 2
            rows.append(ok)
    m = np.stack(rows).astype(np.float32)        # (9, H*W)
    return jnp.asarray(np.tile(m, (1, nb)))      # (9, nb*H*W)


def lowrank_forward(D, T, w_packed, b_packed, *, channel=32, nb=1):
    """D, T: NCHW (N, 3, H, W) -> B: NCHW (N, 3, H, W).

    w_packed: (L, C, 9*C) channel-major im2col weights; its dtype is the MXU
              operand dtype (bfloat16 for 2x MXU throughput, float32 for an
              exact check).  b_packed: (L, C, 1) float32 biases.
    nb: batch elements per grid step (pixels stacked along the matmul's lane/N
        axis); N must be divisible by nb."""
    N, cin, H, W = D.shape
    HW = H * W
    C = channel
    L = w_packed.shape[0]
    assert N % nb == 0, "batch size must be divisible by nb"
    assert w_packed.shape == (L, C, 9 * C) and b_packed.shape == (L, C, 1)

    # Lane-dense, free reshape (no transpose): last dim = H*W.
    d2 = D.reshape(N, cin, HW)
    t2 = T.reshape(N, cin, HW)
    masks = _tap_boundary_masks(H, W, nb)

    kernel = functools.partial(
        _lowrank_fused_kernel, H=H, W=W, C=C, cin=cin, nb=nb, n_layers=L)

    out = pl.pallas_call(
        kernel,
        grid=(N // nb,),
        in_specs=[
            pl.BlockSpec((nb, cin, HW), lambda n: (n, 0, 0)),     # D
            pl.BlockSpec((nb, cin, HW), lambda n: (n, 0, 0)),     # T
            # Constant index_maps -> DMA'd once, resident in VMEM.
            pl.BlockSpec((9, nb * HW), lambda n: (0, 0)),         # tap masks
            pl.BlockSpec((L, C, 9 * C), lambda n: (0, 0, 0)),     # weights
            pl.BlockSpec((L, C, 1), lambda n: (0, 0, 0)),         # biases
        ],
        out_specs=pl.BlockSpec((nb, cin, HW), lambda n: (n, 0, 0)),
        out_shape=jax.ShapeDtypeStruct((N, cin, HW), D.dtype),
        scratch_shapes=[
            pltpu.VMEM((C, nb * HW), jnp.float32),            # activations f32
            pltpu.VMEM((9 * C, nb * HW), w_packed.dtype),     # im2col slab
        ],
        compiler_params=pltpu.CompilerParams(
            dimension_semantics=("parallel",)),
    )(d2, t2, masks, w_packed, b_packed)
    return out.reshape(N, cin, H, W)


# ----------------------------------------------------------------------------
# Parameters: synthetic init, BN folding + channel-major packing.
# ----------------------------------------------------------------------------
def init_lowrank_module(key, channel=32, layers=3):
    """Deterministic synthetic init mirroring LowrankModule(channel, layers)."""
    shapes = [(3, 3, 3, channel)]
    shapes += [(3, 3, channel, channel)] * layers
    shapes += [(3, 3, channel, 1)]
    conv_ws, conv_bs, bns = [], [], []
    for i, shp in enumerate(shapes):
        key, kw, kb, k1, k2, k3, k4 = jax.random.split(key, 7)
        fan_in = shp[0] * shp[1] * shp[2]
        conv_ws.append(jax.random.normal(kw, shp, jnp.float32)
                       / jnp.sqrt(float(fan_in)))
        conv_bs.append(0.02 * jax.random.normal(kb, (shp[3],), jnp.float32))
        if i < len(shapes) - 1:          # BN after every conv except the last
            c = shp[3]
            gamma = 1.0 + 0.1 * jax.random.normal(k1, (c,), jnp.float32)
            beta = 0.1 * jax.random.normal(k2, (c,), jnp.float32)
            mean = 0.1 * jax.random.normal(k3, (c,), jnp.float32)
            var = jax.random.uniform(k4, (c,), jnp.float32, 0.5, 1.5)
            bns.append((gamma, beta, mean, var))
    return conv_ws, conv_bs, bns


def pack_params(conv_ws, conv_bs, bns, channel=32, mxu_dtype=jnp.bfloat16):
    """Fold BN (inference) into the convs and pack channel-major matrices.

    Returns:
      W: (L, C, 9*C)  im2col weights, W[l, cout, tap*C + cin]; cin-padded to C
                      for layer 0, cout-padded to C for the last layer (extra
                      rows/columns are exactly zero).
      B: (L, C, 1)    float32 biases (zero-padded past the real cout).
    """
    L = len(conv_ws)
    C = channel
    w_rows, b_rows = [], []
    for l in range(L):
        w = conv_ws[l]            # (3, 3, cin, cout) HWIO
        b = conv_bs[l]            # (cout,)
        if l < L - 1:
            gamma, beta, mean, var = bns[l]
            s = gamma / jnp.sqrt(var + _BN_EPS)
            w = w * s[None, None, None, :]
            b = (b - mean) * s + beta
        ci, co = w.shape[2], w.shape[3]
        wp = jnp.zeros((3, 3, C, C), jnp.float32).at[:, :, :ci, :co].set(w)
        bp = jnp.zeros((C,), jnp.float32).at[:co].set(b)
        w_rows.append(wp.reshape(9 * C, C).T)    # (C, 9C): [cout, tap*C + cin]
        b_rows.append(bp.reshape(C, 1))
    Wm = jnp.stack(w_rows).astype(mxu_dtype)     # (L, C, 9C)
    Bm = jnp.stack(b_rows).astype(jnp.float32)   # (L, C, 1)
    return Wm, Bm


# ----------------------------------------------------------------------------
# Pure-JAX reference (explicit convs + inference-mode BN) for validation.
# ----------------------------------------------------------------------------
def reference_forward(D, T, conv_ws, conv_bs, bns):
    x = D - T                                      # NCHW
    z = x
    L = len(conv_ws)
    for l in range(L):
        z = jax.lax.conv_general_dilated(
            z, conv_ws[l], window_strides=(1, 1), padding="SAME",
            dimension_numbers=("NCHW", "HWIO", "NCHW"))
        z = z + conv_bs[l][None, :, None, None]
        if l < L - 1:
            gamma, beta, mean, var = bns[l]
            z = (z - mean[None, :, None, None]) * (
                gamma / jnp.sqrt(var + _BN_EPS))[None, :, None, None]
            z = z + beta[None, :, None, None]
            z = jnp.maximum(z, 0.0)
    return x + z                                   # (N,1,H,W) broadcasts over 3


if __name__ == "__main__":
    key = jax.random.PRNGKey(0)
    kD, kT, kP = jax.random.split(key, 3)

    N, C_in, H, W = 2, 3, 16, 16          # LowrankModule input is 3-channel
    channel, layers = 32, 3                # module defaults

    D = jax.random.normal(kD, (N, C_in, H, W), jnp.float32)
    T = jax.random.normal(kT, (N, C_in, H, W), jnp.float32)

    conv_ws, conv_bs, bns = init_lowrank_module(kP, channel=channel,
                                                layers=layers)
    ref = reference_forward(D, T, conv_ws, conv_bs, bns)

    # (a) float32 MXU operands, nb=1: tight check of the layout/roll/mask math.
    Wp32, Bp32 = pack_params(conv_ws, conv_bs, bns, channel=channel,
                             mxu_dtype=jnp.float32)
    out32 = jax.block_until_ready(
        lowrank_forward(D, T, Wp32, Bp32, channel=channel, nb=1))
    assert out32.shape == (N, C_in, H, W)
    assert jnp.allclose(out32, ref, rtol=5e-3, atol=5e-3), (
        f"f32 max err {jnp.max(jnp.abs(out32 - ref))}")

    # (b) bfloat16 MXU operands, nb=2 (the performance defaults): loose check
    #     (exactness of the kernel structure is established by (a); bf16 only
    #     trades precision for 2x MXU throughput).
    Wp16, Bp16 = pack_params(conv_ws, conv_bs, bns, channel=channel,
                             mxu_dtype=jnp.bfloat16)
    out16 = jax.block_until_ready(
        lowrank_forward(D, T, Wp16, Bp16, channel=channel, nb=2))
    assert out16.shape == (N, C_in, H, W)
    assert jnp.allclose(out16, ref, rtol=1e-1, atol=1e-1), (
        f"bf16 max err {jnp.max(jnp.abs(out16 - ref))}")

    print("KERNEL_OK")
</pallas_src>

<mosaic_0001>
module attributes {stable_mosaic.version = 11 : i64} {
  func.func @_lowrank_fused_kernel(%arg0: i32, %arg1: memref<1x3x256xf32, #tpu.memory_space<vmem>>, %arg2: memref<1x3x256xf32, #tpu.memory_space<vmem>>, %arg3: memref<9x256xf32, #tpu.memory_space<vmem>>, %arg4: memref<5x32x288xf32, #tpu.memory_space<vmem>>, %arg5: memref<5x32x1xf32, #tpu.memory_space<vmem>>, %arg6: memref<1x3x256xf32, #tpu.memory_space<vmem>>, %arg7: memref<32x256xf32, #tpu.memory_space<vmem>>, %arg8: memref<288x256xf32, #tpu.memory_space<vmem>>) attributes {dimension_semantics = [#tpu.dimension_semantics<parallel>], iteration_bounds = array<i64: 2>, scalar_prefetch = 0 : i64, scratch_operands = 2 : i64, tpu.core_type = #tpu.core_type<tc>, window_params = [{transform_indices = @transform_0, window_bounds = array<i64: 1, 3, 256>}, {transform_indices = @transform_1, window_bounds = array<i64: 1, 3, 256>}, {pipeline_mode = #tpu.pipeline_mode<synchronous>, transform_indices = @transform_2, window_bounds = array<i64: 9, 256>}, {pipeline_mode = #tpu.pipeline_mode<synchronous>, transform_indices = @transform_3, window_bounds = array<i64: 5, 32, 288>}, {pipeline_mode = #tpu.pipeline_mode<synchronous>, transform_indices = @transform_4, window_bounds = array<i64: 5, 32, 1>}, {transform_indices = @transform_5, window_bounds = array<i64: 1, 3, 256>}]} {
    %c0 = arith.constant 0 : index
    %c0_0 = arith.constant 0 : index
    %c0_1 = arith.constant 0 : index
    %0 = vector.load %arg1[%c0, %c0_0, %c0_1] : memref<1x3x256xf32, #tpu.memory_space<vmem>>, vector<1x3x256xf32>
    %c0_2 = arith.constant 0 : index
    %c0_3 = arith.constant 0 : index
    %c0_4 = arith.constant 0 : index
    %1 = vector.load %arg2[%c0_2, %c0_3, %c0_4] : memref<1x3x256xf32, #tpu.memory_space<vmem>>, vector<1x3x256xf32>
    %2 = arith.subf %0, %1 : vector<1x3x256xf32>
    %cst = arith.constant 0.000000e+00 : f32
    %3 = vector.broadcast %cst : f32 to vector<29x256xf32>
    %c3 = arith.constant 3 : index
    %c0_5 = arith.constant 0 : index
    %4 = vector.load %arg7[%c3, %c0_5] : memref<32x256xf32, #tpu.memory_space<vmem>>, vector<29x256xf32>
    tpu.vector_store %arg7[%c3, %c0_5], %3 {strides = array<i32>} : memref<32x256xf32, #tpu.memory_space<vmem>>, vector<29x256xf32>,
    %5 = vector.shape_cast %2 : vector<1x3x256xf32> to vector<3x256xf32>
    %c0_6 = arith.constant 0 : index
    %c0_7 = arith.constant 0 : index
    %6 = vector.load %arg7[%c0_6, %c0_7] : memref<32x256xf32, #tpu.memory_space<vmem>>, vector<3x256xf32>
    tpu.vector_store %arg7[%c0_6, %c0_7], %5 {strides = array<i32>} : memref<32x256xf32, #tpu.memory_space<vmem>>, vector<3x256xf32>,
    %c0_8 = arith.constant 0 : index
    %c0_9 = arith.constant 0 : index
    %7 = vector.load %arg7[%c0_8, %c0_9] : memref<32x256xf32, #tpu.memory_space<vmem>>, vector<32x256xf32>
    %c17_i32 = arith.constant 17 : i32
    %8 = tpu.dynamic_rotate %7 by %c17_i32 dim 1 : vector<32x256xf32>, i32 -> vector<32x256xf32>
    %c0_10 = arith.constant 0 : index
    %c0_11 = arith.constant 0 : index
    %9 = vector.load %arg3[%c0_10, %c0_11] : memref<9x256xf32, #tpu.memory_space<vmem>>, vector<1x256xf32>
    %10 = vector.broadcast %9 : vector<1x256xf32> to vector<32x256xf32>
    %11 = arith.mulf %8, %10 : vector<32x256xf32>
    %c0_12 = arith.constant 0 : index
    %c0_13 = arith.constant 0 : index
    %12 = vector.load %arg8[%c0_12, %c0_13] : memref<288x256xf32, #tpu.memory_space<vmem>>, vector<32x256xf32>
    tpu.vector_store %arg8[%c0_12, %c0_13], %11 {strides = array<i32>} : memref<288x256xf32, #tpu.memory_space<vmem>>, vector<32x256xf32>,
    %c16_i32 = arith.constant 16 : i32
    %13 = tpu.dynamic_rotate %7 by %c16_i32 dim 1 : vector<32x256xf32>, i32 -> vector<32x256xf32>
    %c1 = arith.constant 1 : index
    %c0_14 = arith.constant 0 : index
    %14 = vector.load %arg3[%c1, %c0_14] : memref<9x256xf32, #tpu.memory_space<vmem>>, vector<1x256xf32>
    %15 = vector.broadcast %14 : vector<1x256xf32> to vector<32x256xf32>
    %16 = arith.mulf %13, %15 : vector<32x256xf32>
    %c32 = arith.constant 32 : index
    %c0_15 = arith.constant 0 : index
    %17 = vector.load %arg8[%c32, %c0_15] : memref<288x256xf32, #tpu.memory_space<vmem>>, vector<32x256xf32>
    tpu.vector_store %arg8[%c32, %c0_15], %16 {strides = array<i32>} : memref<288x256xf32, #tpu.memory_space<vmem>>, vector<32x256xf32>,
    %c15_i32 = arith.constant 15 : i32
    %18 = tpu.dynamic_rotate %7 by %c15_i32 dim 1 : vector<32x256xf32>, i32 -> vector<32x256xf32>
    %c2 = arith.constant 2 : index
    %c0_16 = arith.constant 0 : index
    %19 = vector.load %arg3[%c2, %c0_16] : memref<9x256xf32, #tpu.memory_space<vmem>>, vector<1x256xf32>
    %20 = vector.broadcast %19 : vector<1x256xf32> to vector<32x256xf32>
    %21 = arith.mulf %18, %20 : vector<32x256xf32>
    %c64 = arith.constant 64 : index
    %c0_17 = arith.constant 0 : index
    %22 = vector.load %arg8[%c64, %c0_17] : memref<288x256xf32, #tpu.memory_space<vmem>>, vector<32x256xf32>
    tpu.vector_store %arg8[%c64, %c0_17], %21 {strides = array<i32>} : memref<288x256xf32, #tpu.memory_space<vmem>>, vector<32x256xf32>,
    %c1_i32 = arith.constant 1 : i32
    %23 = tpu.dynamic_rotate %7 by %c1_i32 dim 1 : vector<32x256xf32>, i32 -> vector<32x256xf32>
    %c3_18 = arith.constant 3 : index
    %c0_19 = arith.constant 0 : index
    %24 = vector.load %arg3[%c3_18, %c0_19] : memref<9x256xf32, #tpu.memory_space<vmem>>, vector<1x256xf32>
    %25 = vector.broadcast %24 : vector<1x256xf32> to vector<32x256xf32>
    %26 = arith.mulf %23, %25 : vector<32x256xf32>
    %c96 = arith.constant 96 : index
    %c0_20 = arith.constant 0 : index
    %27 = vector.load %arg8[%c96, %c0_20] : memref<288x256xf32, #tpu.memory_space<vmem>>, vector<32x256xf32>
    tpu.vector_store %arg8[%c96, %c0_20], %26 {strides = array<i32>} : memref<288x256xf32, #tpu.memory_space<vmem>>, vector<32x256xf32>,
    %c128 = arith.constant 128 : index
    %c0_21 = arith.constant 0 : index
    %28 = vector.load %arg8[%c128, %c0_21] : memref<288x256xf32, #tpu.memory_space<vmem>>, vector<32x256xf32>
    tpu.vector_store %arg8[%c128, %c0_21], %7 {strides = array<i32>} : memref<288x256xf32, #tpu.memory_space<vmem>>, vector<32x256xf32>,
    %c255_i32 = arith.constant 255 : i32
    %29 = tpu.dynamic_rotate %7 by %c255_i32 dim 1 : vector<32x256xf32>, i32 -> vector<32x256xf32>
    %c5 = arith.constant 5 : index
    %c0_22 = arith.constant 0 : index
    %30 = vector.load %arg3[%c5, %c0_22] : memref<9x256xf32, #tpu.memory_space<vmem>>, vector<1x256xf32>
    %31 = vector.broadcast %30 : vector<1x256xf32> to vector<32x256xf32>
    %32 = arith.mulf %29, %31 : vector<32x256xf32>
    %c160 = arith.constant 160 : index
    %c0_23 = arith.constant 0 : index
    %33 = vector.load %arg8[%c160, %c0_23] : memref<288x256xf32, #tpu.memory_space<vmem>>, vector<32x256xf32>
    tpu.vector_store %arg8[%c160, %c0_23], %32 {strides = array<i32>} : memref<288x256xf32, #tpu.memory_space<vmem>>, vector<32x256xf32>,
    %c241_i32 = arith.constant 241 : i32
    %34 = tpu.dynamic_rotate %7 by %c241_i32 dim 1 : vector<32x256xf32>, i32 -> vector<32x256xf32>
    %c6 = arith.constant 6 : index
    %c0_24 = arith.constant 0 : index
    %35 = vector.load %arg3[%c6, %c0_24] : memref<9x256xf32, #tpu.memory_space<vmem>>, vector<1x256xf32>
    %36 = vector.broadcast %35 : vector<1x256xf32> to vector<32x256xf32>
    %37 = arith.mulf %34, %36 : vector<32x256xf32>
    %c192 = arith.constant 192 : index
    %c0_25 = arith.constant 0 : index
    %38 = vector.load %arg8[%c192, %c0_25] : memref<288x256xf32, #tpu.memory_space<vmem>>, vector<32x256xf32>
    tpu.vector_store %arg8[%c192, %c0_25], %37 {strides = array<i32>} : memref<288x256xf32, #tpu.memory_space<vmem>>, vector<32x256xf32>,
    %c240_i32 = arith.constant 240 : i32
    %39 = tpu.dynamic_rotate %7 by %c240_i32 dim 1 : vector<32x256xf32>, i32 -> vector<32x256xf32>
    %c7 = arith.constant 7 : index
    %c0_26 = arith.constant 0 : index
    %40 = vector.load %arg3[%c7, %c0_26] : memref<9x256xf32, #tpu.memory_space<vmem>>, vector<1x256xf32>
    %41 = vector.broadcast %40 : vector<1x256xf32> to vector<32x256xf32>
    %42 = arith.mulf %39, %41 : vector<32x256xf32>
    %c224 = arith.constant 224 : index
    %c0_27 = arith.constant 0 : index
    %43 = vector.load %arg8[%c224, %c0_27] : memref<288x256xf32, #tpu.memory_space<vmem>>, vector<32x256xf32>
    tpu.vector_store %arg8[%c224, %c0_27], %42 {strides = array<i32>} : memref<288x256xf32, #tpu.memory_space<vmem>>, vector<32x256xf32>,
    %c239_i32 = arith.constant 239 : i32
    %44 = tpu.dynamic_rotate %7 by %c239_i32 dim 1 : vector<32x256xf32>, i32 -> vector<32x256xf32>
    %c8 = arith.constant 8 : index
    %c0_28 = arith.constant 0 : index
    %45 = vector.load %arg3[%c8, %c0_28] : memref<9x256xf32, #tpu.memory_space<vmem>>, vector<1x256xf32>
    %46 = vector.broadcast %45 : vector<1x256xf32> to vector<32x256xf32>
    %47 = arith.mulf %44, %46 : vector<32x256xf32>
    %c256 = arith.constant 256 : index
    %c0_29 = arith.constant 0 : index
    %48 = vector.load %arg8[%c256, %c0_29] : memref<288x256xf32, #tpu.memory_space<vmem>>, vector<32x256xf32>
    tpu.vector_store %arg8[%c256, %c0_29], %47 {strides = array<i32>} : memref<288x256xf32, #tpu.memory_space<vmem>>, vector<32x256xf32>,
    %c0_30 = arith.constant 0 : index
    %c0_31 = arith.constant 0 : index
    %c0_32 = arith.constant 0 : index
    %49 = vector.load %arg4[%c0_30, %c0_31, %c0_32] : memref<5x32x288xf32, #tpu.memory_space<vmem>>, vector<1x32x288xf32>
    %50 = vector.shape_cast %49 : vector<1x32x288xf32> to vector<32x288xf32>
    %c0_33 = arith.constant 0 : index
    %c0_34 = arith.constant 0 : index
    %51 = vector.load %arg8[%c0_33, %c0_34] : memref<288x256xf32, #tpu.memory_space<vmem>>, vector<288x256xf32>
    %cst_35 = arith.constant dense<0.000000e+00> : vector<32x256xf32>
    %52 = tpu.matmul %50, %51, %cst_35 {dimension_numbers = #tpu.dot_dimension_numbers<[1], [0], [0], [1], [0, 0, 1, 1], [], []>} : vector<32x288xf32>, vector<288x256xf32>, vector<32x256xf32> -> vector<32x256xf32>
    %c0_36 = arith.constant 0 : index
    %c0_37 = arith.constant 0 : index
    %c0_38 = arith.constant 0 : index
    %53 = vector.load %arg5[%c0_36, %c0_37, %c0_38] : memref<5x32x1xf32, #tpu.memory_space<vmem>>, vector<1x32x1xf32>
    %54 = vector.shape_cast %53 : vector<1x32x1xf32> to vector<32x1xf32>
    %55 = vector.broadcast %54 : vector<32x1xf32> to vector<32x256xf32>
    %56 = arith.addf %52, %55 : vector<32x256xf32>
    %cst_39 = arith.constant 0.000000e+00 : f32
    %57 = vector.broadcast %cst_39 : f32 to vector<32x256xf32>
    %58 = arith.maximumf %56, %57 : vector<32x256xf32>
    %c0_40 = arith.constant 0 : index
    %c0_41 = arith.constant 0 : index
    %59 = vector.load %arg7[%c0_40, %c0_41] : memref<32x256xf32, #tpu.memory_space<vmem>>, vector<32x256xf32>
    tpu.vector_store %arg7[%c0_40, %c0_41], %58 {strides = array<i32>} : memref<32x256xf32, #tpu.memory_space<vmem>>, vector<32x256xf32>,
    %c0_42 = arith.constant 0 : index
    %c0_43 = arith.constant 0 : index
    %60 = vector.load %arg7[%c0_42, %c0_43] : memref<32x256xf32, #tpu.memory_space<vmem>>, vector<32x256xf32>
    %c17_i32_44 = arith.constant 17 : i32
    %61 = tpu.dynamic_rotate %60 by %c17_i32_44 dim 1 : vector<32x256xf32>, i32 -> vector<32x256xf32>
    %c0_45 = arith.constant 0 : index
    %c0_46 = arith.constant 0 : index
    %62 = vector.load %arg3[%c0_45, %c0_46] : memref<9x256xf32, #tpu.memory_space<vmem>>, vector<1x256xf32>
    %63 = vector.broadcast %62 : vector<1x256xf32> to vector<32x256xf32>
    %64 = arith.mulf %61, %63 : vector<32x256xf32>
    %c0_47 = arith.constant 0 : index
    %c0_48 = arith.constant 0 : index
    %65 = vector.load %arg8[%c0_47, %c0_48] : memref<288x256xf32, #tpu.memory_space<vmem>>, vector<32x256xf32>
    tpu.vector_store %arg8[%c0_47, %c0_48], %64 {strides = array<i32>} : memref<288x256xf32, #tpu.memory_space<vmem>>, vector<32x256xf32>,
    %c16_i32_49 = arith.constant 16 : i32
    %66 = tpu.dynamic_rotate %60 by %c16_i32_49 dim 1 : vector<32x256xf32>, i32 -> vector<32x256xf32>
    %c1_50 = arith.constant 1 : index
    %c0_51 = arith.constant 0 : index
    %67 = vector.load %arg3[%c1_50, %c0_51] : memref<9x256xf32, #tpu.memory_space<vmem>>, vector<1x256xf32>
    %68 = vector.broadcast %67 : vector<1x256xf32> to vector<32x256xf32>
    %69 = arith.mulf %66, %68 : vector<32x256xf32>
    %c32_52 = arith.constant 32 : index
    %c0_53 = arith.constant 0 : index
    %70 = vector.load %arg8[%c32_52, %c0_53] : memref<288x256xf32, #tpu.memory_space<vmem>>, vector<32x256xf32>
    tpu.vector_store %arg8[%c32_52, %c0_53], %69 {strides = array<i32>} : memref<288x256xf32, #tpu.memory_space<vmem>>, vector<32x256xf32>,
    %c15_i32_54 = arith.constant 15 : i32
    %71 = tpu.dynamic_rotate %60 by %c15_i32_54 dim 1 : vector<32x256xf32>, i32 -> vector<32x256xf32>
    %c2_55 = arith.constant 2 : index
    %c0_56 = arith.constant 0 : index
    %72 = vector.load %arg3[%c2_55, %c0_56] : memref<9x256xf32, #tpu.memory_space<vmem>>, vector<1x256xf32>
    %73 = vector.broadcast %72 : vector<1x256xf32> to vector<32x256xf32>
    %74 = arith.mulf %71, %73 : vector<32x256xf32>
    %c64_57 = arith.constant 64 : index
    %c0_58 = arith.constant 0 : index
    %75 = vector.load %arg8[%c64_57, %c0_58] : memref<288x256xf32, #tpu.memory_space<vmem>>, vector<32x256xf32>
    tpu.vector_store %arg8[%c64_57, %c0_58], %74 {strides = array<i32>} : memref<288x256xf32, #tpu.memory_space<vmem>>, vector<32x256xf32>,
    %c1_i32_59 = arith.constant 1 : i32
    %76 = tpu.dynamic_rotate %60 by %c1_i32_59 dim 1 : vector<32x256xf32>, i32 -> vector<32x256xf32>
    %c3_60 = arith.constant 3 : index
    %c0_61 = arith.constant 0 : index
    %77 = vector.load %arg3[%c3_60, %c0_61] : memref<9x256xf32, #tpu.memory_space<vmem>>, vector<1x256xf32>
    %78 = vector.broadcast %77 : vector<1x256xf32> to vector<32x256xf32>
    %79 = arith.mulf %76, %78 : vector<32x256xf32>
    %c96_62 = arith.constant 96 : index
    %c0_63 = arith.constant 0 : index
    %80 = vector.load %arg8[%c96_62, %c0_63] : memref<288x256xf32, #tpu.memory_space<vmem>>, vector<32x256xf32>
    tpu.vector_store %arg8[%c96_62, %c0_63], %79 {strides = array<i32>} : memref<288x256xf32, #tpu.memory_space<vmem>>, vector<32x256xf32>,
    %c128_64 = arith.constant 128 : index
    %c0_65 = arith.constant 0 : index
    %81 = vector.load %arg8[%c128_64, %c0_65] : memref<288x256xf32, #tpu.memory_space<vmem>>, vector<32x256xf32>
    tpu.vector_store %arg8[%c128_64, %c0_65], %60 {strides = array<i32>} : memref<288x256xf32, #tpu.memory_space<vmem>>, vector<32x256xf32>,
    %c255_i32_66 = arith.constant 255 : i32
    %82 = tpu.dynamic_rotate %60 by %c255_i32_66 dim 1 : vector<32x256xf32>, i32 -> vector<32x256xf32>
    %c5_67 = arith.constant 5 : index
    %c0_68 = arith.constant 0 : index
    %83 = vector.load %arg3[%c5_67, %c0_68] : memref<9x256xf32, #tpu.memory_space<vmem>>, vector<1x256xf32>
    %84 = vector.broadcast %83 : vector<1x256xf32> to vector<32x256xf32>
    %85 = arith.mulf %82, %84 : vector<32x256xf32>
    %c160_69 = arith.constant 160 : index
    %c0_70 = arith.constant 0 : index
    %86 = vector.load %arg8[%c160_69, %c0_70] : memref<288x256xf32, #tpu.memory_space<vmem>>, vector<32x256xf32>
    tpu.vector_store %arg8[%c160_69, %c0_70], %85 {strides = array<i32>} : memref<288x256xf32, #tpu.memory_space<vmem>>, vector<32x256xf32>,
    %c241_i32_71 = arith.constant 241 : i32
    %87 = tpu.dynamic_rotate %60 by %c241_i32_71 dim 1 : vector<32x256xf32>, i32 -> vector<32x256xf32>
    %c6_72 = arith.constant 6 : index
    %c0_73 = arith.constant 0 : index
    %88 = vector.load %arg3[%c6_72, %c0_73] : memref<9x256xf32, #tpu.memory_space<vmem>>, vector<1x256xf32>
    %89 = vector.broadcast %88 : vector<1x256xf32> to vector<32x256xf32>
    %90 = arith.mulf %87, %89 : vector<32x256xf32>
    %c192_74 = arith.constant 192 : index
    %c0_75 = arith.constant 0 : index
    %91 = vector.load %arg8[%c192_74, %c0_75] : memref<288x256xf32, #tpu.memory_space<vmem>>, vector<32x256xf32>
    tpu.vector_store %arg8[%c192_74, %c0_75], %90 {strides = array<i32>} : memref<288x256xf32, #tpu.memory_space<vmem>>, vector<32x256xf32>,
    %c240_i32_76 = arith.constant 240 : i32
    %92 = tpu.dynamic_rotate %60 by %c240_i32_76 dim 1 : vector<32x256xf32>, i32 -> vector<32x256xf32>
    %c7_77 = arith.constant 7 : index
    %c0_78 = arith.constant 0 : index
    %93 = vector.load %arg3[%c7_77, %c0_78] : memref<9x256xf32, #tpu.memory_space<vmem>>, vector<1x256xf32>
    %94 = vector.broadcast %93 : vector<1x256xf32> to vector<32x256xf32>
    %95 = arith.mulf %92, %94 : vector<32x256xf32>
    %c224_79 = arith.constant 224 : index
    %c0_80 = arith.constant 0 : index
    %96 = vector.load %arg8[%c224_79, %c0_80] : memref<288x256xf32, #tpu.memory_space<vmem>>, vector<32x256xf32>
    tpu.vector_store %arg8[%c224_79, %c0_80], %95 {strides = array<i32>} : memref<288x256xf32, #tpu.memory_space<vmem>>, vector<32x256xf32>,
    %c239_i32_81 = arith.constant 239 : i32
    %97 = tpu.dynamic_rotate %60 by %c239_i32_81 dim 1 : vector<32x256xf32>, i32 -> vector<32x256xf32>
    %c8_82 = arith.constant 8 : index
    %c0_83 = arith.constant 0 : index
    %98 = vector.load %arg3[%c8_82, %c0_83] : memref<9x256xf32, #tpu.memory_space<vmem>>, vector<1x256xf32>
    %99 = vector.broadcast %98 : vector<1x256xf32> to vector<32x256xf32>
    %100 = arith.mulf %97, %99 : vector<32x256xf32>
    %c256_84 = arith.constant 256 : index
    %c0_85 = arith.constant 0 : index
    %101 = vector.load %arg8[%c256_84, %c0_85] : memref<288x256xf32, #tpu.memory_space<vmem>>, vector<32x256xf32>
    tpu.vector_store %arg8[%c256_84, %c0_85], %100 {strides = array<i32>} : memref<288x256xf32, #tpu.memory_space<vmem>>, vector<32x256xf32>,
    %c1_86 = arith.constant 1 : index
    %c0_87 = arith.constant 0 : index
    %c0_88 = arith.constant 0 : index
    %102 = vector.load %arg4[%c1_86, %c0_87, %c0_88] : memref<5x32x288xf32, #tpu.memory_space<vmem>>, vector<1x32x288xf32>
    %103 = vector.shape_cast %102 : vector<1x32x288xf32> to vector<32x288xf32>
    %c0_89 = arith.constant 0 : index
    %c0_90 = arith.constant 0 : index
    %104 = vector.load %arg8[%c0_89, %c0_90] : memref<288x256xf32, #tpu.memory_space<vmem>>, vector<288x256xf32>
    %cst_91 = arith.constant dense<0.000000e+00> : vector<32x256xf32>
    %105 = tpu.matmul %103, %104, %cst_91 {dimension_numbers = #tpu.dot_dimension_numbers<[1], [0], [0], [1], [0, 0, 1, 1], [], []>} : vector<32x288xf32>, vector<288x256xf32>, vector<32x256xf32> -> vector<32x256xf32>
    %c1_92 = arith.constant 1 : index
    %c0_93 = arith.constant 0 : index
    %c0_94 = arith.constant 0 : index
    %106 = vector.load %arg5[%c1_92, %c0_93, %c0_94] : memref<5x32x1xf32, #tpu.memory_space<vmem>>, vector<1x32x1xf32>
    %107 = vector.shape_cast %106 : vector<1x32x1xf32> to vector<32x1xf32>
    %108 = vector.broadcast %107 : vector<32x1xf32> to vector<32x256xf32>
    %109 = arith.addf %105, %108 : vector<32x256xf32>
    %cst_95 = arith.constant 0.000000e+00 : f32
    %110 = vector.broadcast %cst_95 : f32 to vector<32x256xf32>
    %111 = arith.maximumf %109, %110 : vector<32x256xf32>
    %c0_96 = arith.constant 0 : index
    %c0_97 = arith.constant 0 : index
    %112 = vector.load %arg7[%c0_96, %c0_97] : memref<32x256xf32, #tpu.memory_space<vmem>>, vector<32x256xf32>
    tpu.vector_store %arg7[%c0_96, %c0_97], %111 {strides = array<i32>} : memref<32x256xf32, #tpu.memory_space<vmem>>, vector<32x256xf32>,
    %c0_98 = arith.constant 0 : index
    %c0_99 = arith.constant 0 : index
    %113 = vector.load %arg7[%c0_98, %c0_99] : memref<32x256xf32, #tpu.memory_space<vmem>>, vector<32x256xf32>
    %c17_i32_100 = arith.constant 17 : i32
    %114 = tpu.dynamic_rotate %113 by %c17_i32_100 dim 1 : vector<32x256xf32>, i32 -> vector<32x256xf32>
    %c0_101 = arith.constant 0 : index
    %c0_102 = arith.constant 0 : index
    %115 = vector.load %arg3[%c0_101, %c0_102] : memref<9x256xf32, #tpu.memory_space<vmem>>, vector<1x256xf32>
    %116 = vector.broadcast %115 : vector<1x256xf32> to vector<32x256xf32>
    %117 = arith.mulf %114, %116 : vector<32x256xf32>
    %c0_103 = arith.constant 0 : index
    %c0_104 = arith.constant 0 : index
    %118 = vector.load %arg8[%c0_103, %c0_104] : memref<288x256xf32, #tpu.memory_space<vmem>>, vector<32x256xf32>
    tpu.vector_store %arg8[%c0_103, %c0_104], %117 {strides = array<i32>} : memref<288x256xf32, #tpu.memory_space<vmem>>, vector<32x256xf32>,
    %c16_i32_105 = arith.constant 16 : i32
    %119 = tpu.dynamic_rotate %113 by %c16_i32_105 dim 1 : vector<32x256xf32>, i32 -> vector<32x256xf32>
    %c1_106 = arith.constant 1 : index
    %c0_107 = arith.constant 0 : index
    %120 = vector.load %arg3[%c1_106, %c0_107] : memref<9x256xf32, #tpu.memory_space<vmem>>, vector<1x256xf32>
    %121 = vector.broadcast %120 : vector<1x256xf32> to vector<32x256xf32>
    %122 = arith.mulf %119, %121 : vector<32x256xf32>
    %c32_108 = arith.constant 32 : index
    %c0_109 = arith.constant 0 : index
    %123 = vector.load %arg8[%c32_108, %c0_109] : memref<288x256xf32, #tpu.memory_space<vmem>>, vector<32x256xf32>
    tpu.vector_store %arg8[%c32_108, %c0_109], %122 {strides = array<i32>} : memref<288x256xf32, #tpu.memory_space<vmem>>, vector<32x256xf32>,
    %c15_i32_110 = arith.constant 15 : i32
    %124 = tpu.dynamic_rotate %113 by %c15_i32_110 dim 1 : vector<32x256xf32>, i32 -> vector<32x256xf32>
    %c2_111 = arith.constant 2 : index
    %c0_112 = arith.constant 0 : index
    %125 = vector.load %arg3[%c2_111, %c0_112] : memref<9x256xf32, #tpu.memory_space<vmem>>, vector<1x256xf32>
    %126 = vector.broadcast %125 : vector<1x256xf32> to vector<32x256xf32>
    %127 = arith.mulf %124, %126 : vector<32x256xf32>
    %c64_113 = arith.constant 64 : index
    %c0_114 = arith.constant 0 : index
    %128 = vector.load %arg8[%c64_113, %c0_114] : memref<288x256xf32, #tpu.memory_space<vmem>>, vector<32x256xf32>
    tpu.vector_store %arg8[%c64_113, %c0_114], %127 {strides = array<i32>} : memref<288x256xf32, #tpu.memory_space<vmem>>, vector<32x256xf32>,
    %c1_i32_115 = arith.constant 1 : i32
    %129 = tpu.dynamic_rotate %113 by %c1_i32_115 dim 1 : vector<32x256xf32>, i32 -> vector<32x256xf32>
    %c3_116 = arith.constant 3 : index
    %c0_117 = arith.constant 0 : index
    %130 = vector.load %arg3[%c3_116, %c0_117] : memref<9x256xf32, #tpu.memory_space<vmem>>, vector<1x256xf32>
    %131 = vector.broadcast %130 : vector<1x256xf32> to vector<32x256xf32>
    %132 = arith.mulf %129, %131 : vector<32x256xf32>
    %c96_118 = arith.constant 96 : index
    %c0_119 = arith.constant 0 : index
    %133 = vector.load %arg8[%c96_118, %c0_119] : memref<288x256xf32, #tpu.memory_space<vmem>>, vector<32x256xf32>
    tpu.vector_store %arg8[%c96_118, %c0_119], %132 {strides = array<i32>} : memref<288x256xf32, #tpu.memory_space<vmem>>, vector<32x256xf32>,
    %c128_120 = arith.constant 128 : index
    %c0_121 = arith.constant 0 : index
    %134 = vector.load %arg8[%c128_120, %c0_121] : memref<288x256xf32, #tpu.memory_space<vmem>>, vector<32x256xf32>
    tpu.vector_store %arg8[%c128_120, %c0_121], %113 {strides = array<i32>} : memref<288x256xf32, #tpu.memory_space<vmem>>, vector<32x256xf32>,
    %c255_i32_122 = arith.constant 255 : i32
    %135 = tpu.dynamic_rotate %113 by %c255_i32_122 dim 1 : vector<32x256xf32>, i32 -> vector<32x256xf32>
    %c5_123 = arith.constant 5 : index
    %c0_124 = arith.constant 0 : index
    %136 = vector.load %arg3[%c5_123, %c0_124] : memref<9x256xf32, #tpu.memory_space<vmem>>, vector<1x256xf32>
    %137 = vector.broadcast %136 : vector<1x256xf32> to vector<32x256xf32>
    %138 = arith.mulf %135, %137 : vector<32x256xf32>
    %c160_125 = arith.constant 160 : index
    %c0_126 = arith.constant 0 : index
    %139 = vector.load %arg8[%c160_125, %c0_126] : memref<288x256xf32, #tpu.memory_space<vmem>>, vector<32x256xf32>
    tpu.vector_store %arg8[%c160_125, %c0_126], %138 {strides = array<i32>} : memref<288x256xf32, #tpu.memory_space<vmem>>, vector<32x256xf32>,
    %c241_i32_127 = arith.constant 241 : i32
    %140 = tpu.dynamic_rotate %113 by %c241_i32_127 dim 1 : vector<32x256xf32>, i32 -> vector<32x256xf32>
    %c6_128 = arith.constant 6 : index
    %c0_129 = arith.constant 0 : index
    %141 = vector.load %arg3[%c6_128, %c0_129] : memref<9x256xf32, #tpu.memory_space<vmem>>, vector<1x256xf32>
    %142 = vector.broadcast %141 : vector<1x256xf32> to vector<32x256xf32>
    %143 = arith.mulf %140, %142 : vector<32x256xf32>
    %c192_130 = arith.constant 192 : index
    %c0_131 = arith.constant 0 : index
    %144 = vector.load %arg8[%c192_130, %c0_131] : memref<288x256xf32, #tpu.memory_space<vmem>>, vector<32x256xf32>
    tpu.vector_store %arg8[%c192_130, %c0_131], %143 {strides = array<i32>} : memref<288x256xf32, #tpu.memory_space<vmem>>, vector<32x256xf32>,
    %c240_i32_132 = arith.constant 240 : i32
    %145 = tpu.dynamic_rotate %113 by %c240_i32_132 dim 1 : vector<32x256xf32>, i32 -> vector<32x256xf32>
    %c7_133 = arith.constant 7 : index
    %c0_134 = arith.constant 0 : index
    %146 = vector.load %arg3[%c7_133, %c0_134] : memref<9x256xf32, #tpu.memory_space<vmem>>, vector<1x256xf32>
    %147 = vector.broadcast %146 : vector<1x256xf32> to vector<32x256xf32>
    %148 = arith.mulf %145, %147 : vector<32x256xf32>
    %c224_135 = arith.constant 224 : index
    %c0_136 = arith.constant 0 : index
    %149 = vector.load %arg8[%c224_135, %c0_136] : memref<288x256xf32, #tpu.memory_space<vmem>>, vector<32x256xf32>
    tpu.vector_store %arg8[%c224_135, %c0_136], %148 {strides = array<i32>} : memref<288x256xf32, #tpu.memory_space<vmem>>, vector<32x256xf32>,
    %c239_i32_137 = arith.constant 239 : i32
    %150 = tpu.dynamic_rotate %113 by %c239_i32_137 dim 1 : vector<32x256xf32>, i32 -> vector<32x256xf32>
    %c8_138 = arith.constant 8 : index
    %c0_139 = arith.constant 0 : index
    %151 = vector.load %arg3[%c8_138, %c0_139] : memref<9x256xf32, #tpu.memory_space<vmem>>, vector<1x256xf32>
    %152 = vector.broadcast %151 : vector<1x256xf32> to vector<32x256xf32>
    %153 = arith.mulf %150, %152 : vector<32x256xf32>
    %c256_140 = arith.constant 256 : index
    %c0_141 = arith.constant 0 : index
    %154 = vector.load %arg8[%c256_140, %c0_141] : memref<288x256xf32, #tpu.memory_space<vmem>>, vector<32x256xf32>
    tpu.vector_store %arg8[%c256_140, %c0_141], %153 {strides = array<i32>} : memref<288x256xf32, #tpu.memory_space<vmem>>, vector<32x256xf32>,
    %c2_142 = arith.constant 2 : index
    %c0_143 = arith.constant 0 : index
    %c0_144 = arith.constant 0 : index
    %155 = vector.load %arg4[%c2_142, %c0_143, %c0_144] : memref<5x32x288xf32, #tpu.memory_space<vmem>>, vector<1x32x288xf32>
    %156 = vector.shape_cast %155 : vector<1x32x288xf32> to vector<32x288xf32>
    %c0_145 = arith.constant 0 : index
    %c0_146 = arith.constant 0 : index
    %157 = vector.load %arg8[%c0_145, %c0_146] : memref<288x256xf32, #tpu.memory_space<vmem>>, vector<288x256xf32>
    %cst_147 = arith.constant dense<0.000000e+00> : vector<32x256xf32>
    %158 = tpu.matmul %156, %157, %cst_147 {dimension_numbers = #tpu.dot_dimension_numbers<[1], [0], [0], [1], [0, 0, 1, 1], [], []>} : vector<32x288xf32>, vector<288x256xf32>, vector<32x256xf32> -> vector<32x256xf32>
    %c2_148 = arith.constant 2 : index
    %c0_149 = arith.constant 0 : index
    %c0_150 = arith.constant 0 : index
    %159 = vector.load %arg5[%c2_148, %c0_149, %c0_150] : memref<5x32x1xf32, #tpu.memory_space<vmem>>, vector<1x32x1xf32>
    %160 = vector.shape_cast %159 : vector<1x32x1xf32> to vector<32x1xf32>
    %161 = vector.broadcast %160 : vector<32x1xf32> to vector<32x256xf32>
    %162 = arith.addf %158, %161 : vector<32x256xf32>
    %cst_151 = arith.constant 0.000000e+00 : f32
    %163 = vector.broadcast %cst_151 : f32 to vector<32x256xf32>
    %164 = arith.maximumf %162, %163 : vector<32x256xf32>
    %c0_152 = arith.constant 0 : index
    %c0_153 = arith.constant 0 : index
    %165 = vector.load %arg7[%c0_152, %c0_153] : memref<32x256xf32, #tpu.memory_space<vmem>>, vector<32x256xf32>
    tpu.vector_store %arg7[%c0_152, %c0_153], %164 {strides = array<i32>} : memref<32x256xf32, #tpu.memory_space<vmem>>, vector<32x256xf32>,
    %c0_154 = arith.constant 0 : index
    %c0_155 = arith.constant 0 : index
    %166 = vector.load %arg7[%c0_154, %c0_155] : memref<32x256xf32, #tpu.memory_space<vmem>>, vector<32x256xf32>
    %c17_i32_156 = arith.constant 17 : i32
    %167 = tpu.dynamic_rotate %166 by %c17_i32_156 dim 1 : vector<32x256xf32>, i32 -> vector<32x256xf32>
    %c0_157 = arith.constant 0 : index
    %c0_158 = arith.constant 0 : index
    %168 = vector.load %arg3[%c0_157, %c0_158] : memref<9x256xf32, #tpu.memory_space<vmem>>, vector<1x256xf32>
    %169 = vector.broadcast %168 : vector<1x256xf32> to vector<32x256xf32>
    %170 = arith.mulf %167, %169 : vector<32x256xf32>
    %c0_159 = arith.constant 0 : index
    %c0_160 = arith.constant 0 : index
    %171 = vector.load %arg8[%c0_159, %c0_160] : memref<288x256xf32, #tpu.memory_space<vmem>>, vector<32x256xf32>
    tpu.vector_store %arg8[%c0_159, %c0_160], %170 {strides = array<i32>} : memref<288x256xf32, #tpu.memory_space<vmem>>, vector<32x256xf32>,
    %c16_i32_161 = arith.constant 16 : i32
    %172 = tpu.dynamic_rotate %166 by %c16_i32_161 dim 1 : vector<32x256xf32>, i32 -> vector<32x256xf32>
    %c1_162 = arith.constant 1 : index
    %c0_163 = arith.constant 0 : index
    %173 = vector.load %arg3[%c1_162, %c0_163] : memref<9x256xf32, #tpu.memory_space<vmem>>, vector<1x256xf32>
    %174 = vector.broadcast %173 : vector<1x256xf32> to vector<32x256xf32>
    %175 = arith.mulf %172, %174 : vector<32x256xf32>
    %c32_164 = arith.constant 32 : index
    %c0_165 = arith.constant 0 : index
    %176 = vector.load %arg8[%c32_164, %c0_165] : memref<288x256xf32, #tpu.memory_space<vmem>>, vector<32x256xf32>
    tpu.vector_store %arg8[%c32_164, %c0_165], %175 {strides = array<i32>} : memref<288x256xf32, #tpu.memory_space<vmem>>, vector<32x256xf32>,
    %c15_i32_166 = arith.constant 15 : i32
    %177 = tpu.dynamic_rotate %166 by %c15_i32_166 dim 1 : vector<32x256xf32>, i32 -> vector<32x256xf32>
    %c2_167 = arith.constant 2 : index
    %c0_168 = arith.constant 0 : index
    %178 = vector.load %arg3[%c2_167, %c0_168] : memref<9x256xf32, #tpu.memory_space<vmem>>, vector<1x256xf32>
    %179 = vector.broadcast %178 : vector<1x256xf32> to vector<32x256xf32>
    %180 = arith.mulf %177, %179 : vector<32x256xf32>
    %c64_169 = arith.constant 64 : index
    %c0_170 = arith.constant 0 : index
    %181 = vector.load %arg8[%c64_169, %c0_170] : memref<288x256xf32, #tpu.memory_space<vmem>>, vector<32x256xf32>
    tpu.vector_store %arg8[%c64_169, %c0_170], %180 {strides = array<i32>} : memref<288x256xf32, #tpu.memory_space<vmem>>, vector<32x256xf32>,
    %c1_i32_171 = arith.constant 1 : i32
    %182 = tpu.dynamic_rotate %166 by %c1_i32_171 dim 1 : vector<32x256xf32>, i32 -> vector<32x256xf32>
    %c3_172 = arith.constant 3 : index
    %c0_173 = arith.constant 0 : index
    %183 = vector.load %arg3[%c3_172, %c0_173] : memref<9x256xf32, #tpu.memory_space<vmem>>, vector<1x256xf32>
    %184 = vector.broadcast %183 : vector<1x256xf32> to vector<32x256xf32>
    %185 = arith.mulf %182, %184 : vector<32x256xf32>
    %c96_174 = arith.constant 96 : index
    %c0_175 = arith.constant 0 : index
    %186 = vector.load %arg8[%c96_174, %c0_175] : memref<288x256xf32, #tpu.memory_space<vmem>>, vector<32x256xf32>
    tpu.vector_store %arg8[%c96_174, %c0_175], %185 {strides = array<i32>} : memref<288x256xf32, #tpu.memory_space<vmem>>, vector<32x256xf32>,
    %c128_176 = arith.constant 128 : index
    %c0_177 = arith.constant 0 : index
    %187 = vector.load %arg8[%c128_176, %c0_177] : memref<288x256xf32, #tpu.memory_space<vmem>>, vector<32x256xf32>
    tpu.vector_store %arg8[%c128_176, %c0_177], %166 {strides = array<i32>} : memref<288x256xf32, #tpu.memory_space<vmem>>, vector<32x256xf32>,
    %c255_i32_178 = arith.constant 255 : i32
    %188 = tpu.dynamic_rotate %166 by %c255_i32_178 dim 1 : vector<32x256xf32>, i32 -> vector<32x256xf32>
    %c5_179 = arith.constant 5 : index
    %c0_180 = arith.constant 0 : index
    %189 = vector.load %arg3[%c5_179, %c0_180] : memref<9x256xf32, #tpu.memory_space<vmem>>, vector<1x256xf32>
    %190 = vector.broadcast %189 : vector<1x256xf32> to vector<32x256xf32>
    %191 = arith.mulf %188, %190 : vector<32x256xf32>
    %c160_181 = arith.constant 160 : index
    %c0_182 = arith.constant 0 : index
    %192 = vector.load %arg8[%c160_181, %c0_182] : memref<288x256xf32, #tpu.memory_space<vmem>>, vector<32x256xf32>
    tpu.vector_store %arg8[%c160_181, %c0_182], %191 {strides = array<i32>} : memref<288x256xf32, #tpu.memory_space<vmem>>, vector<32x256xf32>,
    %c241_i32_183 = arith.constant 241 : i32
    %193 = tpu.dynamic_rotate %166 by %c241_i32_183 dim 1 : vector<32x256xf32>, i32 -> vector<32x256xf32>
    %c6_184 = arith.constant 6 : index
    %c0_185 = arith.constant 0 : index
    %194 = vector.load %arg3[%c6_184, %c0_185] : memref<9x256xf32, #tpu.memory_space<vmem>>, vector<1x256xf32>
    %195 = vector.broadcast %194 : vector<1x256xf32> to vector<32x256xf32>
    %196 = arith.mulf %193, %195 : vector<32x256xf32>
    %c192_186 = arith.constant 192 : index
    %c0_187 = arith.constant 0 : index
    %197 = vector.load %arg8[%c192_186, %c0_187] : memref<288x256xf32, #tpu.memory_space<vmem>>, vector<32x256xf32>
    tpu.vector_store %arg8[%c192_186, %c0_187], %196 {strides = array<i32>} : memref<288x256xf32, #tpu.memory_space<vmem>>, vector<32x256xf32>,
    %c240_i32_188 = arith.constant 240 : i32
    %198 = tpu.dynamic_rotate %166 by %c240_i32_188 dim 1 : vector<32x256xf32>, i32 -> vector<32x256xf32>
    %c7_189 = arith.constant 7 : index
    %c0_190 = arith.constant 0 : index
    %199 = vector.load %arg3[%c7_189, %c0_190] : memref<9x256xf32, #tpu.memory_space<vmem>>, vector<1x256xf32>
    %200 = vector.broadcast %199 : vector<1x256xf32> to vector<32x256xf32>
    %201 = arith.mulf %198, %200 : vector<32x256xf32>
    %c224_191 = arith.constant 224 : index
    %c0_192 = arith.constant 0 : index
    %202 = vector.load %arg8[%c224_191, %c0_192] : memref<288x256xf32, #tpu.memory_space<vmem>>, vector<32x256xf32>
    tpu.vector_store %arg8[%c224_191, %c0_192], %201 {strides = array<i32>} : memref<288x256xf32, #tpu.memory_space<vmem>>, vector<32x256xf32>,
    %c239_i32_193 = arith.constant 239 : i32
    %203 = tpu.dynamic_rotate %166 by %c239_i32_193 dim 1 : vector<32x256xf32>, i32 -> vector<32x256xf32>
    %c8_194 = arith.constant 8 : index
    %c0_195 = arith.constant 0 : index
    %204 = vector.load %arg3[%c8_194, %c0_195] : memref<9x256xf32, #tpu.memory_space<vmem>>, vector<1x256xf32>
    %205 = vector.broadcast %204 : vector<1x256xf32> to vector<32x256xf32>
    %206 = arith.mulf %203, %205 : vector<32x256xf32>
    %c256_196 = arith.constant 256 : index
    %c0_197 = arith.constant 0 : index
    %207 = vector.load %arg8[%c256_196, %c0_197] : memref<288x256xf32, #tpu.memory_space<vmem>>, vector<32x256xf32>
    tpu.vector_store %arg8[%c256_196, %c0_197], %206 {strides = array<i32>} : memref<288x256xf32, #tpu.memory_space<vmem>>, vector<32x256xf32>,
    %c3_198 = arith.constant 3 : index
    %c0_199 = arith.constant 0 : index
    %c0_200 = arith.constant 0 : index
    %208 = vector.load %arg4[%c3_198, %c0_199, %c0_200] : memref<5x32x288xf32, #tpu.memory_space<vmem>>, vector<1x32x288xf32>
    %209 = vector.shape_cast %208 : vector<1x32x288xf32> to vector<32x288xf32>
    %c0_201 = arith.constant 0 : index
    %c0_202 = arith.constant 0 : index
    %210 = vector.load %arg8[%c0_201, %c0_202] : memref<288x256xf32, #tpu.memory_space<vmem>>, vector<288x256xf32>
    %cst_203 = arith.constant dense<0.000000e+00> : vector<32x256xf32>
    %211 = tpu.matmul %209, %210, %cst_203 {dimension_numbers = #tpu.dot_dimension_numbers<[1], [0], [0], [1], [0, 0, 1, 1], [], []>} : vector<32x288xf32>, vector<288x256xf32>, vector<32x256xf32> -> vector<32x256xf32>
    %c3_204 = arith.constant 3 : index
    %c0_205 = arith.constant 0 : index
    %c0_206 = arith.constant 0 : index
    %212 = vector.load %arg5[%c3_204, %c0_205, %c0_206] : memref<5x32x1xf32, #tpu.memory_space<vmem>>, vector<1x32x1xf32>
    %213 = vector.shape_cast %212 : vector<1x32x1xf32> to vector<32x1xf32>
    %214 = vector.broadcast %213 : vector<32x1xf32> to vector<32x256xf32>
    %215 = arith.addf %211, %214 : vector<32x256xf32>
    %cst_207 = arith.constant 0.000000e+00 : f32
    %216 = vector.broadcast %cst_207 : f32 to vector<32x256xf32>
    %217 = arith.maximumf %215, %216 : vector<32x256xf32>
    %c0_208 = arith.constant 0 : index
    %c0_209 = arith.constant 0 : index
    %218 = vector.load %arg7[%c0_208, %c0_209] : memref<32x256xf32, #tpu.memory_space<vmem>>, vector<32x256xf32>
    tpu.vector_store %arg7[%c0_208, %c0_209], %217 {strides = array<i32>} : memref<32x256xf32, #tpu.memory_space<vmem>>, vector<32x256xf32>,
    %c0_210 = arith.constant 0 : index
    %c0_211 = arith.constant 0 : index
    %219 = vector.load %arg7[%c0_210, %c0_211] : memref<32x256xf32, #tpu.memory_space<vmem>>, vector<32x256xf32>
    %c17_i32_212 = arith.constant 17 : i32
    %220 = tpu.dynamic_rotate %219 by %c17_i32_212 dim 1 : vector<32x256xf32>, i32 -> vector<32x256xf32>
    %c0_213 = arith.constant 0 : index
    %c0_214 = arith.constant 0 : index
    %221 = vector.load %arg3[%c0_213, %c0_214] : memref<9x256xf32, #tpu.memory_space<vmem>>, vector<1x256xf32>
    %222 = vector.broadcast %221 : vector<1x256xf32> to vector<32x256xf32>
    %223 = arith.mulf %220, %222 : vector<32x256xf32>
    %c0_215 = arith.constant 0 : index
    %c0_216 = arith.constant 0 : index
    %224 = vector.load %arg8[%c0_215, %c0_216] : memref<288x256xf32, #tpu.memory_space<vmem>>, vector<32x256xf32>
    tpu.vector_store %arg8[%c0_215, %c0_216], %223 {strides = array<i32>} : memref<288x256xf32, #tpu.memory_space<vmem>>, vector<32x256xf32>,
    %c16_i32_217 = arith.constant 16 : i32
    %225 = tpu.dynamic_rotate %219 by %c16_i32_217 dim 1 : vector<32x256xf32>, i32 -> vector<32x256xf32>
    %c1_218 = arith.constant 1 : index
    %c0_219 = arith.constant 0 : index
    %226 = vector.load %arg3[%c1_218, %c0_219] : memref<9x256xf32, #tpu.memory_space<vmem>>, vector<1x256xf32>
    %227 = vector.broadcast %226 : vector<1x256xf32> to vector<32x256xf32>
    %228 = arith.mulf %225, %227 : vector<32x256xf32>
    %c32_220 = arith.constant 32 : index
    %c0_221 = arith.constant 0 : index
    %229 = vector.load %arg8[%c32_220, %c0_221] : memref<288x256xf32, #tpu.memory_space<vmem>>, vector<32x256xf32>
    tpu.vector_store %arg8[%c32_220, %c0_221], %228 {strides = array<i32>} : memref<288x256xf32, #tpu.memory_space<vmem>>, vector<32x256xf32>,
    %c15_i32_222 = arith.constant 15 : i32
    %230 = tpu.dynamic_rotate %219 by %c15_i32_222 dim 1 : vector<32x256xf32>, i32 -> vector<32x256xf32>
    %c2_223 = arith.constant 2 : index
    %c0_224 = arith.constant 0 : index
    %231 = vector.load %arg3[%c2_223, %c0_224] : memref<9x256xf32, #tpu.memory_space<vmem>>, vector<1x256xf32>
    %232 = vector.broadcast %231 : vector<1x256xf32> to vector<32x256xf32>
    %233 = arith.mulf %230, %232 : vector<32x256xf32>
    %c64_225 = arith.constant 64 : index
    %c0_226 = arith.constant 0 : index
    %234 = vector.load %arg8[%c64_225, %c0_226] : memref<288x256xf32, #tpu.memory_space<vmem>>, vector<32x256xf32>
    tpu.vector_store %arg8[%c64_225, %c0_226], %233 {strides = array<i32>} : memref<288x256xf32, #tpu.memory_space<vmem>>, vector<32x256xf32>,
    %c1_i32_227 = arith.constant 1 : i32
    %235 = tpu.dynamic_rotate %219 by %c1_i32_227 dim 1 : vector<32x256xf32>, i32 -> vector<32x256xf32>
    %c3_228 = arith.constant 3 : index
    %c0_229 = arith.constant 0 : index
    %236 = vector.load %arg3[%c3_228, %c0_229] : memref<9x256xf32, #tpu.memory_space<vmem>>, vector<1x256xf32>
    %237 = vector.broadcast %236 : vector<1x256xf32> to vector<32x256xf32>
    %238 = arith.mulf %235, %237 : vector<32x256xf32>
    %c96_230 = arith.constant 96 : index
    %c0_231 = arith.constant 0 : index
    %239 = vector.load %arg8[%c96_230, %c0_231] : memref<288x256xf32, #tpu.memory_space<vmem>>, vector<32x256xf32>
    tpu.vector_store %arg8[%c96_230, %c0_231], %238 {strides = array<i32>} : memref<288x256xf32, #tpu.memory_space<vmem>>, vector<32x256xf32>,
    %c128_232 = arith.constant 128 : index
    %c0_233 = arith.constant 0 : index
    %240 = vector.load %arg8[%c128_232, %c0_233] : memref<288x256xf32, #tpu.memory_space<vmem>>, vector<32x256xf32>
    tpu.vector_store %arg8[%c128_232, %c0_233], %219 {strides = array<i32>} : memref<288x256xf32, #tpu.memory_space<vmem>>, vector<32x256xf32>,
    %c255_i32_234 = arith.constant 255 : i32
    %241 = tpu.dynamic_rotate %219 by %c255_i32_234 dim 1 : vector<32x256xf32>, i32 -> vector<32x256xf32>
    %c5_235 = arith.constant 5 : index
    %c0_236 = arith.constant 0 : index
    %242 = vector.load %arg3[%c5_235, %c0_236] : memref<9x256xf32, #tpu.memory_space<vmem>>, vector<1x256xf32>
    %243 = vector.broadcast %242 : vector<1x256xf32> to vector<32x256xf32>
    %244 = arith.mulf %241, %243 : vector<32x256xf32>
    %c160_237 = arith.constant 160 : index
    %c0_238 = arith.constant 0 : index
    %245 = vector.load %arg8[%c160_237, %c0_238] : memref<288x256xf32, #tpu.memory_space<vmem>>, vector<32x256xf32>
    tpu.vector_store %arg8[%c160_237, %c0_238], %244 {strides = array<i32>} : memref<288x256xf32, #tpu.memory_space<vmem>>, vector<32x256xf32>,
    %c241_i32_239 = arith.constant 241 : i32
    %246 = tpu.dynamic_rotate %219 by %c241_i32_239 dim 1 : vector<32x256xf32>, i32 -> vector<32x256xf32>
    %c6_240 = arith.constant 6 : index
    %c0_241 = arith.constant 0 : index
    %247 = vector.load %arg3[%c6_240, %c0_241] : memref<9x256xf32, #tpu.memory_space<vmem>>, vector<1x256xf32>
    %248 = vector.broadcast %247 : vector<1x256xf32> to vector<32x256xf32>
    %249 = arith.mulf %246, %248 : vector<32x256xf32>
    %c192_242 = arith.constant 192 : index
    %c0_243 = arith.constant 0 : index
    %250 = vector.load %arg8[%c192_242, %c0_243] : memref<288x256xf32, #tpu.memory_space<vmem>>, vector<32x256xf32>
    tpu.vector_store %arg8[%c192_242, %c0_243], %249 {strides = array<i32>} : memref<288x256xf32, #tpu.memory_space<vmem>>, vector<32x256xf32>,
    %c240_i32_244 = arith.constant 240 : i32
    %251 = tpu.dynamic_rotate %219 by %c240_i32_244 dim 1 : vector<32x256xf32>, i32 -> vector<32x256xf32>
    %c7_245 = arith.constant 7 : index
    %c0_246 = arith.constant 0 : index
    %252 = vector.load %arg3[%c7_245, %c0_246] : memref<9x256xf32, #tpu.memory_space<vmem>>, vector<1x256xf32>
    %253 = vector.broadcast %252 : vector<1x256xf32> to vector<32x256xf32>
    %254 = arith.mulf %251, %253 : vector<32x256xf32>
    %c224_247 = arith.constant 224 : index
    %c0_248 = arith.constant 0 : index
    %255 = vector.load %arg8[%c224_247, %c0_248] : memref<288x256xf32, #tpu.memory_space<vmem>>, vector<32x256xf32>
    tpu.vector_store %arg8[%c224_247, %c0_248], %254 {strides = array<i32>} : memref<288x256xf32, #tpu.memory_space<vmem>>, vector<32x256xf32>,
    %c239_i32_249 = arith.constant 239 : i32
    %256 = tpu.dynamic_rotate %219 by %c239_i32_249 dim 1 : vector<32x256xf32>, i32 -> vector<32x256xf32>
    %c8_250 = arith.constant 8 : index
    %c0_251 = arith.constant 0 : index
    %257 = vector.load %arg3[%c8_250, %c0_251] : memref<9x256xf32, #tpu.memory_space<vmem>>, vector<1x256xf32>
    %258 = vector.broadcast %257 : vector<1x256xf32> to vector<32x256xf32>
    %259 = arith.mulf %256, %258 : vector<32x256xf32>
    %c256_252 = arith.constant 256 : index
    %c0_253 = arith.constant 0 : index
    %260 = vector.load %arg8[%c256_252, %c0_253] : memref<288x256xf32, #tpu.memory_space<vmem>>, vector<32x256xf32>
    tpu.vector_store %arg8[%c256_252, %c0_253], %259 {strides = array<i32>} : memref<288x256xf32, #tpu.memory_space<vmem>>, vector<32x256xf32>,
    %c4 = arith.constant 4 : index
    %c0_254 = arith.constant 0 : index
    %c0_255 = arith.constant 0 : index
    %261 = vector.load %arg4[%c4, %c0_254, %c0_255] : memref<5x32x288xf32, #tpu.memory_space<vmem>>, vector<1x32x288xf32>
    %262 = vector.shape_cast %261 : vector<1x32x288xf32> to vector<32x288xf32>
    %c0_256 = arith.constant 0 : index
    %c0_257 = arith.constant 0 : index
    %263 = vector.load %arg8[%c0_256, %c0_257] : memref<288x256xf32, #tpu.memory_space<vmem>>, vector<288x256xf32>
    %cst_258 = arith.constant dense<0.000000e+00> : vector<32x256xf32>
    %264 = tpu.matmul %262, %263, %cst_258 {dimension_numbers = #tpu.dot_dimension_numbers<[1], [0], [0], [1], [0, 0, 1, 1], [], []>} : vector<32x288xf32>, vector<288x256xf32>, vector<32x256xf32> -> vector<32x256xf32>
    %c4_259 = arith.constant 4 : index
    %c0_260 = arith.constant 0 : index
    %c0_261 = arith.constant 0 : index
    %265 = vector.load %arg5[%c4_259, %c0_260, %c0_261] : memref<5x32x1xf32, #tpu.memory_space<vmem>>, vector<1x32x1xf32>
    %266 = vector.shape_cast %265 : vector<1x32x1xf32> to vector<32x1xf32>
    %267 = vector.broadcast %266 : vector<32x1xf32> to vector<32x256xf32>
    %268 = arith.addf %264, %267 : vector<32x256xf32>
    %269 = vector.extract_strided_slice %268 {offsets = [0, 0], sizes = [1, 256], strides = [1, 1]} : vector<32x256xf32> to vector<1x256xf32>
    %270 = vector.shape_cast %2 : vector<1x3x256xf32> to vector<3x256xf32>
    %271 = vector.broadcast %269 : vector<1x256xf32> to vector<3x256xf32>
    %272 = arith.addf %270, %271 : vector<3x256xf32>
    %c0_262 = arith.constant 0 : index
    %c0_263 = arith.constant 0 : index
    %c0_264 = arith.constant 0 : index
    %273 = vector.load %arg6[%c0_262, %c0_263, %c0_264] : memref<1x3x256xf32, #tpu.memory_space<vmem>>, vector<1x3x256xf32>
    %274 = vector.shape_cast %273 : vector<1x3x256xf32> to vector<3x256xf32>
    %275 = vector.shape_cast %272 : vector<3x256xf32> to vector<1x3x256xf32>
    tpu.vector_store %arg6[%c0_262, %c0_263, %c0_264], %275 {strides = array<i32>} : memref<1x3x256xf32, #tpu.memory_space<vmem>>, vector<1x3x256xf32>,
    return
  }
  func.func @transform_0(%arg0: i32) -> (i32, i32, i32) {
    %c0_i32 = arith.constant 0 : i32
    %c0_i32_0 = arith.constant 0 : i32
    %c0_i32_1 = arith.constant 0 : i32
    return %arg0, %c0_i32, %c0_i32_0 : i32, i32, i32
  }
  func.func @transform_1(%arg0: i32) -> (i32, i32, i32) {
    %c0_i32 = arith.constant 0 : i32
    %c0_i32_0 = arith.constant 0 : i32
    %c0_i32_1 = arith.constant 0 : i32
    return %arg0, %c0_i32, %c0_i32_0 : i32, i32, i32
  }
  func.func @transform_2(%arg0: i32) -> (i32, i32) {
    %c0_i32 = arith.constant 0 : i32
    %c0_i32_0 = arith.constant 0 : i32
    %c0_i32_1 = arith.constant 0 : i32
    return %c0_i32, %c0_i32_0 : i32, i32
  }
  func.func @transform_3(%arg0: i32) -> (i32, i32, i32) {
    %c0_i32 = arith.constant 0 : i32
    %c0_i32_0 = arith.constant 0 : i32
    %c0_i32_1 = arith.constant 0 : i32
    %c0_i32_2 = arith.constant 0 : i32
    return %c0_i32, %c0_i32_0, %c0_i32_1 : i32, i32, i32
  }
  func.func @transform_4(%arg0: i32) -> (i32, i32, i32) {
    %c0_i32 = arith.constant 0 : i32
    %c0_i32_0 = arith.constant 0 : i32
    %c0_i32_1 = arith.constant 0 : i32
    %c0_i32_2 = arith.constant 0 : i32
    return %c0_i32, %c0_i32_0, %c0_i32_1 : i32, i32, i32
  }
  func.func @transform_5(%arg0: i32) -> (i32, i32, i32) {
    %c0_i32 = arith.constant 0 : i32
    %c0_i32_0 = arith.constant 0 : i32
    %c0_i32_1 = arith.constant 0 : i32
    return %arg0, %c0_i32, %c0_i32_0 : i32, i32, i32
  }
}

</mosaic_0001>

<llo_original>
// kernel: tpu_custom_call.1
$region0: #{tpu_custom_call.1}
  #allocation0 [shape = 'u32[]', space=smem, size = 0x4, offset = 0x4, fixed_abs, tag = 'smem constant byte address 0x4 - core index']
  #allocation1 [shape = 'u32[144,128]{1,0:T(1,128)}', space=vmem, size = 0x12000, scoped, tag = 'internal scratch']
  #allocation2 [shape = 'f32[32,256]{1,0:T(8,128)}', space=vmem, size = 0x8000, scoped, tag = 'scratch operand']
  #allocation3 [shape = 'f32[288,256]{1,0:T(8,128)}', space=vmem, size = 0x48000, scoped, tag = 'scratch operand']
  %s0 = inlined_call_operand.vmem [shape: f32[2,3,256], index: 0, kind: input, shape index: {}]
  %s1 = inlined_call_operand.vmem [shape: f32[2,3,256], index: 1, kind: input, shape index: {}]
  %s2 = inlined_call_operand.vmem [shape: f32[9,256], index: 2, kind: input, shape index: {}]
  %s3 = inlined_call_operand.hbm [shape: f32[5,32,288], index: 3, kind: input, shape index: {}]
  %s4 = inlined_call_operand.vmem [shape: f32[5,32,1], index: 4, kind: input, shape index: {}]
  %s5 = inlined_call_operand.vmem [shape: f32[2,3,256], index: 5, kind: output, shape index: {}]
  %s6 = sld [smem:[#allocation0]]
  $region57: #{tpu_custom_call.1} parent=0
    _
  %s8 = ssub.s32 1, %s6
  %s9 = scalar_select 0, %s8, %s6
  $region1: #{tpu_custom_call.1} parent=0
    #allocation4 [shape = 'u8[245760]{0}', space=vmem, size = 0x3c000, scoped, tag = 'input window, operand 3, single buffered']
    #allocation5 [shape = 's32[2]{0}', space=sflag, size = 0x8, scoped, tag = 'scoped memory for tpu_custom_call.1']
    %10 = vsyncpa [#allocation5], 0
    loop: start=0, step=1, limit=4
    $region2: #{tpu_custom_call.1} parent=1 // loop_pre_header
      _
    $region3: #{tpu_custom_call.1} parent=1 // loop_header
      %s12 = sphi 0, %s16
      %p13 = scmp.ge.s32.totalorder %s12, 4
      %s22 = sphi 0, %s24
      %s25 = sphi 0, %s22
      %s26 = sphi 0, %s25
      %s42 = sphi 0, %s26
      %s48 = sphi 0, %s50
      %s51 = sphi 0, %s48
      %s52 = sphi 0, %s51
      %s68 = sphi 0, %s52
      %s72 = sphi 0, %s72
      %s74 = sphi 0, %s72
      %s75 = sphi 0, %s74
      %s89 = sphi 0, %s75
      %s93 = sphi 0, %s93
      %s95 = sphi 0, %s93
      %s96 = sphi 0, %s95
      %s110 = sphi 0, %s96
      %s114 = sphi 0, %s114
      %s116 = sphi 0, %s114
      %s117 = sphi 0, %s116
      %s131 = sphi 0, %s117
      %s137 = sphi 0, %s139
      %s140 = sphi 0, %s137
      %s141 = sphi 0, %s140
      %s157 = sphi 0, %s141
    $region4: #{tpu_custom_call.1} parent=1 // loop_header_branch
      %15 = sbr.rel (%p13) target = $region8
    $region5: #{tpu_custom_call.1} parent=1 // loop_body
      %s17 = ssub.s32 %s12, 1
      %s18 = ssub.s32 %s12, 2
      %s19 = sadd.s32 %s12, 1
      %s20 = ssub.s32 %s12, %s19
      %p21 = scmp.eq.s32.totalorder %s20, 0
      %s23 = sadd.s32 %s22, 1
      %s24 = scalar_select %p21, %s22, %s23
      %p27 = pneg %p21
      %p28 = scmp.eq.s32.totalorder %s12, 1
      %p29 = por %p27, %p28
      %p30 = scmp.ne.s32.totalorder %s22, %s25
      %p31 = scmp.eq.s32.totalorder %s12, 0
      %p32 = por %p30, %p31
      %p33 = scmp.ne.s32.totalorder %s22, %s25
      %p34 = scmp.eq.s32.totalorder %s17, 1
      %p35 = por %p33, %p34
      %p36 = scmp.ne.s32.totalorder %s25, %s26
      %p37 = scmp.eq.s32.totalorder %s17, 0
      %p38 = por %p36, %p37
      %p39 = scmp.ne.s32.totalorder %s25, %s26
      %p40 = scmp.eq.s32.totalorder %s18, 1
      %p41 = por %p39, %p40
      %p43 = scmp.ne.s32.totalorder %s26, %s42
      %p44 = scmp.eq.s32.totalorder %s18, 0
      %p45 = por %p43, %p44
      %s46 = ssub.s32 %s12, %s19
      %p47 = scmp.eq.s32.totalorder %s46, 0
      %s49 = sadd.s32 %s48, 1
      %s50 = scalar_select %p47, %s48, %s49
      %p53 = pneg %p47
      %p54 = scmp.eq.s32.totalorder %s12, 1
      %p55 = por %p53, %p54
      %p56 = scmp.ne.s32.totalorder %s48, %s51
      %p57 = scmp.eq.s32.totalorder %s12, 0
      %p58 = por %p56, %p57
      %p59 = scmp.ne.s32.totalorder %s48, %s51
      %p60 = scmp.eq.s32.totalorder %s17, 1
      %p61 = por %p59, %p60
      %p62 = scmp.ne.s32.totalorder %s51, %s52
      %p63 = scmp.eq.s32.totalorder %s17, 0
      %p64 = por %p62, %p63
      %p65 = scmp.ne.s32.totalorder %s51, %s52
      %p66 = scmp.eq.s32.totalorder %s18, 1
      %p67 = por %p65, %p66
      %p69 = scmp.ne.s32.totalorder %s52, %s68
      %p70 = scmp.eq.s32.totalorder %s18, 0
      %p71 = por %p69, %p70
      %s73 = sadd.s32 %s72, 1
      %p76 = scmp.eq.s32.totalorder %s12, 1
      %p77 = scmp.ne.s32.totalorder %s72, %s74
      %p78 = scmp.eq.s32.totalorder %s12, 0
      %p79 = por %p77, %p78
      %p80 = scmp.ne.s32.totalorder %s72, %s74
      %p81 = scmp.eq.s32.totalorder %s17, 1
      %p82 = por %p80, %p81
      %p83 = scmp.ne.s32.totalorder %s74, %s75
      %p84 = scmp.eq.s32.totalorder %s17, 0
      %p85 = por %p83, %p84
      %p86 = scmp.ne.s32.totalorder %s74, %s75
      %p87 = scmp.eq.s32.totalorder %s18, 1
      %p88 = por %p86, %p87
      %p90 = scmp.ne.s32.totalorder %s75, %s89
      %p91 = scmp.eq.s32.totalorder %s18, 0
      %p92 = por %p90, %p91
      %s94 = sadd.s32 %s93, 1
      %p97 = scmp.eq.s32.totalorder %s12, 1
      %p98 = scmp.ne.s32.totalorder %s93, %s95
      %p99 = scmp.eq.s32.totalorder %s12, 0
      %p100 = por %p98, %p99
      %p101 = scmp.ne.s32.totalorder %s93, %s95
      %p102 = scmp.eq.s32.totalorder %s17, 1
      %p103 = por %p101, %p102
      %p104 = scmp.ne.s32.totalorder %s95, %s96
      %p105 = scmp.eq.s32.totalorder %s17, 0
      %p106 = por %p104, %p105
      %p107 = scmp.ne.s32.totalorder %s95, %s96
      %p108 = scmp.eq.s32.totalorder %s18, 1
      %p109 = por %p107, %p108
      %p111 = scmp.ne.s32.totalorder %s96, %s110
      %p112 = scmp.eq.s32.totalorder %s18, 0
      %p113 = por %p111, %p112
      %s115 = sadd.s32 %s114, 1
      %p118 = scmp.eq.s32.totalorder %s12, 1
      %p119 = scmp.ne.s32.totalorder %s114, %s116
      %p120 = scmp.eq.s32.totalorder %s12, 0
      %p121 = por %p119, %p120
      %p122 = scmp.ne.s32.totalorder %s114, %s116
      %p123 = scmp.eq.s32.totalorder %s17, 1
      %p124 = por %p122, %p123
      %p125 = scmp.ne.s32.totalorder %s116, %s117
      %p126 = scmp.eq.s32.totalorder %s17, 0
      %p127 = por %p125, %p126
      %p128 = scmp.ne.s32.totalorder %s116, %s117
      %p129 = scmp.eq.s32.totalorder %s18, 1
      %p130 = por %p128, %p129
      %p132 = scmp.ne.s32.totalorder %s117, %s131
      %p133 = scmp.eq.s32.totalorder %s18, 0
      %p134 = por %p132, %p133
      %s135 = ssub.s32 %s12, %s19
      %p136 = scmp.eq.s32.totalorder %s135, 0
      %s138 = sadd.s32 %s137, 1
      %s139 = scalar_select %p136, %s137, %s138
      %p142 = pneg %p136
      %p143 = scmp.eq.s32.totalorder %s12, 1
      %p144 = por %p142, %p143
      %p145 = scmp.ne.s32.totalorder %s137, %s140
      %p146 = scmp.eq.s32.totalorder %s12, 0
      %p147 = por %p145, %p146
      %p148 = scmp.ne.s32.totalorder %s137, %s140
      %p149 = scmp.eq.s32.totalorder %s17, 1
      %p150 = por %p148, %p149
      %p151 = scmp.ne.s32.totalorder %s140, %s141
      %p152 = scmp.eq.s32.totalorder %s17, 0
      %p153 = por %p151, %p152
      %p154 = scmp.ne.s32.totalorder %s140, %s141
      %p155 = scmp.eq.s32.totalorder %s18, 1
      %p156 = por %p154, %p155
      %p158 = scmp.ne.s32.totalorder %s141, %s157
      %p159 = scmp.eq.s32.totalorder %s18, 0
      %p160 = por %p158, %p159
      %p161 = scmp.le.s32.totalorder 1, %s12
      %p162 = scmp.lt.s32.totalorder %s12, 3
      %p163 = pnand %p161, %p162
      %p164 = pneg %p163
      // Predicated region
      $region9: #{tpu_custom_call.1} parent=5 // pred_check
        _
      $region10: #{tpu_custom_call.1} parent=5 // pred_check_branch
        %166 = sbr.rel (%p163) target = $region12
      $region11: #{tpu_custom_call.1} parent=5 // pred_region
        %s167 = ssub.s32 %s12, 1
        // Predicated region
        $region13: #{tpu_custom_call.1} parent=11 // pred_check
          %p168 = pneg %p85
        $region14: #{tpu_custom_call.1} parent=11 // pred_check_branch
          %170 = sbr.rel (%p168) target = $region16
        $region15: #{tpu_custom_call.1} parent=11 // pred_region
          _
        $region16: #{tpu_custom_call.1} parent=11 // pred_fallthru
          _
        // Predicated region
        $region17: #{tpu_custom_call.1} parent=11 // pred_check
          %p171 = pneg %p106
        $region18: #{tpu_custom_call.1} parent=11 // pred_check_branch
          %173 = sbr.rel (%p171) target = $region20
        $region19: #{tpu_custom_call.1} parent=11 // pred_region
          %s175 = ssub.s32 7680, 7680
          %176 = vsyncadd [#allocation5], %s175
          %s177 = sshll.u32 [#allocation4], 4
          %s178 = int_to_ptr.vmem [resolvable:$true] %s177
          %183 = dma.hbm_to_vmem [thread:$0]  %s3, 7680, %s178, [#allocation5], 384, 384, 24
        $region20: #{tpu_custom_call.1} parent=11 // pred_fallthru
          _
        // Predicated region
        $region21: #{tpu_custom_call.1} parent=11 // pred_check
          %p184 = pneg %p127
        $region22: #{tpu_custom_call.1} parent=11 // pred_check_branch
          %186 = sbr.rel (%p184) target = $region24
        $region23: #{tpu_custom_call.1} parent=11 // pred_region
          _
        $region24: #{tpu_custom_call.1} parent=11 // pred_fallthru
          _
      $region12: #{tpu_custom_call.1} parent=5 // pred_fallthru
        _
      %p187 = scmp.lt.s32.totalorder %s12, 2
      // Predicated region
      $region25: #{tpu_custom_call.1} parent=5 // pred_check
        %p188 = pneg %p187
      $region26: #{tpu_custom_call.1} parent=5 // pred_check_branch
        %190 = sbr.rel (%p188) target = $region28
      $region27: #{tpu_custom_call.1} parent=5 // pred_region
        // Predicated region
        $region29: #{tpu_custom_call.1} parent=27 // pred_check
          %p191 = pneg %p32
        $region30: #{tpu_custom_call.1} parent=27 // pred_check_branch
          %193 = sbr.rel (%p191) target = $region32
        $region31: #{tpu_custom_call.1} parent=27 // pred_region
          %p194 = scmp.lt.s32.totalorder %s12, 1
          %s195 = scalar_select %p194, %s12, 1
          %s196 = smul.addr %s195, 2
          %s197 = smul.addr %s196, 4
          %s198 = scalar_lea.vmem %s0, %s197
        $region32: #{tpu_custom_call.1} parent=27 // pred_fallthru
          _
        // Predicated region
        $region33: #{tpu_custom_call.1} parent=27 // pred_check
          %p199 = pneg %p58
        $region34: #{tpu_custom_call.1} parent=27 // pred_check_branch
          %201 = sbr.rel (%p199) target = $region36
        $region35: #{tpu_custom_call.1} parent=27 // pred_region
          %p202 = scmp.lt.s32.totalorder %s12, 1
          %s203 = scalar_select %p202, %s12, 1
          %s204 = smul.addr %s203, 2
          %s205 = smul.addr %s204, 4
          %s206 = scalar_lea.vmem %s1, %s205
        $region36: #{tpu_custom_call.1} parent=27 // pred_fallthru
          _
      $region28: #{tpu_custom_call.1} parent=5 // pred_fallthru
        _
      %p207 = scmp.le.s32.totalorder 1, %s12
      %p208 = scmp.lt.s32.totalorder %s12, 3
      %p209 = pnand %p207, %p208
      %p210 = pneg %p209
      // Predicated region
      $region37: #{tpu_custom_call.1} parent=5 // pred_check
        _
      $region38: #{tpu_custom_call.1} parent=5 // pred_check_branch
        %212 = sbr.rel (%p209) target = $region40
      $region39: #{tpu_custom_call.1} parent=5 // pred_region
        %s213 = ssub.s32 %s12, 1
        // Predicated region
        $region41: #{tpu_custom_call.1} parent=39 // pred_check
          %p214 = pneg %p106
        $region42: #{tpu_custom_call.1} parent=39 // pred_check_branch
          %216 = sbr.rel (%p214) target = $region44
        $region43: #{tpu_custom_call.1} parent=39 // pred_region
          %217 = dma.done [#allocation5], 7680
        $region44: #{tpu_custom_call.1} parent=39 // pred_fallthru
          _
        %p218 = scmp.lt.s32.totalorder %s17, 1
        %s219 = scalar_select %p218, %s17, 1
        %s220 = smul.addr %s219, 2
        %s221 = smul.addr %s220, 4
        %s222 = scalar_lea.vmem %s0, %s221
        %p223 = pneg %p38
        %p224 = pneg %p35
        %p225 = scmp.lt.s32.totalorder %s17, 1
        %s226 = scalar_select %p225, %s17, 1
        %s227 = smul.addr %s226, 2
        %s228 = smul.addr %s227, 4
        %s229 = scalar_lea.vmem %s1, %s228
        %p230 = pneg %p64
        %p231 = pneg %p61
        %p232 = pneg %p85
        %p233 = pneg %p82
        %p234 = pneg %p106
        %p235 = pneg %p103
        %p236 = pneg %p127
        %p237 = pneg %p124
        %p238 = pneg %p153
        %p239 = pneg %p150
        %p240 = scmp.lt.s32.totalorder %s17, 1
        %s241 = scalar_select %p240, %s17, 1
        %s242 = smul.addr %s241, 2
        %s243 = smul.addr %s242, 4
        %s244 = scalar_lea.vmem %s5, %s243
        %p245 = scmp.lt.s32.totalorder %s17, 1
        %s246 = scalar_select %p245, %s17, 1
        %s247 = smul.addr %s246, 2
        %s248 = smul.addr %s247, 4
        %s249 = scalar_lea.vmem %s0, %s248
        %p250 = scmp.lt.s32.totalorder %s17, 1
        %s251 = scalar_select %p250, %s17, 1
        %s252 = smul.addr %s251, 2
        %s253 = smul.addr %s252, 4
        %s254 = scalar_lea.vmem %s1, %s253
        %p255 = scmp.lt.s32.totalorder %s17, 1
        %s256 = scalar_select %p255, %s17, 1
        %s257 = smul.addr %s256, 2
        %s258 = smul.addr %s257, 4
        %s259 = scalar_lea.vmem %s5, %s258
        %v260 = vld [vmem:[%s249] sm:$0x77]
        %v261 = vld [vmem:[%s254] sm:$0x77]
        %v262 = vsub.f32 %v260, %v261
        %263 = vst [vmem:[#allocation2] sm:$0xf8] 0.0
        %264 = vst [vmem:[#allocation2 + $0x8] sm:$0xf8] 0.0
        %265 = vst [vmem:[#allocation2 + $0x10] sm:$0xff] 0.0
        %266 = vst [vmem:[#allocation2 + $0x18] sm:$0xff] 0.0
        %267 = vst [vmem:[#allocation2 + $0x20] sm:$0xff] 0.0
        %268 = vst [vmem:[#allocation2 + $0x28] sm:$0xff] 0.0
        %269 = vst [vmem:[#allocation2 + $0x30] sm:$0xff] 0.0
        %270 = vst [vmem:[#allocation2 + $0x38] sm:$0xff] 0.0
        %v272 = vcombine.high %v262, %v262
        %274 = vst [vmem:[#allocation2] sm:$0x7] %v262
        %275 = vst [vmem:[#allocation2 + $0x8] sm:$0x7] %v272
        %v276 = vld [vmem:[#allocation2] sm:$0xff]
        %v277 = vld [vmem:[#allocation2 + $0x8] sm:$0xff]
        %v278 = vld [vmem:[#allocation2 + $0x10] sm:$0xff]
        %v279 = vld [vmem:[#allocation2 + $0x18] sm:$0xff]
        %v280 = vld [vmem:[#allocation2 + $0x20] sm:$0xff]
        %v281 = vld [vmem:[#allocation2 + $0x28] sm:$0xff]
        %v282 = vld [vmem:[#allocation2 + $0x30] sm:$0xff]
        %v283 = vld [vmem:[#allocation2 + $0x38] sm:$0xff]
        %284 = vrot.lane.b32.xlu0 %v276, 17
        %v285 = vpop.permute.xlu0 %284
        %286 = vrot.lane.b32.xlu0 %v278, 17
        %v287 = vpop.permute.xlu0 %286
        %288 = vrot.lane.b32.xlu0 %v280, 17
        %v289 = vpop.permute.xlu0 %288
        %290 = vrot.lane.b32.xlu0 %v282, 17
        %v291 = vpop.permute.xlu0 %290
        %292 = vrot.lane.b32.xlu0 %v277, 17
        %v293 = vpop.permute.xlu0 %292
        %294 = vrot.lane.b32.xlu0 %v279, 17
        %v295 = vpop.permute.xlu0 %294
        %296 = vrot.lane.b32.xlu0 %v281, 17
        %v297 = vpop.permute.xlu0 %296
        %298 = vrot.lane.b32.xlu0 %v283, 17
        %v299 = vpop.permute.xlu0 %298
        %v300 = vlaneseq
        %v301 = vand.u32 %v300, 127
        %vm302 = vcmp.lt.s32.totalorder %v301, 17
        %v303 = vsel %vm302, %v285, %v293
        %v304 = vsel %vm302, %v287, %v295
        %v305 = vsel %vm302, %v289, %v297
        %v306 = vsel %vm302, %v291, %v299
        %v307 = vsel %vm302, %v293, %v285
        %v308 = vsel %vm302, %v295, %v287
        %v309 = vsel %vm302, %v297, %v289
        %v310 = vsel %vm302, %v299, %v291
        %v311 = vld [vmem:[%s2] ss:$8 sm:$0x3]
        %v313 = vlaneseq
        %v314 = vshrl.u32 %v313, 7
        %v315 = vsub.s32 0, %v314
        %v316 = vrot.slane %v311, %v315
        %v317 = vlaneseq
        %v318 = vshrl.u32 %v317, 7
        %v319 = vsub.s32 1, %v318
        %v320 = vrot.slane %v311, %v319
        %v323 = vmul.f32 %v307, %v316
        %v324 = vmul.f32 %v303, %v320
        %v325 = vmul.f32 %v308, %v316
        %v326 = vmul.f32 %v304, %v320
        %v327 = vmul.f32 %v309, %v316
        %v328 = vmul.f32 %v305, %v320
        %v329 = vmul.f32 %v310, %v316
        %v330 = vmul.f32 %v306, %v320
        %331 = vst [vmem:[#allocation3] sm:$0xff] %v323
        %332 = vst [vmem:[#allocation3 + $0x8] sm:$0xff] %v324
        %333 = vst [vmem:[#allocation3 + $0x10] sm:$0xff] %v325
        %334 = vst [vmem:[#allocation3 + $0x18] sm:$0xff] %v326
        %335 = vst [vmem:[#allocation3 + $0x20] sm:$0xff] %v327
        %336 = vst [vmem:[#allocation3 + $0x28] sm:$0xff] %v328
        %337 = vst [vmem:[#allocation3 + $0x30] sm:$0xff] %v329
        %338 = vst [vmem:[#allocation3 + $0x38] sm:$0xff] %v330
        %339 = vrot.lane.b32.xlu0 %v276, 16
        %v340 = vpop.permute.xlu0 %339
        %341 = vrot.lane.b32.xlu0 %v278, 16
        %v342 = vpop.permute.xlu0 %341
        %343 = vrot.lane.b32.xlu0 %v280, 16
        %v344 = vpop.permute.xlu0 %343
        %345 = vrot.lane.b32.xlu0 %v282, 16
        %v346 = vpop.permute.xlu0 %345
        %347 = vrot.lane.b32.xlu0 %v277, 16
        %v348 = vpop.permute.xlu0 %347
        %349 = vrot.lane.b32.xlu0 %v279, 16
        %v350 = vpop.permute.xlu0 %349
        %351 = vrot.lane.b32.xlu0 %v281, 16
        %v352 = vpop.permute.xlu0 %351
        %353 = vrot.lane.b32.xlu0 %v283, 16
        %v354 = vpop.permute.xlu0 %353
        %vm355 = vcmp.lt.s32.totalorder %v301, 16
        %v356 = vsel %vm355, %v340, %v348
        %v357 = vsel %vm355, %v342, %v350
        %v358 = vsel %vm355, %v344, %v352
        %v359 = vsel %vm355, %v346, %v354
        %v360 = vsel %vm355, %v348, %v340
        %v361 = vsel %vm355, %v350, %v342
        %v362 = vsel %vm355, %v352, %v344
        %v363 = vsel %vm355, %v354, %v346
        %s364 = scalar_lea.vmem %s2, 1
        %v365 = vld [vmem:[%s364] ss:$8 sm:$0x3]
        %v367 = vlaneseq
        %v368 = vshrl.u32 %v367, 7
        %v369 = vsub.s32 0, %v368
        %v370 = vrot.slane %v365, %v369
        %v371 = vlaneseq
        %v372 = vshrl.u32 %v371, 7
        %v373 = vsub.s32 1, %v372
        %v374 = vrot.slane %v365, %v373
        %v377 = vmul.f32 %v360, %v370
        %v378 = vmul.f32 %v356, %v374
        %v379 = vmul.f32 %v361, %v370
        %v380 = vmul.f32 %v357, %v374
        %v381 = vmul.f32 %v362, %v370
        %v382 = vmul.f32 %v358, %v374
        %v383 = vmul.f32 %v363, %v370
        %v384 = vmul.f32 %v359, %v374
        %385 = vst [vmem:[#allocation3 + $0x40] sm:$0xff] %v377
        %386 = vst [vmem:[#allocation3 + $0x48] sm:$0xff] %v378
        %387 = vst [vmem:[#allocation3 + $0x50] sm:$0xff] %v379
        %388 = vst [vmem:[#allocation3 + $0x58] sm:$0xff] %v380
        %389 = vst [vmem:[#allocation3 + $0x60] sm:$0xff] %v381
        %390 = vst [vmem:[#allocation3 + $0x68] sm:$0xff] %v382
        %391 = vst [vmem:[#allocation3 + $0x70] sm:$0xff] %v383
        %392 = vst [vmem:[#allocation3 + $0x78] sm:$0xff] %v384
        %393 = vrot.lane.b32.xlu0 %v276, 15
        %v394 = vpop.permute.xlu0 %393
        %395 = vrot.lane.b32.xlu0 %v278, 15
        %v396 = vpop.permute.xlu0 %395
        %397 = vrot.lane.b32.xlu0 %v280, 15
        %v398 = vpop.permute.xlu0 %397
        %399 = vrot.lane.b32.xlu0 %v282, 15
        %v400 = vpop.permute.xlu0 %399
        %401 = vrot.lane.b32.xlu0 %v277, 15
        %v402 = vpop.permute.xlu0 %401
        %403 = vrot.lane.b32.xlu0 %v279, 15
        %v404 = vpop.permute.xlu0 %403
        %405 = vrot.lane.b32.xlu0 %v281, 15
        %v406 = vpop.permute.xlu0 %405
        %407 = vrot.lane.b32.xlu0 %v283, 15
        %v408 = vpop.permute.xlu0 %407
        %vm409 = vcmp.lt.s32.totalorder %v301, 15
        %v410 = vsel %vm409, %v394, %v402
        %v411 = vsel %vm409, %v396, %v404
        %v412 = vsel %vm409, %v398, %v406
        %v413 = vsel %vm409, %v400, %v408
        %v414 = vsel %vm409, %v402, %v394
        %v415 = vsel %vm409, %v404, %v396
        %v416 = vsel %vm409, %v406, %v398
        %v417 = vsel %vm409, %v408, %v400
        %s418 = scalar_lea.vmem %s2, 2
        %v419 = vld [vmem:[%s418] ss:$8 sm:$0x3]
        %v421 = vlaneseq
        %v422 = vshrl.u32 %v421, 7
        %v423 = vsub.s32 0, %v422
        %v424 = vrot.slane %v419, %v423
        %v425 = vlaneseq
        %v426 = vshrl.u32 %v425, 7
        %v427 = vsub.s32 1, %v426
        %v428 = vrot.slane %v419, %v427
        %v431 = vmul.f32 %v414, %v424
        %v432 = vmul.f32 %v410, %v428
        %v433 = vmul.f32 %v415, %v424
        %v434 = vmul.f32 %v411, %v428
        %v435 = vmul.f32 %v416, %v424
        %v436 = vmul.f32 %v412, %v428
        %v437 = vmul.f32 %v417, %v424
        %v438 = vmul.f32 %v413, %v428
        %439 = vst [vmem:[#allocation3 + $0x80] sm:$0xff] %v431
        %440 = vst [vmem:[#allocation3 + $0x88] sm:$0xff] %v432
        %441 = vst [vmem:[#allocation3 + $0x90] sm:$0xff] %v433
        %442 = vst [vmem:[#allocation3 + $0x98] sm:$0xff] %v434
        %443 = vst [vmem:[#allocation3 + $0xa0] sm:$0xff] %v435
        %444 = vst [vmem:[#allocation3 + $0xa8] sm:$0xff] %v436
        %445 = vst [vmem:[#allocation3 + $0xb0] sm:$0xff] %v437
        %446 = vst [vmem:[#allocation3 + $0xb8] sm:$0xff] %v438
        %447 = vrot.lane.b32.xlu0 %v276, 1
        %v448 = vpop.permute.xlu0 %447
        %449 = vrot.lane.b32.xlu0 %v278, 1
        %v450 = vpop.permute.xlu0 %449
        %451 = vrot.lane.b32.xlu0 %v280, 1
        %v452 = vpop.permute.xlu0 %451
        %453 = vrot.lane.b32.xlu0 %v282, 1
        %v454 = vpop.permute.xlu0 %453
        %455 = vrot.lane.b32.xlu0 %v277, 1
        %v456 = vpop.permute.xlu0 %455
        %457 = vrot.lane.b32.xlu0 %v279, 1
        %v458 = vpop.permute.xlu0 %457
        %459 = vrot.lane.b32.xlu0 %v281, 1
        %v460 = vpop.permute.xlu0 %459
        %461 = vrot.lane.b32.xlu0 %v283, 1
        %v462 = vpop.permute.xlu0 %461
        %vm463 = vcmp.lt.s32.totalorder %v301, 1
        %v464 = vsel %vm463, %v448, %v456
        %v465 = vsel %vm463, %v450, %v458
        %v466 = vsel %vm463, %v452, %v460
        %v467 = vsel %vm463, %v454, %v462
        %v468 = vsel %vm463, %v456, %v448
        %v469 = vsel %vm463, %v458, %v450
        %v470 = vsel %vm463, %v460, %v452
        %v471 = vsel %vm463, %v462, %v454
        %s472 = scalar_lea.vmem %s2, 3
        %v473 = vld [vmem:[%s472] ss:$8 sm:$0x3]
        %v475 = vlaneseq
        %v476 = vshrl.u32 %v475, 7
        %v477 = vsub.s32 0, %v476
        %v478 = vrot.slane %v473, %v477
        %v479 = vlaneseq
        %v480 = vshrl.u32 %v479, 7
        %v481 = vsub.s32 1, %v480
        %v482 = vrot.slane %v473, %v481
        %v485 = vmul.f32 %v468, %v478
        %v486 = vmul.f32 %v464, %v482
        %v487 = vmul.f32 %v469, %v478
        %v488 = vmul.f32 %v465, %v482
        %v489 = vmul.f32 %v470, %v478
        %v490 = vmul.f32 %v466, %v482
        %v491 = vmul.f32 %v471, %v478
        %v492 = vmul.f32 %v467, %v482
        %493 = vst [vmem:[#allocation3 + $0xc0] sm:$0xff] %v485
        %494 = vst [vmem:[#allocation3 + $0xc8] sm:$0xff] %v486
        %495 = vst [vmem:[#allocation3 + $0xd0] sm:$0xff] %v487
        %496 = vst [vmem:[#allocation3 + $0xd8] sm:$0xff] %v488
        %497 = vst [vmem:[#allocation3 + $0xe0] sm:$0xff] %v489
        %498 = vst [vmem:[#allocation3 + $0xe8] sm:$0xff] %v490
        %499 = vst [vmem:[#allocation3 + $0xf0] sm:$0xff] %v491
        %500 = vst [vmem:[#allocation3 + $0xf8] sm:$0xff] %v492
        %501 = vst [vmem:[#allocation3 + $0x100] sm:$0xff] %v276
        %502 = vst [vmem:[#allocation3 + $0x108] sm:$0xff] %v277
        %503 = vst [vmem:[#allocation3 + $0x110] sm:$0xff] %v278
        %504 = vst [vmem:[#allocation3 + $0x118] sm:$0xff] %v279
        %505 = vst [vmem:[#allocation3 + $0x120] sm:$0xff] %v280
        %506 = vst [vmem:[#allocation3 + $0x128] sm:$0xff] %v281
        %507 = vst [vmem:[#allocation3 + $0x130] sm:$0xff] %v282
        %508 = vst [vmem:[#allocation3 + $0x138] sm:$0xff] %v283
        %509 = vrot.lane.b32.xlu0 %v276, 127
        %v510 = vpop.permute.xlu0 %509
        %511 = vrot.lane.b32.xlu0 %v278, 127
        %v512 = vpop.permute.xlu0 %511
        %513 = vrot.lane.b32.xlu0 %v280, 127
        %v514 = vpop.permute.xlu0 %513
        %515 = vrot.lane.b32.xlu0 %v282, 127
        %v516 = vpop.permute.xlu0 %515
        %517 = vrot.lane.b32.xlu0 %v277, 127
        %v518 = vpop.permute.xlu0 %517
        %519 = vrot.lane.b32.xlu0 %v279, 127
        %v520 = vpop.permute.xlu0 %519
        %521 = vrot.lane.b32.xlu0 %v281, 127
        %v522 = vpop.permute.xlu0 %521
        %523 = vrot.lane.b32.xlu0 %v283, 127
        %v524 = vpop.permute.xlu0 %523
        %vm525 = vcmp.lt.s32.totalorder %v301, 127
        %v526 = vsel %vm525, %v510, %v518
        %v527 = vsel %vm525, %v512, %v520
        %v528 = vsel %vm525, %v514, %v522
        %v529 = vsel %vm525, %v516, %v524
        %v530 = vsel %vm525, %v518, %v510
        %v531 = vsel %vm525, %v520, %v512
        %v532 = vsel %vm525, %v522, %v514
        %v533 = vsel %vm525, %v524, %v516
        %s534 = scalar_lea.vmem %s2, 5
        %v535 = vld [vmem:[%s534] ss:$8 sm:$0x3]
        %v537 = vlaneseq
        %v538 = vshrl.u32 %v537, 7
        %v539 = vsub.s32 0, %v538
        %v540 = vrot.slane %v535, %v539
        %v541 = vlaneseq
        %v542 = vshrl.u32 %v541, 7
        %v543 = vsub.s32 1, %v542
        %v544 = vrot.slane %v535, %v543
        %v547 = vmul.f32 %v526, %v540
        %v548 = vmul.f32 %v530, %v544
        %v549 = vmul.f32 %v527, %v540
        %v550 = vmul.f32 %v531, %v544
        %v551 = vmul.f32 %v528, %v540
        %v552 = vmul.f32 %v532, %v544
        %v553 = vmul.f32 %v529, %v540
        %v554 = vmul.f32 %v533, %v544
        %555 = vst [vmem:[#allocation3 + $0x140] sm:$0xff] %v547
        %556 = vst [vmem:[#allocation3 + $0x148] sm:$0xff] %v548
        %557 = vst [vmem:[#allocation3 + $0x150] sm:$0xff] %v549
        %558 = vst [vmem:[#allocation3 + $0x158] sm:$0xff] %v550
        %559 = vst [vmem:[#allocation3 + $0x160] sm:$0xff] %v551
        %560 = vst [vmem:[#allocation3 + $0x168] sm:$0xff] %v552
        %561 = vst [vmem:[#allocation3 + $0x170] sm:$0xff] %v553
        %562 = vst [vmem:[#allocation3 + $0x178] sm:$0xff] %v554
        %563 = vrot.lane.b32.xlu0 %v276, 113
        %v564 = vpop.permute.xlu0 %563
        %565 = vrot.lane.b32.xlu0 %v278, 113
        %v566 = vpop.permute.xlu0 %565
        %567 = vrot.lane.b32.xlu0 %v280, 113
        %v568 = vpop.permute.xlu0 %567
        %569 = vrot.lane.b32.xlu0 %v282, 113
        %v570 = vpop.permute.xlu0 %569
        %571 = vrot.lane.b32.xlu0 %v277, 113
        %v572 = vpop.permute.xlu0 %571
        %573 = vrot.lane.b32.xlu0 %v279, 113
        %v574 = vpop.permute.xlu0 %573
        %575 = vrot.lane.b32.xlu0 %v281, 113
        %v576 = vpop.permute.xlu0 %575
        %577 = vrot.lane.b32.xlu0 %v283, 113
        %v578 = vpop.permute.xlu0 %577
        %vm579 = vcmp.lt.s32.totalorder %v301, 113
        %v580 = vsel %vm579, %v564, %v572
        %v581 = vsel %vm579, %v566, %v574
        %v582 = vsel %vm579, %v568, %v576
        %v583 = vsel %vm579, %v570, %v578
        %v584 = vsel %vm579, %v572, %v564
        %v585 = vsel %vm579, %v574, %v566
        %v586 = vsel %vm579, %v576, %v568
        %v587 = vsel %vm579, %v578, %v570
        %s588 = scalar_lea.vmem %s2, 6
        %v589 = vld [vmem:[%s588] ss:$8 sm:$0x3]
        %v591 = vlaneseq
        %v592 = vshrl.u32 %v591, 7
        %v593 = vsub.s32 0, %v592
        %v594 = vrot.slane %v589, %v593
        %v595 = vlaneseq
        %v596 = vshrl.u32 %v595, 7
        %v597 = vsub.s32 1, %v596
        %v598 = vrot.slane %v589, %v597
        %v601 = vmul.f32 %v580, %v594
        %v602 = vmul.f32 %v584, %v598
        %v603 = vmul.f32 %v581, %v594
        %v604 = vmul.f32 %v585, %v598
        %v605 = vmul.f32 %v582, %v594
        %v606 = vmul.f32 %v586, %v598
        %v607 = vmul.f32 %v583, %v594
        %v608 = vmul.f32 %v587, %v598
        %609 = vst [vmem:[#allocation3 + $0x180] sm:$0xff] %v601
        %610 = vst [vmem:[#allocation3 + $0x188] sm:$0xff] %v602
        %611 = vst [vmem:[#allocation3 + $0x190] sm:$0xff] %v603
        %612 = vst [vmem:[#allocation3 + $0x198] sm:$0xff] %v604
        %613 = vst [vmem:[#allocation3 + $0x1a0] sm:$0xff] %v605
        %614 = vst [vmem:[#allocation3 + $0x1a8] sm:$0xff] %v606
        %615 = vst [vmem:[#allocation3 + $0x1b0] sm:$0xff] %v607
        %616 = vst [vmem:[#allocation3 + $0x1b8] sm:$0xff] %v608
        %617 = vrot.lane.b32.xlu0 %v276, 112
        %v618 = vpop.permute.xlu0 %617
        %619 = vrot.lane.b32.xlu0 %v278, 112
        %v620 = vpop.permute.xlu0 %619
        %621 = vrot.lane.b32.xlu0 %v280, 112
        %v622 = vpop.permute.xlu0 %621
        %623 = vrot.lane.b32.xlu0 %v282, 112
        %v624 = vpop.permute.xlu0 %623
        %625 = vrot.lane.b32.xlu0 %v277, 112
        %v626 = vpop.permute.xlu0 %625
        %627 = vrot.lane.b32.xlu0 %v279, 112
        %v628 = vpop.permute.xlu0 %627
        %629 = vrot.lane.b32.xlu0 %v281, 112
        %v630 = vpop.permute.xlu0 %629
        %631 = vrot.lane.b32.xlu0 %v283, 112
        %v632 = vpop.permute.xlu0 %631
        %vm633 = vcmp.lt.s32.totalorder %v301, 112
        %v634 = vsel %vm633, %v618, %v626
        %v635 = vsel %vm633, %v620, %v628
        %v636 = vsel %vm633, %v622, %v630
        %v637 = vsel %vm633, %v624, %v632
        %v638 = vsel %vm633, %v626, %v618
        %v639 = vsel %vm633, %v628, %v620
        %v640 = vsel %vm633, %v630, %v622
        %v641 = vsel %vm633, %v632, %v624
        %s642 = scalar_lea.vmem %s2, 7
        %v643 = vld [vmem:[%s642] ss:$8 sm:$0x3]
        %v645 = vlaneseq
        %v646 = vshrl.u32 %v645, 7
        %v647 = vsub.s32 0, %v646
        %v648 = vrot.slane %v643, %v647
        %v649 = vlaneseq
        %v650 = vshrl.u32 %v649, 7
        %v651 = vsub.s32 1, %v650
        %v652 = vrot.slane %v643, %v651
        %v655 = vmul.f32 %v634, %v648
        %v656 = vmul.f32 %v638, %v652
        %v657 = vmul.f32 %v635, %v648
        %v658 = vmul.f32 %v639, %v652
        %v659 = vmul.f32 %v636, %v648
        %v660 = vmul.f32 %v640, %v652
        %v661 = vmul.f32 %v637, %v648
        %v662 = vmul.f32 %v641, %v652
        %663 = vst [vmem:[#allocation3 + $0x1c0] sm:$0xff] %v655
        %664 = vst [vmem:[#allocation3 + $0x1c8] sm:$0xff] %v656
        %665 = vst [vmem:[#allocation3 + $0x1d0] sm:$0xff] %v657
        %666 = vst [vmem:[#allocation3 + $0x1d8] sm:$0xff] %v658
        %667 = vst [vmem:[#allocation3 + $0x1e0] sm:$0xff] %v659
        %668 = vst [vmem:[#allocation3 + $0x1e8] sm:$0xff] %v660
        %669 = vst [vmem:[#allocation3 + $0x1f0] sm:$0xff] %v661
        %670 = vst [vmem:[#allocation3 + $0x1f8] sm:$0xff] %v662
        %671 = vrot.lane.b32.xlu0 %v276, 111
        %v672 = vpop.permute.xlu0 %671
        %673 = vrot.lane.b32.xlu0 %v278, 111
        %v674 = vpop.permute.xlu0 %673
        %675 = vrot.lane.b32.xlu0 %v280, 111
        %v676 = vpop.permute.xlu0 %675
        %677 = vrot.lane.b32.xlu0 %v282, 111
        %v678 = vpop.permute.xlu0 %677
        %679 = vrot.lane.b32.xlu0 %v277, 111
        %v680 = vpop.permute.xlu0 %679
        %681 = vrot.lane.b32.xlu0 %v279, 111
        %v682 = vpop.permute.xlu0 %681
        %683 = vrot.lane.b32.xlu0 %v281, 111
        %v684 = vpop.permute.xlu0 %683
        %685 = vrot.lane.b32.xlu0 %v283, 111
        %v686 = vpop.permute.xlu0 %685
        %vm687 = vcmp.lt.s32.totalorder %v301, 111
        %v688 = vsel %vm687, %v672, %v680
        %v689 = vsel %vm687, %v674, %v682
        %v690 = vsel %vm687, %v676, %v684
        %v691 = vsel %vm687, %v678, %v686
        %v692 = vsel %vm687, %v680, %v672
        %v693 = vsel %vm687, %v682, %v674
        %v694 = vsel %vm687, %v684, %v676
        %v695 = vsel %vm687, %v686, %v678
        %s696 = scalar_lea.vmem %s2, 16
        %v697 = vld [vmem:[%s696] ss:$8 sm:$0x3]
        %v699 = vlaneseq
        %v700 = vshrl.u32 %v699, 7
        %v701 = vsub.s32 0, %v700
        %v702 = vrot.slane %v697, %v701
        %v703 = vlaneseq
        %v704 = vshrl.u32 %v703, 7
        %v705 = vsub.s32 1, %v704
        %v706 = vrot.slane %v697, %v705
        %v709 = vmul.f32 %v688, %v702
        %v710 = vmul.f32 %v692, %v706
        %v711 = vmul.f32 %v689, %v702
        %v712 = vmul.f32 %v693, %v706
        %v713 = vmul.f32 %v690, %v702
        %v714 = vmul.f32 %v694, %v706
        %v715 = vmul.f32 %v691, %v702
        %v716 = vmul.f32 %v695, %v706
        %717 = vst [vmem:[#allocation3 + $0x200] sm:$0xff] %v709
        %718 = vst [vmem:[#allocation3 + $0x208] sm:$0xff] %v710
        %719 = vst [vmem:[#allocation3 + $0x210] sm:$0xff] %v711
        %720 = vst [vmem:[#allocation3 + $0x218] sm:$0xff] %v712
        %721 = vst [vmem:[#allocation3 + $0x220] sm:$0xff] %v713
        %722 = vst [vmem:[#allocation3 + $0x228] sm:$0xff] %v714
        %723 = vst [vmem:[#allocation3 + $0x230] sm:$0xff] %v715
        %724 = vst [vmem:[#allocation3 + $0x238] sm:$0xff] %v716
        %v725 = vld [vmem:[#allocation4] sm:$0xff]
        %v726 = vld [vmem:[#allocation4 + $0x8] sm:$0xff]
        %v727 = vld [vmem:[#allocation4 + $0x10] sm:$0xff]
        %v728 = vld [vmem:[#allocation4 + $0x18] sm:$0xff]
        %v729 = vld [vmem:[#allocation4 + $0x20] sm:$0xff]
        %v730 = vld [vmem:[#allocation4 + $0x28] sm:$0xff]
        %v731 = vld [vmem:[#allocation4 + $0x30] sm:$0xff]
        %v732 = vld [vmem:[#allocation4 + $0x38] sm:$0xff]
        %v733 = vld [vmem:[#allocation4 + $0x40] sm:$0xff]
        %v734 = vld [vmem:[#allocation4 + $0x48] sm:$0xff]
        %v735 = vld [vmem:[#allocation4 + $0x50] sm:$0xff]
        %v736 = vld [vmem:[#allocation4 + $0x58] sm:$0xff]
        %v737 = vld [vmem:[#allocation3] sm:$0xff]
        %v738 = vld [vmem:[#allocation3 + $0x8] sm:$0xff]
        %v739 = vld [vmem:[#allocation3 + $0x10] sm:$0xff]
        %v740 = vld [vmem:[#allocation3 + $0x18] sm:$0xff]
        %v741 = vld [vmem:[#allocation3 + $0x20] sm:$0xff]
        %v742 = vld [vmem:[#allocation3 + $0x28] sm:$0xff]
        %v743 = vld [vmem:[#allocation3 + $0x30] sm:$0xff]
        %v744 = vld [vmem:[#allocation3 + $0x38] sm:$0xff]
        %v745 = vld [vmem:[#allocation3 + $0x40] sm:$0xff]
        %v746 = vld [vmem:[#allocation3 + $0x48] sm:$0xff]
        %v747 = vld [vmem:[#allocation3 + $0x50] sm:$0xff]
        %v748 = vld [vmem:[#allocation3 + $0x58] sm:$0xff]
        %v749 = vld [vmem:[#allocation3 + $0x60] sm:$0xff]
        %v750 = vld [vmem:[#allocation3 + $0x68] sm:$0xff]
        %v751 = vld [vmem:[#allocation3 + $0x70] sm:$0xff]
        %v752 = vld [vmem:[#allocation3 + $0x78] sm:$0xff]
        %v753 = vld [vmem:[#allocation3 + $0x80] sm:$0xff]
        %v754 = vld [vmem:[#allocation3 + $0x88] sm:$0xff]
        %v755 = vld [vmem:[#allocation3 + $0x90] sm:$0xff]
        %v756 = vld [vmem:[#allocation3 + $0x98] sm:$0xff]
        %v757 = vld [vmem:[#allocation3 + $0xa0] sm:$0xff]
        %v758 = vld [vmem:[#allocation3 + $0xa8] sm:$0xff]
        %v759 = vld [vmem:[#allocation3 + $0xb0] sm:$0xff]
        %v760 = vld [vmem:[#allocation3 + $0xb8] sm:$0xff]
        %v761 = vld [vmem:[#allocation3 + $0xc0] sm:$0xff]
        %v762 = vld [vmem:[#allocation3 + $0xc8] sm:$0xff]
        %v763 = vld [vmem:[#allocation3 + $0xd0] sm:$0xff]
        %v764 = vld [vmem:[#allocation3 + $0xd8] sm:$0xff]
        %v765 = vld [vmem:[#allocation3 + $0xe0] sm:$0xff]
        %v766 = vld [vmem:[#allocation3 + $0xe8] sm:$0xff]
        %v767 = vld [vmem:[#allocation3 + $0xf0] sm:$0xff]
        %v768 = vld [vmem:[#allocation3 + $0xf8] sm:$0xff]
        %v769 = vld [vmem:[#allocation3 + $0x100] sm:$0xff]
        %v770 = vld [vmem:[#allocation3 + $0x108] sm:$0xff]
        %v771 = vld [vmem:[#allocation3 + $0x110] sm:$0xff]
        %v772 = vld [vmem:[#allocation3 + $0x118] sm:$0xff]
        %v773 = vld [vmem:[#allocation3 + $0x120] sm:$0xff]
        %v774 = vld [vmem:[#allocation3 + $0x128] sm:$0xff]
        %v775 = vld [vmem:[#allocation3 + $0x130] sm:$0xff]
        %v776 = vld [vmem:[#allocation3 + $0x138] sm:$0xff]
        %v777 = vld [vmem:[#allocation3 + $0x140] sm:$0xff]
        %v778 = vld [vmem:[#allocation3 + $0x148] sm:$0xff]
        %v779 = vld [vmem:[#allocation3 + $0x150] sm:$0xff]
        %v780 = vld [vmem:[#allocation3 + $0x158] sm:$0xff]
        %v781 = vld [vmem:[#allocation3 + $0x160] sm:$0xff]
        %v782 = vld [vmem:[#allocation3 + $0x168] sm:$0xff]
        %v783 = vld [vmem:[#allocation3 + $0x170] sm:$0xff]
        %v784 = vld [vmem:[#allocation3 + $0x178] sm:$0xff]
        %v785 = vld [vmem:[#allocation3 + $0x180] sm:$0xff]
        %v786 = vld [vmem:[#allocation3 + $0x188] sm:$0xff]
        %v787 = vld [vmem:[#allocation3 + $0x190] sm:$0xff]
        %v788 = vld [vmem:[#allocation3 + $0x198] sm:$0xff]
        %v789 = vld [vmem:[#allocation3 + $0x1a0] sm:$0xff]
        %v790 = vld [vmem:[#allocation3 + $0x1a8] sm:$0xff]
        %v791 = vld [vmem:[#allocation3 + $0x1b0] sm:$0xff]
        %v792 = vld [vmem:[#allocation3 + $0x1b8] sm:$0xff]
        %v793 = vld [vmem:[#allocation3 + $0x1c0] sm:$0xff]
        %v794 = vld [vmem:[#allocation3 + $0x1c8] sm:$0xff]
        %v795 = vld [vmem:[#allocation3 + $0x1d0] sm:$0xff]
        %v796 = vld [vmem:[#allocation3 + $0x1d8] sm:$0xff]
        %v797 = vld [vmem:[#allocation3 + $0x1e0] sm:$0xff]
        %v798 = vld [vmem:[#allocation3 + $0x1e8] sm:$0xff]
        %v799 = vld [vmem:[#allocation3 + $0x1f0] sm:$0xff]
        %v800 = vld [vmem:[#allocation3 + $0x1f8] sm:$0xff]
        %v801 = vld [vmem:[#allocation3 + $0x200] sm:$0xff]
        %v802 = vld [vmem:[#allocation3 + $0x208] sm:$0xff]
        %v803 = vld [vmem:[#allocation3 + $0x210] sm:$0xff]
        %v804 = vld [vmem:[#allocation3 + $0x218] sm:$0xff]
        %v805 = vld [vmem:[#allocation3 + $0x220] sm:$0xff]
        %v806 = vld [vmem:[#allocation3 + $0x228] sm:$0xff]
        %v807 = vld [vmem:[#allocation3 + $0x230] sm:$0xff]
        %v808 = vld [vmem:[#allocation3 + $0x238] sm:$0xff]
        %v809 = vld [vmem:[%s4] sm:$0xff]
        %v810 = vld [vmem:[%s4 + $0x8] sm:$0xff]
        %v811 = vld [vmem:[%s4 + $0x10] sm:$0xff]
        %v812 = vld [vmem:[%s4 + $0x18] sm:$0xff]
        %814 = vset.pattern.permute.xlu0 0
        %815 = vperm.xlu0 %814, %v809
        %v816 = vpop.permute.xlu0 %815
        %819 = vset.pattern.permute.xlu0 0
        %820 = vperm.xlu0 %819, %v810
        %v821 = vpop.permute.xlu0 %820
        %824 = vset.pattern.permute.xlu0 0
        %825 = vperm.xlu0 %824, %v811
        %v826 = vpop.permute.xlu0 %825
        %829 = vset.pattern.permute.xlu0 0
        %830 = vperm.xlu0 %829, %v812
        %v831 = vpop.permute.xlu0 %830
        %vm833 = vcmask 261120
        %v835 = vsel %vm833, %v727, 0
        %v838 = vsel %vm833, %v730, 0
        %v841 = vsel %vm833, %v733, 0
        %v844 = vsel %vm833, %v736, 0
        %846 = vmatprep.subr.mxu0 %v738
        %847 = vmatpush1.msra.mxu0 %v737
        %848 = vmatprep.subr.mxu0 %v740
        %849 = vmatpush1.msra.mxu0 %v739
        %850 = vmatprep.subr.mxu0 %v742
        %851 = vmatpush1.msra.mxu0 %v741
        %852 = vmatprep.subr.mxu0 %v744
        %853 = vmatpush1.msra.mxu0 %v743
        %854 = vmatprep.subr.mxu0 %v746
        %855 = vmatpush1.msra.mxu0 %v745
        %856 = vmatprep.subr.mxu0 %v748
        %857 = vmatpush1.msra.mxu0 %v747
        %858 = vmatprep.subr.mxu0 %v750
        %859 = vmatpush1.msra.mxu0 %v749
        %860 = vmatprep.subr.mxu0 %v752
        %861 = vmatpush1.msra.mxu0 %v751
        %862 = vmatprep.subr.mxu0 %v754
        %863 = vmatpush1.msra.mxu0 %v753
        %864 = vmatprep.subr.mxu0 %v756
        %865 = vmatpush1.msra.mxu0 %v755
        %866 = vmatprep.subr.mxu0 %v758
        %867 = vmatpush1.msra.mxu0 %v757
        %868 = vmatprep.subr.mxu0 %v760
        %869 = vmatpush1.msra.mxu0 %v759
        %870 = vmatprep.subr.mxu0 %v762
        %871 = vmatpush1.msra.mxu0 %v761
        %872 = vmatprep.subr.mxu0 %v764
        %873 = vmatpush1.msra.mxu0 %v763
        %874 = vmatprep.subr.mxu0 %v766
        %875 = vmatpush1.msra.mxu0 %v765
        %876 = vmatprep.subr.mxu0 %v768
        %877 = vmatpush1.msra.mxu0 %v767
        %878 = vmatprep.subr.mxu0 %v770
        %879 = vmatpush1.msra.mxu0 %v769
        %880 = vmatprep.subr.mxu0 %v772
        %881 = vmatpush1.msra.mxu0 %v771
        %882 = vmatprep.subr.mxu0 %v774
        %883 = vmatpush1.msra.mxu0 %v773
        %884 = vmatprep.subr.mxu0 %v776
        %885 = vmatpush1.msra.mxu0 %v775
        %886 = vmatprep.subr.mxu0 %v778
        %887 = vmatpush1.msra.mxu0 %v777
        %888 = vmatprep.subr.mxu0 %v780
        %889 = vmatpush1.msra.mxu0 %v779
        %890 = vmatprep.subr.mxu0 %v782
        %891 = vmatpush1.msra.mxu0 %v781
        %892 = vmatprep.subr.mxu0 %v784
        %893 = vmatpush1.msra.mxu0 %v783
        %894 = vmatprep.subr.mxu0 %v786
        %895 = vmatpush1.msra.mxu0 %v785
        %896 = vmatprep.subr.mxu0 %v788
        %897 = vmatpush1.msra.mxu0 %v787
        %898 = vmatprep.subr.mxu0 %v790
        %899 = vmatpush1.msra.mxu0 %v789
        %900 = vmatprep.subr.mxu0 %v792
        %901 = vmatpush1.msra.mxu0 %v791
        %902 = vmatprep.subr.mxu0 %v794
        %903 = vmatpush1.msra.mxu0 %v793
        %904 = vmatprep.subr.mxu0 %v796
        %905 = vmatpush1.msra.mxu0 %v795
        %906 = vmatprep.subr.mxu0 %v798
        %907 = vmatpush1.msra.mxu0 %v797
        %908 = vmatprep.subr.mxu0 %v800
        %909 = vmatpush1.msra.mxu0 %v799
        %910 = vmatprep.mubr.f32.mxu0 %v726
        %911 = vmatmul.mubr.f32.gmra.mrb[0].mxu0 %v725
        %v912 = vpop.f32.mrb[0].mxu0
        %v913 = vadd.f32 %v816, %v912
        %v914 = vpop.f32.mrb[0].mxu0
        %v915 = vadd.f32 %v816, %v914
        %916 = vmatprep.mubr.f32.mxu0 %v729
        %917 = vmatmul.mubr.f32.gmra.mrb[0].mxu0 %v728
        %v918 = vpop.f32.mrb[0].mxu0
        %v919 = vadd.f32 %v821, %v918
        %v920 = vpop.f32.mrb[0].mxu0
        %v921 = vadd.f32 %v821, %v920
        %922 = vmatprep.mubr.f32.mxu0 %v732
        %923 = vmatmul.mubr.f32.gmra.mrb[0].mxu0 %v731
        %v924 = vpop.f32.mrb[0].mxu0
        %v925 = vadd.f32 %v826, %v924
        %v926 = vpop.f32.mrb[0].mxu0
        %v927 = vadd.f32 %v826, %v926
        %928 = vmatprep.mubr.f32.mxu0 %v735
        %929 = vmatmul.mubr.f32.gmra.mrb[0].mxu0 %v734
        %v930 = vpop.f32.mrb[0].mxu0
        %v931 = vadd.f32 %v831, %v930
        %v932 = vpop.f32.mrb[0].mxu0
        %v933 = vadd.f32 %v831, %v932
        %934 = vdwg.mxu0
        %935 = vmatprep.subr.mxu0 %v802
        %936 = vmatpush1.msra.mxu0 %v801
        %937 = vmatprep.subr.mxu0 %v804
        %938 = vmatpush1.msra.mxu0 %v803
        %939 = vmatprep.subr.mxu0 %v806
        %940 = vmatpush1.msra.mxu0 %v805
        %941 = vmatprep.subr.mxu0 %v808
        %942 = vmatpush1.msra.mxu0 %v807
        %943 = vmatprep.subr.mxu0 0.0
        %944 = vmatpush1.msra.mxu0 0.0
        %945 = vmatprep.subr.mxu0 0.0
        %946 = vmatpush1.msra.mxu0 0.0
        %947 = vmatprep.subr.mxu0 0.0
        %948 = vmatpush1.msra.mxu0 0.0
        %949 = vmatprep.subr.mxu0 0.0
        %950 = vmatpush1.msra.mxu0 0.0
        %951 = vmatprep.subr.mxu0 0.0
        %952 = vmatpush1.msra.mxu0 0.0
        %953 = vmatprep.subr.mxu0 0.0
        %954 = vmatpush1.msra.mxu0 0.0
        %955 = vmatprep.subr.mxu0 0.0
        %956 = vmatpush1.msra.mxu0 0.0
        %957 = vmatprep.subr.mxu0 0.0
        %958 = vmatpush1.msra.mxu0 0.0
        %959 = vmatprep.subr.mxu0 0.0
        %960 = vmatpush1.msra.mxu0 0.0
        %961 = vmatprep.subr.mxu0 0.0
        %962 = vmatpush1.msra.mxu0 0.0
        %963 = vmatprep.subr.mxu0 0.0
        %964 = vmatpush1.msra.mxu0 0.0
        %965 = vmatprep.subr.mxu0 0.0
        %966 = vmatpush1.msra.mxu0 0.0
        %967 = vmatprep.subr.mxu0 0.0
        %968 = vmatpush1.msra.mxu0 0.0
        %969 = vmatprep.subr.mxu0 0.0
        %970 = vmatpush1.msra.mxu0 0.0
        %971 = vmatprep.subr.mxu0 0.0
        %972 = vmatpush1.msra.mxu0 0.0
        %973 = vmatprep.subr.mxu0 0.0
        %974 = vmatpush1.msra.mxu0 0.0
        %975 = vmatprep.subr.mxu0 0.0
        %976 = vmatpush1.msra.mxu0 0.0
        %977 = vmatprep.subr.mxu0 0.0
        %978 = vmatpush1.msra.mxu0 0.0
        %979 = vmatprep.subr.mxu0 0.0
        %980 = vmatpush1.msra.mxu0 0.0
        %981 = vmatprep.subr.mxu0 0.0
        %982 = vmatpush1.msra.mxu0 0.0
        %983 = vmatprep.subr.mxu0 0.0
        %984 = vmatpush1.msra.mxu0 0.0
        %985 = vmatprep.subr.mxu0 0.0
        %986 = vmatpush1.msra.mxu0 0.0
        %987 = vmatprep.subr.mxu0 0.0
        %988 = vmatpush1.msra.mxu0 0.0
        %989 = vmatprep.subr.mxu0 0.0
        %990 = vmatpush1.msra.mxu0 0.0
        %991 = vmatprep.subr.mxu0 0.0
        %992 = vmatpush1.msra.mxu0 0.0
        %993 = vmatprep.subr.mxu0 0.0
        %994 = vmatpush1.msra.mxu0 0.0
        %995 = vmatprep.subr.mxu0 0.0
        %996 = vmatpush1.msra.mxu0 0.0
        %997 = vmatprep.subr.mxu0 0.0
        %998 = vmatpush1.msra.mxu0 0.0
        %999 = vmatprep.mubr.f32.mxu0 0.0
        %1000 = vmatmul.mubr.f32.gmra.mrb[0].mxu0 %v835
        %v1001 = vpop.f32.mrb[0].mxu0
        %v1002 = vadd.f32 %v913, %v1001
        %v1003 = vpop.f32.mrb[0].mxu0
        %v1004 = vadd.f32 %v915, %v1003
        %1005 = vmatprep.mubr.f32.mxu0 0.0
        %1006 = vmatmul.mubr.f32.gmra.mrb[0].mxu0 %v838
        %v1007 = vpop.f32.mrb[0].mxu0
        %v1008 = vadd.f32 %v919, %v1007
        %v1009 = vpop.f32.mrb[0].mxu0
        %v1010 = vadd.f32 %v921, %v1009
        %1011 = vmatprep.mubr.f32.mxu0 0.0
        %1012 = vmatmul.mubr.f32.gmra.mrb[0].mxu0 %v841
        %v1013 = vpop.f32.mrb[0].mxu0
        %v1014 = vadd.f32 %v925, %v1013
        %v1015 = vpop.f32.mrb[0].mxu0
        %v1016 = vadd.f32 %v927, %v1015
        %1017 = vmatprep.mubr.f32.mxu0 0.0
        %1018 = vmatmul.mubr.f32.gmra.mrb[0].mxu0 %v844
        %v1019 = vpop.f32.mrb[0].mxu0
        %v1020 = vadd.f32 %v931, %v1019
        %v1021 = vpop.f32.mrb[0].mxu0
        %v1022 = vadd.f32 %v933, %v1021
        %1023 = vdwg.mxu0
        %v1024 = vmax.f32 %v1002, 0.0
        %v1025 = vmax.f32 %v1004, 0.0
        %v1026 = vmax.f32 %v1008, 0.0
        %v1027 = vmax.f32 %v1010, 0.0
        %v1028 = vmax.f32 %v1014, 0.0
        %v1029 = vmax.f32 %v1016, 0.0
        %v1030 = vmax.f32 %v1020, 0.0
        %v1031 = vmax.f32 %v1022, 0.0
        %1032 = vst [vmem:[#allocation2] sm:$0xff] %v1024
        %1033 = vst [vmem:[#allocation2 + $0x8] sm:$0xff] %v1025
        %1034 = vst [vmem:[#allocation2 + $0x10] sm:$0xff] %v1026
        %1035 = vst [vmem:[#allocation2 + $0x18] sm:$0xff] %v1027
        %1036 = vst [vmem:[#allocation2 + $0x20] sm:$0xff] %v1028
        %1037 = vst [vmem:[#allocation2 + $0x28] sm:$0xff] %v1029
        %1038 = vst [vmem:[#allocation2 + $0x30] sm:$0xff] %v1030
        %1039 = vst [vmem:[#allocation2 + $0x38] sm:$0xff] %v1031
        %v1040 = vld [vmem:[#allocation2] sm:$0xff]
        %v1041 = vld [vmem:[#allocation2 + $0x8] sm:$0xff]
        %v1042 = vld [vmem:[#allocation2 + $0x10] sm:$0xff]
        %v1043 = vld [vmem:[#allocation2 + $0x18] sm:$0xff]
        %v1044 = vld [vmem:[#allocation2 + $0x20] sm:$0xff]
        %v1045 = vld [vmem:[#allocation2 + $0x28] sm:$0xff]
        %v1046 = vld [vmem:[#allocation2 + $0x30] sm:$0xff]
        %v1047 = vld [vmem:[#allocation2 + $0x38] sm:$0xff]
        %1048 = vrot.lane.b32.xlu0 %v1040, 17
        %v1049 = vpop.permute.xlu0 %1048
        %1050 = vrot.lane.b32.xlu0 %v1042, 17
        %v1051 = vpop.permute.xlu0 %1050
        %1052 = vrot.lane.b32.xlu0 %v1044, 17
        %v1053 = vpop.permute.xlu0 %1052
        %1054 = vrot.lane.b32.xlu0 %v1046, 17
        %v1055 = vpop.permute.xlu0 %1054
        %1056 = vrot.lane.b32.xlu0 %v1041, 17
        %v1057 = vpop.permute.xlu0 %1056
        %1058 = vrot.lane.b32.xlu0 %v1043, 17
        %v1059 = vpop.permute.xlu0 %1058
        %1060 = vrot.lane.b32.xlu0 %v1045, 17
        %v1061 = vpop.permute.xlu0 %1060
        %1062 = vrot.lane.b32.xlu0 %v1047, 17
        %v1063 = vpop.permute.xlu0 %1062
        %v1064 = vsel %vm302, %v1049, %v1057
        %v1065 = vsel %vm302, %v1051, %v1059
        %v1066 = vsel %vm302, %v1053, %v1061
        %v1067 = vsel %vm302, %v1055, %v1063
        %v1068 = vsel %vm302, %v1057, %v1049
        %v1069 = vsel %vm302, %v1059, %v1051
        %v1070 = vsel %vm302, %v1061, %v1053
        %v1071 = vsel %vm302, %v1063, %v1055
        %v1072 = vld [vmem:[%s2] ss:$8 sm:$0x3]
        %v1074 = vlaneseq
        %v1075 = vshrl.u32 %v1074, 7
        %v1076 = vsub.s32 0, %v1075
        %v1077 = vrot.slane %v1072, %v1076
        %v1078 = vlaneseq
        %v1079 = vshrl.u32 %v1078, 7
        %v1080 = vsub.s32 1, %v1079
        %v1081 = vrot.slane %v1072, %v1080
        %v1084 = vmul.f32 %v1068, %v1077
        %v1085 = vmul.f32 %v1064, %v1081
        %v1086 = vmul.f32 %v1069, %v1077
        %v1087 = vmul.f32 %v1065, %v1081
        %v1088 = vmul.f32 %v1070, %v1077
        %v1089 = vmul.f32 %v1066, %v1081
        %v1090 = vmul.f32 %v1071, %v1077
        %v1091 = vmul.f32 %v1067, %v1081
        %1092 = vst [vmem:[#allocation3] sm:$0xff] %v1084
        %1093 = vst [vmem:[#allocation3 + $0x8] sm:$0xff] %v1085
        %1094 = vst [vmem:[#allocation3 + $0x10] sm:$0xff] %v1086
        %1095 = vst [vmem:[#allocation3 + $0x18] sm:$0xff] %v1087
        %1096 = vst [vmem:[#allocation3 + $0x20] sm:$0xff] %v1088
        %1097 = vst [vmem:[#allocation3 + $0x28] sm:$0xff] %v1089
        %1098 = vst [vmem:[#allocation3 + $0x30] sm:$0xff] %v1090
        %1099 = vst [vmem:[#allocation3 + $0x38] sm:$0xff] %v1091
        %1100 = vrot.lane.b32.xlu0 %v1040, 16
        %v1101 = vpop.permute.xlu0 %1100
        %1102 = vrot.lane.b32.xlu0 %v1042, 16
        %v1103 = vpop.permute.xlu0 %1102
        %1104 = vrot.lane.b32.xlu0 %v1044, 16
        %v1105 = vpop.permute.xlu0 %1104
        %1106 = vrot.lane.b32.xlu0 %v1046, 16
        %v1107 = vpop.permute.xlu0 %1106
        %1108 = vrot.lane.b32.xlu0 %v1041, 16
        %v1109 = vpop.permute.xlu0 %1108
        %1110 = vrot.lane.b32.xlu0 %v1043, 16
        %v1111 = vpop.permute.xlu0 %1110
        %1112 = vrot.lane.b32.xlu0 %v1045, 16
        %v1113 = vpop.permute.xlu0 %1112
        %1114 = vrot.lane.b32.xlu0 %v1047, 16
        %v1115 = vpop.permute.xlu0 %1114
        %v1116 = vsel %vm355, %v1101, %v1109
        %v1117 = vsel %vm355, %v1103, %v1111
        %v1118 = vsel %vm355, %v1105, %v1113
        %v1119 = vsel %vm355, %v1107, %v1115
        %v1120 = vsel %vm355, %v1109, %v1101
        %v1121 = vsel %vm355, %v1111, %v1103
        %v1122 = vsel %vm355, %v1113, %v1105
        %v1123 = vsel %vm355, %v1115, %v1107
        %v1124 = vld [vmem:[%s364] ss:$8 sm:$0x3]
        %v1126 = vlaneseq
        %v1127 = vshrl.u32 %v1126, 7
        %v1128 = vsub.s32 0, %v1127
        %v1129 = vrot.slane %v1124, %v1128
        %v1130 = vlaneseq
        %v1131 = vshrl.u32 %v1130, 7
        %v1132 = vsub.s32 1, %v1131
        %v1133 = vrot.slane %v1124, %v1132
        %v1136 = vmul.f32 %v1120, %v1129
        %v1137 = vmul.f32 %v1116, %v1133
        %v1138 = vmul.f32 %v1121, %v1129
        %v1139 = vmul.f32 %v1117, %v1133
        %v1140 = vmul.f32 %v1122, %v1129
        %v1141 = vmul.f32 %v1118, %v1133
        %v1142 = vmul.f32 %v1123, %v1129
        %v1143 = vmul.f32 %v1119, %v1133
        %1144 = vst [vmem:[#allocation3 + $0x40] sm:$0xff] %v1136
        %1145 = vst [vmem:[#allocation3 + $0x48] sm:$0xff] %v1137
        %1146 = vst [vmem:[#allocation3 + $0x50] sm:$0xff] %v1138
        %1147 = vst [vmem:[#allocation3 + $0x58] sm:$0xff] %v1139
        %1148 = vst [vmem:[#allocation3 + $0x60] sm:$0xff] %v1140
        %1149 = vst [vmem:[#allocation3 + $0x68] sm:$0xff] %v1141
        %1150 = vst [vmem:[#allocation3 + $0x70] sm:$0xff] %v1142
        %1151 = vst [vmem:[#allocation3 + $0x78] sm:$0xff] %v1143
        %1152 = vrot.lane.b32.xlu0 %v1040, 15
        %v1153 = vpop.permute.xlu0 %1152
        %1154 = vrot.lane.b32.xlu0 %v1042, 15
        %v1155 = vpop.permute.xlu0 %1154
        %1156 = vrot.lane.b32.xlu0 %v1044, 15
        %v1157 = vpop.permute.xlu0 %1156
        %1158 = vrot.lane.b32.xlu0 %v1046, 15
        %v1159 = vpop.permute.xlu0 %1158
        %1160 = vrot.lane.b32.xlu0 %v1041, 15
        %v1161 = vpop.permute.xlu0 %1160
        %1162 = vrot.lane.b32.xlu0 %v1043, 15
        %v1163 = vpop.permute.xlu0 %1162
        %1164 = vrot.lane.b32.xlu0 %v1045, 15
        %v1165 = vpop.permute.xlu0 %1164
        %1166 = vrot.lane.b32.xlu0 %v1047, 15
        %v1167 = vpop.permute.xlu0 %1166
        %v1168 = vsel %vm409, %v1153, %v1161
        %v1169 = vsel %vm409, %v1155, %v1163
        %v1170 = vsel %vm409, %v1157, %v1165
        %v1171 = vsel %vm409, %v1159, %v1167
        %v1172 = vsel %vm409, %v1161, %v1153
        %v1173 = vsel %vm409, %v1163, %v1155
        %v1174 = vsel %vm409, %v1165, %v1157
        %v1175 = vsel %vm409, %v1167, %v1159
        %v1176 = vld [vmem:[%s418] ss:$8 sm:$0x3]
        %v1178 = vlaneseq
        %v1179 = vshrl.u32 %v1178, 7
        %v1180 = vsub.s32 0, %v1179
        %v1181 = vrot.slane %v1176, %v1180
        %v1182 = vlaneseq
        %v1183 = vshrl.u32 %v1182, 7
        %v1184 = vsub.s32 1, %v1183
        %v1185 = vrot.slane %v1176, %v1184
        %v1188 = vmul.f32 %v1172, %v1181
        %v1189 = vmul.f32 %v1168, %v1185
        %v1190 = vmul.f32 %v1173, %v1181
        %v1191 = vmul.f32 %v1169, %v1185
        %v1192 = vmul.f32 %v1174, %v1181
        %v1193 = vmul.f32 %v1170, %v1185
        %v1194 = vmul.f32 %v1175, %v1181
        %v1195 = vmul.f32 %v1171, %v1185
        %1196 = vst [vmem:[#allocation3 + $0x80] sm:$0xff] %v1188
        %1197 = vst [vmem:[#allocation3 + $0x88] sm:$0xff] %v1189
        %1198 = vst [vmem:[#allocation3 + $0x90] sm:$0xff] %v1190
        %1199 = vst [vmem:[#allocation3 + $0x98] sm:$0xff] %v1191
        %1200 = vst [vmem:[#allocation3 + $0xa0] sm:$0xff] %v1192
        %1201 = vst [vmem:[#allocation3 + $0xa8] sm:$0xff] %v1193
        %1202 = vst [vmem:[#allocation3 + $0xb0] sm:$0xff] %v1194
        %1203 = vst [vmem:[#allocation3 + $0xb8] sm:$0xff] %v1195
        %1204 = vrot.lane.b32.xlu0 %v1040, 1
        %v1205 = vpop.permute.xlu0 %1204
        %1206 = vrot.lane.b32.xlu0 %v1042, 1
        %v1207 = vpop.permute.xlu0 %1206
        %1208 = vrot.lane.b32.xlu0 %v1044, 1
        %v1209 = vpop.permute.xlu0 %1208
        %1210 = vrot.lane.b32.xlu0 %v1046, 1
        %v1211 = vpop.permute.xlu0 %1210
        %1212 = vrot.lane.b32.xlu0 %v1041, 1
        %v1213 = vpop.permute.xlu0 %1212
        %1214 = vrot.lane.b32.xlu0 %v1043, 1
        %v1215 = vpop.permute.xlu0 %1214
        %1216 = vrot.lane.b32.xlu0 %v1045, 1
        %v1217 = vpop.permute.xlu0 %1216
        %1218 = vrot.lane.b32.xlu0 %v1047, 1
        %v1219 = vpop.permute.xlu0 %1218
        %v1220 = vsel %vm463, %v1205, %v1213
        %v1221 = vsel %vm463, %v1207, %v1215
        %v1222 = vsel %vm463, %v1209, %v1217
        %v1223 = vsel %vm463, %v1211, %v1219
        %v1224 = vsel %vm463, %v1213, %v1205
        %v1225 = vsel %vm463, %v1215, %v1207
        %v1226 = vsel %vm463, %v1217, %v1209
        %v1227 = vsel %vm463, %v1219, %v1211
        %v1228 = vld [vmem:[%s472] ss:$8 sm:$0x3]
        %v1230 = vlaneseq
        %v1231 = vshrl.u32 %v1230, 7
        %v1232 = vsub.s32 0, %v1231
        %v1233 = vrot.slane %v1228, %v1232
        %v1234 = vlaneseq
        %v1235 = vshrl.u32 %v1234, 7
        %v1236 = vsub.s32 1, %v1235
        %v1237 = vrot.slane %v1228, %v1236
        %v1240 = vmul.f32 %v1224, %v1233
        %v1241 = vmul.f32 %v1220, %v1237
        %v1242 = vmul.f32 %v1225, %v1233
        %v1243 = vmul.f32 %v1221, %v1237
        %v1244 = vmul.f32 %v1226, %v1233
        %v1245 = vmul.f32 %v1222, %v1237
        %v1246 = vmul.f32 %v1227, %v1233
        %v1247 = vmul.f32 %v1223, %v1237
        %1248 = vst [vmem:[#allocation3 + $0xc0] sm:$0xff] %v1240
        %1249 = vst [vmem:[#allocation3 + $0xc8] sm:$0xff] %v1241
        %1250 = vst [vmem:[#allocation3 + $0xd0] sm:$0xff] %v1242
        %1251 = vst [vmem:[#allocation3 + $0xd8] sm:$0xff] %v1243
        %1252 = vst [vmem:[#allocation3 + $0xe0] sm:$0xff] %v1244
        %1253 = vst [vmem:[#allocation3 + $0xe8] sm:$0xff] %v1245
        %1254 = vst [vmem:[#allocation3 + $0xf0] sm:$0xff] %v1246
        %1255 = vst [vmem:[#allocation3 + $0xf8] sm:$0xff] %v1247
        %1256 = vst [vmem:[#allocation3 + $0x100] sm:$0xff] %v1040
        %1257 = vst [vmem:[#allocation3 + $0x108] sm:$0xff] %v1041
        %1258 = vst [vmem:[#allocation3 + $0x110] sm:$0xff] %v1042
        %1259 = vst [vmem:[#allocation3 + $0x118] sm:$0xff] %v1043
        %1260 = vst [vmem:[#allocation3 + $0x120] sm:$0xff] %v1044
        %1261 = vst [vmem:[#allocation3 + $0x128] sm:$0xff] %v1045
        %1262 = vst [vmem:[#allocation3 + $0x130] sm:$0xff] %v1046
        %1263 = vst [vmem:[#allocation3 + $0x138] sm:$0xff] %v1047
        %1264 = vrot.lane.b32.xlu0 %v1040, 127
        %v1265 = vpop.permute.xlu0 %1264
        %1266 = vrot.lane.b32.xlu0 %v1042, 127
        %v1267 = vpop.permute.xlu0 %1266
        %1268 = vrot.lane.b32.xlu0 %v1044, 127
        %v1269 = vpop.permute.xlu0 %1268
        %1270 = vrot.lane.b32.xlu0 %v1046, 127
        %v1271 = vpop.permute.xlu0 %1270
        %1272 = vrot.lane.b32.xlu0 %v1041, 127
        %v1273 = vpop.permute.xlu0 %1272
        %1274 = vrot.lane.b32.xlu0 %v1043, 127
        %v1275 = vpop.permute.xlu0 %1274
        %1276 = vrot.lane.b32.xlu0 %v1045, 127
        %v1277 = vpop.permute.xlu0 %1276
        %1278 = vrot.lane.b32.xlu0 %v1047, 127
        %v1279 = vpop.permute.xlu0 %1278
        %v1280 = vsel %vm525, %v1265, %v1273
        %v1281 = vsel %vm525, %v1267, %v1275
        %v1282 = vsel %vm525, %v1269, %v1277
        %v1283 = vsel %vm525, %v1271, %v1279
        %v1284 = vsel %vm525, %v1273, %v1265
        %v1285 = vsel %vm525, %v1275, %v1267
        %v1286 = vsel %vm525, %v1277, %v1269
        %v1287 = vsel %vm525, %v1279, %v1271
        %v1288 = vld [vmem:[%s534] ss:$8 sm:$0x3]
        %v1290 = vlaneseq
        %v1291 = vshrl.u32 %v1290, 7
        %v1292 = vsub.s32 0, %v1291
        %v1293 = vrot.slane %v1288, %v1292
        %v1294 = vlaneseq
        %v1295 = vshrl.u32 %v1294, 7
        %v1296 = vsub.s32 1, %v1295
        %v1297 = vrot.slane %v1288, %v1296
        %v1300 = vmul.f32 %v1280, %v1293
        %v1301 = vmul.f32 %v1284, %v1297
        %v1302 = vmul.f32 %v1281, %v1293
        %v1303 = vmul.f32 %v1285, %v1297
        %v1304 = vmul.f32 %v1282, %v1293
        %v1305 = vmul.f32 %v1286, %v1297
        %v1306 = vmul.f32 %v1283, %v1293
        %v1307 = vmul.f32 %v1287, %v1297
        %1308 = vst [vmem:[#allocation3 + $0x140] sm:$0xff] %v1300
        %1309 = vst [vmem:[#allocation3 + $0x148] sm:$0xff] %v1301
        %1310 = vst [vmem:[#allocation3 + $0x150] sm:$0xff] %v1302
        %1311 = vst [vmem:[#allocation3 + $0x158] sm:$0xff] %v1303
        %1312 = vst [vmem:[#allocation3 + $0x160] sm:$0xff] %v1304
        %1313 = vst [vmem:[#allocation3 + $0x168] sm:$0xff] %v1305
        %1314 = vst [vmem:[#allocation3 + $0x170] sm:$0xff] %v1306
        %1315 = vst [vmem:[#allocation3 + $0x178] sm:$0xff] %v1307
        %1316 = vrot.lane.b32.xlu0 %v1040, 113
        %v1317 = vpop.permute.xlu0 %1316
        %1318 = vrot.lane.b32.xlu0 %v1042, 113
        %v1319 = vpop.permute.xlu0 %1318
        %1320 = vrot.lane.b32.xlu0 %v1044, 113
        %v1321 = vpop.permute.xlu0 %1320
        %1322 = vrot.lane.b32.xlu0 %v1046, 113
        %v1323 = vpop.permute.xlu0 %1322
        %1324 = vrot.lane.b32.xlu0 %v1041, 113
        %v1325 = vpop.permute.xlu0 %1324
        %1326 = vrot.lane.b32.xlu0 %v1043, 113
        %v1327 = vpop.permute.xlu0 %1326
        %1328 = vrot.lane.b32.xlu0 %v1045, 113
        %v1329 = vpop.permute.xlu0 %1328
        %1330 = vrot.lane.b32.xlu0 %v1047, 113
        %v1331 = vpop.permute.xlu0 %1330
        %v1332 = vsel %vm579, %v1317, %v1325
        %v1333 = vsel %vm579, %v1319, %v1327
        %v1334 = vsel %vm579, %v1321, %v1329
        %v1335 = vsel %vm579, %v1323, %v1331
        %v1336 = vsel %vm579, %v1325, %v1317
        %v1337 = vsel %vm579, %v1327, %v1319
        %v1338 = vsel %vm579, %v1329, %v1321
        %v1339 = vsel %vm579, %v1331, %v1323
        %v1340 = vld [vmem:[%s588] ss:$8 sm:$0x3]
        %v1342 = vlaneseq
        %v1343 = vshrl.u32 %v1342, 7
        %v1344 = vsub.s32 0, %v1343
        %v1345 = vrot.slane %v1340, %v1344
        %v1346 = vlaneseq
        %v1347 = vshrl.u32 %v1346, 7
        %v1348 = vsub.s32 1, %v1347
        %v1349 = vrot.slane %v1340, %v1348
        %v1352 = vmul.f32 %v1332, %v1345
        %v1353 = vmul.f32 %v1336, %v1349
        %v1354 = vmul.f32 %v1333, %v1345
        %v1355 = vmul.f32 %v1337, %v1349
        %v1356 = vmul.f32 %v1334, %v1345
        %v1357 = vmul.f32 %v1338, %v1349
        %v1358 = vmul.f32 %v1335, %v1345
        %v1359 = vmul.f32 %v1339, %v1349
        %1360 = vst [vmem:[#allocation3 + $0x180] sm:$0xff] %v1352
        %1361 = vst [vmem:[#allocation3 + $0x188] sm:$0xff] %v1353
        %1362 = vst [vmem:[#allocation3 + $0x190] sm:$0xff] %v1354
        %1363 = vst [vmem:[#allocation3 + $0x198] sm:$0xff] %v1355
        %1364 = vst [vmem:[#allocation3 + $0x1a0] sm:$0xff] %v1356
        %1365 = vst [vmem:[#allocation3 + $0x1a8] sm:$0xff] %v1357
        %1366 = vst [vmem:[#allocation3 + $0x1b0] sm:$0xff] %v1358
        %1367 = vst [vmem:[#allocation3 + $0x1b8] sm:$0xff] %v1359
        %1368 = vrot.lane.b32.xlu0 %v1040, 112
        %v1369 = vpop.permute.xlu0 %1368
        %1370 = vrot.lane.b32.xlu0 %v1042, 112
        %v1371 = vpop.permute.xlu0 %1370
        %1372 = vrot.lane.b32.xlu0 %v1044, 112
        %v1373 = vpop.permute.xlu0 %1372
        %1374 = vrot.lane.b32.xlu0 %v1046, 112
        %v1375 = vpop.permute.xlu0 %1374
        %1376 = vrot.lane.b32.xlu0 %v1041, 112
        %v1377 = vpop.permute.xlu0 %1376
        %1378 = vrot.lane.b32.xlu0 %v1043, 112
        %v1379 = vpop.permute.xlu0 %1378
        %1380 = vrot.lane.b32.xlu0 %v1045, 112
        %v1381 = vpop.permute.xlu0 %1380
        %1382 = vrot.lane.b32.xlu0 %v1047, 112
        %v1383 = vpop.permute.xlu0 %1382
        %v1384 = vsel %vm633, %v1369, %v1377
        %v1385 = vsel %vm633, %v1371, %v1379
        %v1386 = vsel %vm633, %v1373, %v1381
        %v1387 = vsel %vm633, %v1375, %v1383
        %v1388 = vsel %vm633, %v1377, %v1369
        %v1389 = vsel %vm633, %v1379, %v1371
        %v1390 = vsel %vm633, %v1381, %v1373
        %v1391 = vsel %vm633, %v1383, %v1375
        %v1392 = vld [vmem:[%s642] ss:$8 sm:$0x3]
        %v1394 = vlaneseq
        %v1395 = vshrl.u32 %v1394, 7
        %v1396 = vsub.s32 0, %v1395
        %v1397 = vrot.slane %v1392, %v1396
        %v1398 = vlaneseq
        %v1399 = vshrl.u32 %v1398, 7
        %v1400 = vsub.s32 1, %v1399
        %v1401 = vrot.slane %v1392, %v1400
        %v1404 = vmul.f32 %v1384, %v1397
        %v1405 = vmul.f32 %v1388, %v1401
        %v1406 = vmul.f32 %v1385, %v1397
        %v1407 = vmul.f32 %v1389, %v1401
        %v1408 = vmul.f32 %v1386, %v1397
        %v1409 = vmul.f32 %v1390, %v1401
        %v1410 = vmul.f32 %v1387, %v1397
        %v1411 = vmul.f32 %v1391, %v1401
        %1412 = vst [vmem:[#allocation3 + $0x1c0] sm:$0xff] %v1404
        %1413 = vst [vmem:[#allocation3 + $0x1c8] sm:$0xff] %v1405
        %1414 = vst [vmem:[#allocation3 + $0x1d0] sm:$0xff] %v1406
        %1415 = vst [vmem:[#allocation3 + $0x1d8] sm:$0xff] %v1407
        %1416 = vst [vmem:[#allocation3 + $0x1e0] sm:$0xff] %v1408
        %1417 = vst [vmem:[#allocation3 + $0x1e8] sm:$0xff] %v1409
        %1418 = vst [vmem:[#allocation3 + $0x1f0] sm:$0xff] %v1410
        %1419 = vst [vmem:[#allocation3 + $0x1f8] sm:$0xff] %v1411
        %1420 = vrot.lane.b32.xlu0 %v1040, 111
        %v1421 = vpop.permute.xlu0 %1420
        %1422 = vrot.lane.b32.xlu0 %v1042, 111
        %v1423 = vpop.permute.xlu0 %1422
        %1424 = vrot.lane.b32.xlu0 %v1044, 111
        %v1425 = vpop.permute.xlu0 %1424
        %1426 = vrot.lane.b32.xlu0 %v1046, 111
        %v1427 = vpop.permute.xlu0 %1426
        %1428 = vrot.lane.b32.xlu0 %v1041, 111
        %v1429 = vpop.permute.xlu0 %1428
        %1430 = vrot.lane.b32.xlu0 %v1043, 111
        %v1431 = vpop.permute.xlu0 %1430
        %1432 = vrot.lane.b32.xlu0 %v1045, 111
        %v1433 = vpop.permute.xlu0 %1432
        %1434 = vrot.lane.b32.xlu0 %v1047, 111
        %v1435 = vpop.permute.xlu0 %1434
        %v1436 = vsel %vm687, %v1421, %v1429
        %v1437 = vsel %vm687, %v1423, %v1431
        %v1438 = vsel %vm687, %v1425, %v1433
        %v1439 = vsel %vm687, %v1427, %v1435
        %v1440 = vsel %vm687, %v1429, %v1421
        %v1441 = vsel %vm687, %v1431, %v1423
        %v1442 = vsel %vm687, %v1433, %v1425
        %v1443 = vsel %vm687, %v1435, %v1427
        %v1444 = vld [vmem:[%s696] ss:$8 sm:$0x3]
        %v1446 = vlaneseq
        %v1447 = vshrl.u32 %v1446, 7
        %v1448 = vsub.s32 0, %v1447
        %v1449 = vrot.slane %v1444, %v1448
        %v1450 = vlaneseq
        %v1451 = vshrl.u32 %v1450, 7
        %v1452 = vsub.s32 1, %v1451
        %v1453 = vrot.slane %v1444, %v1452
        %v1456 = vmul.f32 %v1436, %v1449
        %v1457 = vmul.f32 %v1440, %v1453
        %v1458 = vmul.f32 %v1437, %v1449
        %v1459 = vmul.f32 %v1441, %v1453
        %v1460 = vmul.f32 %v1438, %v1449
        %v1461 = vmul.f32 %v1442, %v1453
        %v1462 = vmul.f32 %v1439, %v1449
        %v1463 = vmul.f32 %v1443, %v1453
        %1464 = vst [vmem:[#allocation3 + $0x200] sm:$0xff] %v1456
        %1465 = vst [vmem:[#allocation3 + $0x208] sm:$0xff] %v1457
        %1466 = vst [vmem:[#allocation3 + $0x210] sm:$0xff] %v1458
        %1467 = vst [vmem:[#allocation3 + $0x218] sm:$0xff] %v1459
        %1468 = vst [vmem:[#allocation3 + $0x220] sm:$0xff] %v1460
        %1469 = vst [vmem:[#allocation3 + $0x228] sm:$0xff] %v1461
        %1470 = vst [vmem:[#allocation3 + $0x230] sm:$0xff] %v1462
        %1471 = vst [vmem:[#allocation3 + $0x238] sm:$0xff] %v1463
        %s1472 = scalar_lea.vmem [#allocation4], 96
        %v1473 = vld [vmem:[%s1472] sm:$0xff]
        %v1474 = vld [vmem:[%s1472 + $0x8] sm:$0xff]
        %v1475 = vld [vmem:[%s1472 + $0x10] sm:$0xff]
        %v1476 = vld [vmem:[%s1472 + $0x18] sm:$0xff]
        %v1477 = vld [vmem:[%s1472 + $0x20] sm:$0xff]
        %v1478 = vld [vmem:[%s1472 + $0x28] sm:$0xff]
        %v1479 = vld [vmem:[%s1472 + $0x30] sm:$0xff]
        %v1480 = vld [vmem:[%s1472 + $0x38] sm:$0xff]
        %v1481 = vld [vmem:[%s1472 + $0x40] sm:$0xff]
        %v1482 = vld [vmem:[%s1472 + $0x48] sm:$0xff]
        %v1483 = vld [vmem:[%s1472 + $0x50] sm:$0xff]
        %v1484 = vld [vmem:[%s1472 + $0x58] sm:$0xff]
        %v1485 = vld [vmem:[#allocation3] sm:$0xff]
        %v1486 = vld [vmem:[#allocation3 + $0x8] sm:$0xff]
        %v1487 = vld [vmem:[#allocation3 + $0x10] sm:$0xff]
        %v1488 = vld [vmem:[#allocation3 + $0x18] sm:$0xff]
        %v1489 = vld [vmem:[#allocation3 + $0x20] sm:$0xff]
        %v1490 = vld [vmem:[#allocation3 + $0x28] sm:$0xff]
        %v1491 = vld [vmem:[#allocation3 + $0x30] sm:$0xff]
        %v1492 = vld [vmem:[#allocation3 + $0x38] sm:$0xff]
        %v1493 = vld [vmem:[#allocation3 + $0x40] sm:$0xff]
        %v1494 = vld [vmem:[#allocation3 + $0x48] sm:$0xff]
        %v1495 = vld [vmem:[#allocation3 + $0x50] sm:$0xff]
        %v1496 = vld [vmem:[#allocation3 + $0x58] sm:$0xff]
        %v1497 = vld [vmem:[#allocation3 + $0x60] sm:$0xff]
        %v1498 = vld [vmem:[#allocation3 + $0x68] sm:$0xff]
        %v1499 = vld [vmem:[#allocation3 + $0x70] sm:$0xff]
        %v1500 = vld [vmem:[#allocation3 + $0x78] sm:$0xff]
        %v1501 = vld [vmem:[#allocation3 + $0x80] sm:$0xff]
        %v1502 = vld [vmem:[#allocation3 + $0x88] sm:$0xff]
        %v1503 = vld [vmem:[#allocation3 + $0x90] sm:$0xff]
        %v1504 = vld [vmem:[#allocation3 + $0x98] sm:$0xff]
        %v1505 = vld [vmem:[#allocation3 + $0xa0] sm:$0xff]
        %v1506 = vld [vmem:[#allocation3 + $0xa8] sm:$0xff]
        %v1507 = vld [vmem:[#allocation3 + $0xb0] sm:$0xff]
        %v1508 = vld [vmem:[#allocation3 + $0xb8] sm:$0xff]
        %v1509 = vld [vmem:[#allocation3 + $0xc0] sm:$0xff]
        %v1510 = vld [vmem:[#allocation3 + $0xc8] sm:$0xff]
        %v1511 = vld [vmem:[#allocation3 + $0xd0] sm:$0xff]
        %v1512 = vld [vmem:[#allocation3 + $0xd8] sm:$0xff]
        %v1513 = vld [vmem:[#allocation3 + $0xe0] sm:$0xff]
        %v1514 = vld [vmem:[#allocation3 + $0xe8] sm:$0xff]
        %v1515 = vld [vmem:[#allocation3 + $0xf0] sm:$0xff]
        %v1516 = vld [vmem:[#allocation3 + $0xf8] sm:$0xff]
        %v1517 = vld [vmem:[#allocation3 + $0x100] sm:$0xff]
        %v1518 = vld [vmem:[#allocation3 + $0x108] sm:$0xff]
        %v1519 = vld [vmem:[#allocation3 + $0x110] sm:$0xff]
        %v1520 = vld [vmem:[#allocation3 + $0x118] sm:$0xff]
        %v1521 = vld [vmem:[#allocation3 + $0x120] sm:$0xff]
        %v1522 = vld [vmem:[#allocation3 + $0x128] sm:$0xff]
        %v1523 = vld [vmem:[#allocation3 + $0x130] sm:$0xff]
        %v1524 = vld [vmem:[#allocation3 + $0x138] sm:$0xff]
        %v1525 = vld [vmem:[#allocation3 + $0x140] sm:$0xff]
        %v1526 = vld [vmem:[#allocation3 + $0x148] sm:$0xff]
        %v1527 = vld [vmem:[#allocation3 + $0x150] sm:$0xff]
        %v1528 = vld [vmem:[#allocation3 + $0x158] sm:$0xff]
        %v1529 = vld [vmem:[#allocation3 + $0x160] sm:$0xff]
        %v1530 = vld [vmem:[#allocation3 + $0x168] sm:$0xff]
        %v1531 = vld [vmem:[#allocation3 + $0x170] sm:$0xff]
        %v1532 = vld [vmem:[#allocation3 + $0x178] sm:$0xff]
        %v1533 = vld [vmem:[#allocation3 + $0x180] sm:$0xff]
        %v1534 = vld [vmem:[#allocation3 + $0x188] sm:$0xff]
        %v1535 = vld [vmem:[#allocation3 + $0x190] sm:$0xff]
        %v1536 = vld [vmem:[#allocation3 + $0x198] sm:$0xff]
        %v1537 = vld [vmem:[#allocation3 + $0x1a0] sm:$0xff]
        %v1538 = vld [vmem:[#allocation3 + $0x1a8] sm:$0xff]
        %v1539 = vld [vmem:[#allocation3 + $0x1b0] sm:$0xff]
        %v1540 = vld [vmem:[#allocation3 + $0x1b8] sm:$0xff]
        %v1541 = vld [vmem:[#allocation3 + $0x1c0] sm:$0xff]
        %v1542 = vld [vmem:[#allocation3 + $0x1c8] sm:$0xff]
        %v1543 = vld [vmem:[#allocation3 + $0x1d0] sm:$0xff]
        %v1544 = vld [vmem:[#allocation3 + $0x1d8] sm:$0xff]
        %v1545 = vld [vmem:[#allocation3 + $0x1e0] sm:$0xff]
        %v1546 = vld [vmem:[#allocation3 + $0x1e8] sm:$0xff]
        %v1547 = vld [vmem:[#allocation3 + $0x1f0] sm:$0xff]
        %v1548 = vld [vmem:[#allocation3 + $0x1f8] sm:$0xff]
        %v1549 = vld [vmem:[#allocation3 + $0x200] sm:$0xff]
        %v1550 = vld [vmem:[#allocation3 + $0x208] sm:$0xff]
        %v1551 = vld [vmem:[#allocation3 + $0x210] sm:$0xff]
        %v1552 = vld [vmem:[#allocation3 + $0x218] sm:$0xff]
        %v1553 = vld [vmem:[#allocation3 + $0x220] sm:$0xff]
        %v1554 = vld [vmem:[#allocation3 + $0x228] sm:$0xff]
        %v1555 = vld [vmem:[#allocation3 + $0x230] sm:$0xff]
        %v1556 = vld [vmem:[#allocation3 + $0x238] sm:$0xff]
        %s1557 = scalar_lea.vmem %s4, 32
        %v1558 = vld [vmem:[%s1557] sm:$0xff]
        %v1559 = vld [vmem:[%s1557 + $0x8] sm:$0xff]
        %v1560 = vld [vmem:[%s1557 + $0x10] sm:$0xff]
        %v1561 = vld [vmem:[%s1557 + $0x18] sm:$0xff]
        %1563 = vset.pattern.permute.xlu0 0
        %1564 = vperm.xlu0 %1563, %v1558
        %v1565 = vpop.permute.xlu0 %1564
        %1568 = vset.pattern.permute.xlu0 0
        %1569 = vperm.xlu0 %1568, %v1559
        %v1570 = vpop.permute.xlu0 %1569
        %1573 = vset.pattern.permute.xlu0 0
        %1574 = vperm.xlu0 %1573, %v1560
        %v1575 = vpop.permute.xlu0 %1574
        %1578 = vset.pattern.permute.xlu0 0
        %1579 = vperm.xlu0 %1578, %v1561
        %v1580 = vpop.permute.xlu0 %1579
        %v1583 = vsel %vm833, %v1475, 0
        %v1586 = vsel %vm833, %v1478, 0
        %v1589 = vsel %vm833, %v1481, 0
        %v1592 = vsel %vm833, %v1484, 0
        %1594 = vmatprep.subr.mxu0 %v1486
        %1595 = vmatpush1.msra.mxu0 %v1485
        %1596 = vmatprep.subr.mxu0 %v1488
        %1597 = vmatpush1.msra.mxu0 %v1487
        %1598 = vmatprep.subr.mxu0 %v1490
        %1599 = vmatpush1.msra.mxu0 %v1489
        %1600 = vmatprep.subr.mxu0 %v1492
        %1601 = vmatpush1.msra.mxu0 %v1491
        %1602 = vmatprep.subr.mxu0 %v1494
        %1603 = vmatpush1.msra.mxu0 %v1493
        %1604 = vmatprep.subr.mxu0 %v1496
        %1605 = vmatpush1.msra.mxu0 %v1495
        %1606 = vmatprep.subr.mxu0 %v1498
        %1607 = vmatpush1.msra.mxu0 %v1497
        %1608 = vmatprep.subr.mxu0 %v1500
        %1609 = vmatpush1.msra.mxu0 %v1499
        %1610 = vmatprep.subr.mxu0 %v1502
        %1611 = vmatpush1.msra.mxu0 %v1501
        %1612 = vmatprep.subr.mxu0 %v1504
        %1613 = vmatpush1.msra.mxu0 %v1503
        %1614 = vmatprep.subr.mxu0 %v1506
        %1615 = vmatpush1.msra.mxu0 %v1505
        %1616 = vmatprep.subr.mxu0 %v1508
        %1617 = vmatpush1.msra.mxu0 %v1507
        %1618 = vmatprep.subr.mxu0 %v1510
        %1619 = vmatpush1.msra.mxu0 %v1509
        %1620 = vmatprep.subr.mxu0 %v1512
        %1621 = vmatpush1.msra.mxu0 %v1511
        %1622 = vmatprep.subr.mxu0 %v1514
        %1623 = vmatpush1.msra.mxu0 %v1513
        %1624 = vmatprep.subr.mxu0 %v1516
        %1625 = vmatpush1.msra.mxu0 %v1515
        %1626 = vmatprep.subr.mxu0 %v1518
        %1627 = vmatpush1.msra.mxu0 %v1517
        %1628 = vmatprep.subr.mxu0 %v1520
        %1629 = vmatpush1.msra.mxu0 %v1519
        %1630 = vmatprep.subr.mxu0 %v1522
        %1631 = vmatpush1.msra.mxu0 %v1521
        %1632 = vmatprep.subr.mxu0 %v1524
        %1633 = vmatpush1.msra.mxu0 %v1523
        %1634 = vmatprep.subr.mxu0 %v1526
        %1635 = vmatpush1.msra.mxu0 %v1525
        %1636 = vmatprep.subr.mxu0 %v1528
        %1637 = vmatpush1.msra.mxu0 %v1527
        %1638 = vmatprep.subr.mxu0 %v1530
        %1639 = vmatpush1.msra.mxu0 %v1529
        %1640 = vmatprep.subr.mxu0 %v1532
        %1641 = vmatpush1.msra.mxu0 %v1531
        %1642 = vmatprep.subr.mxu0 %v1534
        %1643 = vmatpush1.msra.mxu0 %v1533
        %1644 = vmatprep.subr.mxu0 %v1536
        %1645 = vmatpush1.msra.mxu0 %v1535
        %1646 = vmatprep.subr.mxu0 %v1538
        %1647 = vmatpush1.msra.mxu0 %v1537
        %1648 = vmatprep.subr.mxu0 %v1540
        %1649 = vmatpush1.msra.mxu0 %v1539
        %1650 = vmatprep.subr.mxu0 %v1542
        %1651 = vmatpush1.msra.mxu0 %v1541
        %1652 = vmatprep.subr.mxu0 %v1544
        %1653 = vmatpush1.msra.mxu0 %v1543
        %1654 = vmatprep.subr.mxu0 %v1546
        %1655 = vmatpush1.msra.mxu0 %v1545
        %1656 = vmatprep.subr.mxu0 %v1548
        %1657 = vmatpush1.msra.mxu0 %v1547
        %1658 = vmatprep.mubr.f32.mxu0 %v1474
        %1659 = vmatmul.mubr.f32.gmra.mrb[0].mxu0 %v1473
        %v1660 = vpop.f32.mrb[0].mxu0
        %v1661 = vadd.f32 %v1565, %v1660
        %v1662 = vpop.f32.mrb[0].mxu0
        %v1663 = vadd.f32 %v1565, %v1662
        %1664 = vmatprep.mubr.f32.mxu0 %v1477
        %1665 = vmatmul.mubr.f32.gmra.mrb[0].mxu0 %v1476
        %v1666 = vpop.f32.mrb[0].mxu0
        %v1667 = vadd.f32 %v1570, %v1666
        %v1668 = vpop.f32.mrb[0].mxu0
        %v1669 = vadd.f32 %v1570, %v1668
        %1670 = vmatprep.mubr.f32.mxu0 %v1480
        %1671 = vmatmul.mubr.f32.gmra.mrb[0].mxu0 %v1479
        %v1672 = vpop.f32.mrb[0].mxu0
        %v1673 = vadd.f32 %v1575, %v1672
        %v1674 = vpop.f32.mrb[0].mxu0
        %v1675 = vadd.f32 %v1575, %v1674
        %1676 = vmatprep.mubr.f32.mxu0 %v1483
        %1677 = vmatmul.mubr.f32.gmra.mrb[0].mxu0 %v1482
        %v1678 = vpop.f32.mrb[0].mxu0
        %v1679 = vadd.f32 %v1580, %v1678
        %v1680 = vpop.f32.mrb[0].mxu0
        %v1681 = vadd.f32 %v1580, %v1680
        %1682 = vdwg.mxu0
        %1683 = vmatprep.subr.mxu0 %v1550
        %1684 = vmatpush1.msra.mxu0 %v1549
        %1685 = vmatprep.subr.mxu0 %v1552
        %1686 = vmatpush1.msra.mxu0 %v1551
        %1687 = vmatprep.subr.mxu0 %v1554
        %1688 = vmatpush1.msra.mxu0 %v1553
        %1689 = vmatprep.subr.mxu0 %v1556
        %1690 = vmatpush1.msra.mxu0 %v1555
        %1691 = vmatprep.subr.mxu0 0.0
        %1692 = vmatpush1.msra.mxu0 0.0
        %1693 = vmatprep.subr.mxu0 0.0
        %1694 = vmatpush1.msra.mxu0 0.0
        %1695 = vmatprep.subr.mxu0 0.0
        %1696 = vmatpush1.msra.mxu0 0.0
        %1697 = vmatprep.subr.mxu0 0.0
        %1698 = vmatpush1.msra.mxu0 0.0
        %1699 = vmatprep.subr.mxu0 0.0
        %1700 = vmatpush1.msra.mxu0 0.0
        %1701 = vmatprep.subr.mxu0 0.0
        %1702 = vmatpush1.msra.mxu0 0.0
        %1703 = vmatprep.subr.mxu0 0.0
        %1704 = vmatpush1.msra.mxu0 0.0
        %1705 = vmatprep.subr.mxu0 0.0
        %1706 = vmatpush1.msra.mxu0 0.0
        %1707 = vmatprep.subr.mxu0 0.0
        %1708 = vmatpush1.msra.mxu0 0.0
        %1709 = vmatprep.subr.mxu0 0.0
        %1710 = vmatpush1.msra.mxu0 0.0
        %1711 = vmatprep.subr.mxu0 0.0
        %1712 = vmatpush1.msra.mxu0 0.0
        %1713 = vmatprep.subr.mxu0 0.0
        %1714 = vmatpush1.msra.mxu0 0.0
        %1715 = vmatprep.subr.mxu0 0.0
        %1716 = vmatpush1.msra.mxu0 0.0
        %1717 = vmatprep.subr.mxu0 0.0
        %1718 = vmatpush1.msra.mxu0 0.0
        %1719 = vmatprep.subr.mxu0 0.0
        %1720 = vmatpush1.msra.mxu0 0.0
        %1721 = vmatprep.subr.mxu0 0.0
        %1722 = vmatpush1.msra.mxu0 0.0
        %1723 = vmatprep.subr.mxu0 0.0
        %1724 = vmatpush1.msra.mxu0 0.0
        %1725 = vmatprep.subr.mxu0 0.0
        %1726 = vmatpush1.msra.mxu0 0.0
        %1727 = vmatprep.subr.mxu0 0.0
        %1728 = vmatpush1.msra.mxu0 0.0
        %1729 = vmatprep.subr.mxu0 0.0
        %1730 = vmatpush1.msra.mxu0 0.0
        %1731 = vmatprep.subr.mxu0 0.0
        %1732 = vmatpush1.msra.mxu0 0.0
        %1733 = vmatprep.subr.mxu0 0.0
        %1734 = vmatpush1.msra.mxu0 0.0
        %1735 = vmatprep.subr.mxu0 0.0
        %1736 = vmatpush1.msra.mxu0 0.0
        %1737 = vmatprep.subr.mxu0 0.0
        %1738 = vmatpush1.msra.mxu0 0.0
        %1739 = vmatprep.subr.mxu0 0.0
        %1740 = vmatpush1.msra.mxu0 0.0
        %1741 = vmatprep.subr.mxu0 0.0
        %1742 = vmatpush1.msra.mxu0 0.0
        %1743 = vmatprep.subr.mxu0 0.0
        %1744 = vmatpush1.msra.mxu0 0.0
        %1745 = vmatprep.subr.mxu0 0.0
        %1746 = vmatpush1.msra.mxu0 0.0
        %1747 = vmatprep.mubr.f32.mxu0 0.0
        %1748 = vmatmul.mubr.f32.gmra.mrb[0].mxu0 %v1583
        %v1749 = vpop.f32.mrb[0].mxu0
        %v1750 = vadd.f32 %v1661, %v1749
        %v1751 = vpop.f32.mrb[0].mxu0
        %v1752 = vadd.f32 %v1663, %v1751
        %1753 = vmatprep.mubr.f32.mxu0 0.0
        %1754 = vmatmul.mubr.f32.gmra.mrb[0].mxu0 %v1586
        %v1755 = vpop.f32.mrb[0].mxu0
        %v1756 = vadd.f32 %v1667, %v1755
        %v1757 = vpop.f32.mrb[0].mxu0
        %v1758 = vadd.f32 %v1669, %v1757
        %1759 = vmatprep.mubr.f32.mxu0 0.0
        %1760 = vmatmul.mubr.f32.gmra.mrb[0].mxu0 %v1589
        %v1761 = vpop.f32.mrb[0].mxu0
        %v1762 = vadd.f32 %v1673, %v1761
        %v1763 = vpop.f32.mrb[0].mxu0
        %v1764 = vadd.f32 %v1675, %v1763
        %1765 = vmatprep.mubr.f32.mxu0 0.0
        %1766 = vmatmul.mubr.f32.gmra.mrb[0].mxu0 %v1592
        %v1767 = vpop.f32.mrb[0].mxu0
        %v1768 = vadd.f32 %v1679, %v1767
        %v1769 = vpop.f32.mrb[0].mxu0
        %v1770 = vadd.f32 %v1681, %v1769
        %1771 = vdwg.mxu0
        %v1772 = vmax.f32 %v1750, 0.0
        %v1773 = vmax.f32 %v1752, 0.0
        %v1774 = vmax.f32 %v1756, 0.0
        %v1775 = vmax.f32 %v1758, 0.0
        %v1776 = vmax.f32 %v1762, 0.0
        %v1777 = vmax.f32 %v1764, 0.0
        %v1778 = vmax.f32 %v1768, 0.0
        %v1779 = vmax.f32 %v1770, 0.0
        %1780 = vst [vmem:[#allocation2] sm:$0xff] %v1772
        %1781 = vst [vmem:[#allocation2 + $0x8] sm:$0xff] %v1773
        %1782 = vst [vmem:[#allocation2 + $0x10] sm:$0xff] %v1774
        %1783 = vst [vmem:[#allocation2 + $0x18] sm:$0xff] %v1775
        %1784 = vst [vmem:[#allocation2 + $0x20] sm:$0xff] %v1776
        %1785 = vst [vmem:[#allocation2 + $0x28] sm:$0xff] %v1777
        %1786 = vst [vmem:[#allocation2 + $0x30] sm:$0xff] %v1778
        %1787 = vst [vmem:[#allocation2 + $0x38] sm:$0xff] %v1779
        %v1788 = vld [vmem:[#allocation2] sm:$0xff]
        %v1789 = vld [vmem:[#allocation2 + $0x8] sm:$0xff]
        %v1790 = vld [vmem:[#allocation2 + $0x10] sm:$0xff]
        %v1791 = vld [vmem:[#allocation2 + $0x18] sm:$0xff]
        %v1792 = vld [vmem:[#allocation2 + $0x20] sm:$0xff]
        %v1793 = vld [vmem:[#allocation2 + $0x28] sm:$0xff]
        %v1794 = vld [vmem:[#allocation2 + $0x30] sm:$0xff]
        %v1795 = vld [vmem:[#allocation2 + $0x38] sm:$0xff]
        %1796 = vrot.lane.b32.xlu0 %v1788, 17
        %v1797 = vpop.permute.xlu0 %1796
        %1798 = vrot.lane.b32.xlu0 %v1790, 17
        %v1799 = vpop.permute.xlu0 %1798
        %1800 = vrot.lane.b32.xlu0 %v1792, 17
        %v1801 = vpop.permute.xlu0 %1800
        %1802 = vrot.lane.b32.xlu0 %v1794, 17
        %v1803 = vpop.permute.xlu0 %1802
        %1804 = vrot.lane.b32.xlu0 %v1789, 17
        %v1805 = vpop.permute.xlu0 %1804
        %1806 = vrot.lane.b32.xlu0 %v1791, 17
        %v1807 = vpop.permute.xlu0 %1806
        %1808 = vrot.lane.b32.xlu0 %v1793, 17
        %v1809 = vpop.permute.xlu0 %1808
        %1810 = vrot.lane.b32.xlu0 %v1795, 17
        %v1811 = vpop.permute.xlu0 %1810
        %v1812 = vsel %vm302, %v1797, %v1805
        %v1813 = vsel %vm302, %v1799, %v1807
        %v1814 = vsel %vm302, %v1801, %v1809
        %v1815 = vsel %vm302, %v1803, %v1811
        %v1816 = vsel %vm302, %v1805, %v1797
        %v1817 = vsel %vm302, %v1807, %v1799
        %v1818 = vsel %vm302, %v1809, %v1801
        %v1819 = vsel %vm302, %v1811, %v1803
        %v1820 = vld [vmem:[%s2] ss:$8 sm:$0x3]
        %v1822 = vlaneseq
        %v1823 = vshrl.u32 %v1822, 7
        %v1824 = vsub.s32 0, %v1823
        %v1825 = vrot.slane %v1820, %v1824
        %v1826 = vlaneseq
        %v1827 = vshrl.u32 %v1826, 7
        %v1828 = vsub.s32 1, %v1827
        %v1829 = vrot.slane %v1820, %v1828
        %v1832 = vmul.f32 %v1816, %v1825
        %v1833 = vmul.f32 %v1812, %v1829
        %v1834 = vmul.f32 %v1817, %v1825
        %v1835 = vmul.f32 %v1813, %v1829
        %v1836 = vmul.f32 %v1818, %v1825
        %v1837 = vmul.f32 %v1814, %v1829
        %v1838 = vmul.f32 %v1819, %v1825
        %v1839 = vmul.f32 %v1815, %v1829
        %1840 = vst [vmem:[#allocation3] sm:$0xff] %v1832
        %1841 = vst [vmem:[#allocation3 + $0x8] sm:$0xff] %v1833
        %1842 = vst [vmem:[#allocation3 + $0x10] sm:$0xff] %v1834
        %1843 = vst [vmem:[#allocation3 + $0x18] sm:$0xff] %v1835
        %1844 = vst [vmem:[#allocation3 + $0x20] sm:$0xff] %v1836
        %1845 = vst [vmem:[#allocation3 + $0x28] sm:$0xff] %v1837
        %1846 = vst [vmem:[#allocation3 + $0x30] sm:$0xff] %v1838
        %1847 = vst [vmem:[#allocation3 + $0x38] sm:$0xff] %v1839
        %1848 = vrot.lane.b32.xlu0 %v1788, 16
        %v1849 = vpop.permute.xlu0 %1848
        %1850 = vrot.lane.b32.xlu0 %v1790, 16
        %v1851 = vpop.permute.xlu0 %1850
        %1852 = vrot.lane.b32.xlu0 %v1792, 16
        %v1853 = vpop.permute.xlu0 %1852
        %1854 = vrot.lane.b32.xlu0 %v1794, 16
        %v1855 = vpop.permute.xlu0 %1854
        %1856 = vrot.lane.b32.xlu0 %v1789, 16
        %v1857 = vpop.permute.xlu0 %1856
        %1858 = vrot.lane.b32.xlu0 %v1791, 16
        %v1859 = vpop.permute.xlu0 %1858
        %1860 = vrot.lane.b32.xlu0 %v1793, 16
        %v1861 = vpop.permute.xlu0 %1860
        %1862 = vrot.lane.b32.xlu0 %v1795, 16
        %v1863 = vpop.permute.xlu0 %1862
        %v1864 = vsel %vm355, %v1849, %v1857
        %v1865 = vsel %vm355, %v1851, %v1859
        %v1866 = vsel %vm355, %v1853, %v1861
        %v1867 = vsel %vm355, %v1855, %v1863
        %v1868 = vsel %vm355, %v1857, %v1849
        %v1869 = vsel %vm355, %v1859, %v1851
        %v1870 = vsel %vm355, %v1861, %v1853
        %v1871 = vsel %vm355, %v1863, %v1855
        %v1872 = vld [vmem:[%s364] ss:$8 sm:$0x3]
        %v1874 = vlaneseq
        %v1875 = vshrl.u32 %v1874, 7
        %v1876 = vsub.s32 0, %v1875
        %v1877 = vrot.slane %v1872, %v1876
        %v1878 = vlaneseq
        %v1879 = vshrl.u32 %v1878, 7
        %v1880 = vsub.s32 1, %v1879
        %v1881 = vrot.slane %v1872, %v1880
        %v1884 = vmul.f32 %v1868, %v1877
        %v1885 = vmul.f32 %v1864, %v1881
        %v1886 = vmul.f32 %v1869, %v1877
        %v1887 = vmul.f32 %v1865, %v1881
        %v1888 = vmul.f32 %v1870, %v1877
        %v1889 = vmul.f32 %v1866, %v1881
        %v1890 = vmul.f32 %v1871, %v1877
        %v1891 = vmul.f32 %v1867, %v1881
        %1892 = vst [vmem:[#allocation3 + $0x40] sm:$0xff] %v1884
        %1893 = vst [vmem:[#allocation3 + $0x48] sm:$0xff] %v1885
        %1894 = vst [vmem:[#allocation3 + $0x50] sm:$0xff] %v1886
        %1895 = vst [vmem:[#allocation3 + $0x58] sm:$0xff] %v1887
        %1896 = vst [vmem:[#allocation3 + $0x60] sm:$0xff] %v1888
        %1897 = vst [vmem:[#allocation3 + $0x68] sm:$0xff] %v1889
        %1898 = vst [vmem:[#allocation3 + $0x70] sm:$0xff] %v1890
        %1899 = vst [vmem:[#allocation3 + $0x78] sm:$0xff] %v1891
        %1900 = vrot.lane.b32.xlu0 %v1788, 15
        %v1901 = vpop.permute.xlu0 %1900
        %1902 = vrot.lane.b32.xlu0 %v1790, 15
        %v1903 = vpop.permute.xlu0 %1902
        %1904 = vrot.lane.b32.xlu0 %v1792, 15
        %v1905 = vpop.permute.xlu0 %1904
        %1906 = vrot.lane.b32.xlu0 %v1794, 15
        %v1907 = vpop.permute.xlu0 %1906
        %1908 = vrot.lane.b32.xlu0 %v1789, 15
        %v1909 = vpop.permute.xlu0 %1908
        %1910 = vrot.lane.b32.xlu0 %v1791, 15
        %v1911 = vpop.permute.xlu0 %1910
        %1912 = vrot.lane.b32.xlu0 %v1793, 15
        %v1913 = vpop.permute.xlu0 %1912
        %1914 = vrot.lane.b32.xlu0 %v1795, 15
        %v1915 = vpop.permute.xlu0 %1914
        %v1916 = vsel %vm409, %v1901, %v1909
        %v1917 = vsel %vm409, %v1903, %v1911
        %v1918 = vsel %vm409, %v1905, %v1913
        %v1919 = vsel %vm409, %v1907, %v1915
        %v1920 = vsel %vm409, %v1909, %v1901
        %v1921 = vsel %vm409, %v1911, %v1903
        %v1922 = vsel %vm409, %v1913, %v1905
        %v1923 = vsel %vm409, %v1915, %v1907
        %v1924 = vld [vmem:[%s418] ss:$8 sm:$0x3]
        %v1926 = vlaneseq
        %v1927 = vshrl.u32 %v1926, 7
        %v1928 = vsub.s32 0, %v1927
        %v1929 = vrot.slane %v1924, %v1928
        %v1930 = vlaneseq
        %v1931 = vshrl.u32 %v1930, 7
        %v1932 = vsub.s32 1, %v1931
        %v1933 = vrot.slane %v1924, %v1932
        %v1936 = vmul.f32 %v1920, %v1929
        %v1937 = vmul.f32 %v1916, %v1933
        %v1938 = vmul.f32 %v1921, %v1929
        %v1939 = vmul.f32 %v1917, %v1933
        %v1940 = vmul.f32 %v1922, %v1929
        %v1941 = vmul.f32 %v1918, %v1933
        %v1942 = vmul.f32 %v1923, %v1929
        %v1943 = vmul.f32 %v1919, %v1933
        %1944 = vst [vmem:[#allocation3 + $0x80] sm:$0xff] %v1936
        %1945 = vst [vmem:[#allocation3 + $0x88] sm:$0xff] %v1937
        %1946 = vst [vmem:[#allocation3 + $0x90] sm:$0xff] %v1938
        %1947 = vst [vmem:[#allocation3 + $0x98] sm:$0xff] %v1939
        %1948 = vst [vmem:[#allocation3 + $0xa0] sm:$0xff] %v1940
        %1949 = vst [vmem:[#allocation3 + $0xa8] sm:$0xff] %v1941
        %1950 = vst [vmem:[#allocation3 + $0xb0] sm:$0xff] %v1942
        %1951 = vst [vmem:[#allocation3 + $0xb8] sm:$0xff] %v1943
        %1952 = vrot.lane.b32.xlu0 %v1788, 1
        %v1953 = vpop.permute.xlu0 %1952
        %1954 = vrot.lane.b32.xlu0 %v1790, 1
        %v1955 = vpop.permute.xlu0 %1954
        %1956 = vrot.lane.b32.xlu0 %v1792, 1
        %v1957 = vpop.permute.xlu0 %1956
        %1958 = vrot.lane.b32.xlu0 %v1794, 1
        %v1959 = vpop.permute.xlu0 %1958
        %1960 = vrot.lane.b32.xlu0 %v1789, 1
        %v1961 = vpop.permute.xlu0 %1960
        %1962 = vrot.lane.b32.xlu0 %v1791, 1
        %v1963 = vpop.permute.xlu0 %1962
        %1964 = vrot.lane.b32.xlu0 %v1793, 1
        %v1965 = vpop.permute.xlu0 %1964
        %1966 = vrot.lane.b32.xlu0 %v1795, 1
        %v1967 = vpop.permute.xlu0 %1966
        %v1968 = vsel %vm463, %v1953, %v1961
        %v1969 = vsel %vm463, %v1955, %v1963
        %v1970 = vsel %vm463, %v1957, %v1965
        %v1971 = vsel %vm463, %v1959, %v1967
        %v1972 = vsel %vm463, %v1961, %v1953
        %v1973 = vsel %vm463, %v1963, %v1955
        %v1974 = vsel %vm463, %v1965, %v1957
        %v1975 = vsel %vm463, %v1967, %v1959
        %v1976 = vld [vmem:[%s472] ss:$8 sm:$0x3]
        %v1978 = vlaneseq
        %v1979 = vshrl.u32 %v1978, 7
        %v1980 = vsub.s32 0, %v1979
        %v1981 = vrot.slane %v1976, %v1980
        %v1982 = vlaneseq
        %v1983 = vshrl.u32 %v1982, 7
        %v1984 = vsub.s32 1, %v1983
        %v1985 = vrot.slane %v1976, %v1984
        %v1988 = vmul.f32 %v1972, %v1981
        %v1989 = vmul.f32 %v1968, %v1985
        %v1990 = vmul.f32 %v1973, %v1981
        %v1991 = vmul.f32 %v1969, %v1985
        %v1992 = vmul.f32 %v1974, %v1981
        %v1993 = vmul.f32 %v1970, %v1985
        %v1994 = vmul.f32 %v1975, %v1981
        %v1995 = vmul.f32 %v1971, %v1985
        %1996 = vst [vmem:[#allocation3 + $0xc0] sm:$0xff] %v1988
        %1997 = vst [vmem:[#allocation3 + $0xc8] sm:$0xff] %v1989
        %1998 = vst [vmem:[#allocation3 + $0xd0] sm:$0xff] %v1990
        %1999 = vst [vmem:[#allocation3 + $0xd8] sm:$0xff] %v1991
        %2000 = vst [vmem:[#allocation3 + $0xe0] sm:$0xff] %v1992
        %2001 = vst [vmem:[#allocation3 + $0xe8] sm:$0xff] %v1993
        %2002 = vst [vmem:[#allocation3 + $0xf0] sm:$0xff] %v1994
        %2003 = vst [vmem:[#allocation3 + $0xf8] sm:$0xff] %v1995
        %2004 = vst [vmem:[#allocation3 + $0x100] sm:$0xff] %v1788
        %2005 = vst [vmem:[#allocation3 + $0x108] sm:$0xff] %v1789
        %2006 = vst [vmem:[#allocation3 + $0x110] sm:$0xff] %v1790
        %2007 = vst [vmem:[#allocation3 + $0x118] sm:$0xff] %v1791
        %2008 = vst [vmem:[#allocation3 + $0x120] sm:$0xff] %v1792
        %2009 = vst [vmem:[#allocation3 + $0x128] sm:$0xff] %v1793
        %2010 = vst [vmem:[#allocation3 + $0x130] sm:$0xff] %v1794
        %2011 = vst [vmem:[#allocation3 + $0x138] sm:$0xff] %v1795
        %2012 = vrot.lane.b32.xlu0 %v1788, 127
        %v2013 = vpop.permute.xlu0 %2012
        %2014 = vrot.lane.b32.xlu0 %v1790, 127
        %v2015 = vpop.permute.xlu0 %2014
        %2016 = vrot.lane.b32.xlu0 %v1792, 127
        %v2017 = vpop.permute.xlu0 %2016
        %2018 = vrot.lane.b32.xlu0 %v1794, 127
        %v2019 = vpop.permute.xlu0 %2018
        %2020 = vrot.lane.b32.xlu0 %v1789, 127
        %v2021 = vpop.permute.xlu0 %2020
        %2022 = vrot.lane.b32.xlu0 %v1791, 127
        %v2023 = vpop.permute.xlu0 %2022
        %2024 = vrot.lane.b32.xlu0 %v1793, 127
        %v2025 = vpop.permute.xlu0 %2024
        %2026 = vrot.lane.b32.xlu0 %v1795, 127
        %v2027 = vpop.permute.xlu0 %2026
        %v2028 = vsel %vm525, %v2013, %v2021
        %v2029 = vsel %vm525, %v2015, %v2023
        %v2030 = vsel %vm525, %v2017, %v2025
        %v2031 = vsel %vm525, %v2019, %v2027
        %v2032 = vsel %vm525, %v2021, %v2013
        %v2033 = vsel %vm525, %v2023, %v2015
        %v2034 = vsel %vm525, %v2025, %v2017
        %v2035 = vsel %vm525, %v2027, %v2019
        %v2036 = vld [vmem:[%s534] ss:$8 sm:$0x3]
        %v2038 = vlaneseq
        %v2039 = vshrl.u32 %v2038, 7
        %v2040 = vsub.s32 0, %v2039
        %v2041 = vrot.slane %v2036, %v2040
        %v2042 = vlaneseq
        %v2043 = vshrl.u32 %v2042, 7
        %v2044 = vsub.s32 1, %v2043
        %v2045 = vrot.slane %v2036, %v2044
        %v2048 = vmul.f32 %v2028, %v2041
        %v2049 = vmul.f32 %v2032, %v2045
        %v2050 = vmul.f32 %v2029, %v2041
        %v2051 = vmul.f32 %v2033, %v2045
        %v2052 = vmul.f32 %v2030, %v2041
        %v2053 = vmul.f32 %v2034, %v2045
        %v2054 = vmul.f32 %v2031, %v2041
        %v2055 = vmul.f32 %v2035, %v2045
        %2056 = vst [vmem:[#allocation3 + $0x140] sm:$0xff] %v2048
        %2057 = vst [vmem:[#allocation3 + $0x148] sm:$0xff] %v2049
        %2058 = vst [vmem:[#allocation3 + $0x150] sm:$0xff] %v2050
        %2059 = vst [vmem:[#allocation3 + $0x158] sm:$0xff] %v2051
        %2060 = vst [vmem:[#allocation3 + $0x160] sm:$0xff] %v2052
        %2061 = vst [vmem:[#allocation3 + $0x168] sm:$0xff] %v2053
        %2062 = vst [vmem:[#allocation3 + $0x170] sm:$0xff] %v2054
        %2063 = vst [vmem:[#allocation3 + $0x178] sm:$0xff] %v2055
        %2064 = vrot.lane.b32.xlu0 %v1788, 113
        %v2065 = vpop.permute.xlu0 %2064
        %2066 = vrot.lane.b32.xlu0 %v1790, 113
        %v2067 = vpop.permute.xlu0 %2066
        %2068 = vrot.lane.b32.xlu0 %v1792, 113
        %v2069 = vpop.permute.xlu0 %2068
        %2070 = vrot.lane.b32.xlu0 %v1794, 113
        %v2071 = vpop.permute.xlu0 %2070
        %2072 = vrot.lane.b32.xlu0 %v1789, 113
        %v2073 = vpop.permute.xlu0 %2072
        %2074 = vrot.lane.b32.xlu0 %v1791, 113
        %v2075 = vpop.permute.xlu0 %2074
        %2076 = vrot.lane.b32.xlu0 %v1793, 113
        %v2077 = vpop.permute.xlu0 %2076
        %2078 = vrot.lane.b32.xlu0 %v1795, 113
        %v2079 = vpop.permute.xlu0 %2078
        %v2080 = vsel %vm579, %v2065, %v2073
        %v2081 = vsel %vm579, %v2067, %v2075
        %v2082 = vsel %vm579, %v2069, %v2077
        %v2083 = vsel %vm579, %v2071, %v2079
        %v2084 = vsel %vm579, %v2073, %v2065
        %v2085 = vsel %vm579, %v2075, %v2067
        %v2086 = vsel %vm579, %v2077, %v2069
        %v2087 = vsel %vm579, %v2079, %v2071
        %v2088 = vld [vmem:[%s588] ss:$8 sm:$0x3]
        %v2090 = vlaneseq
        %v2091 = vshrl.u32 %v2090, 7
        %v2092 = vsub.s32 0, %v2091
        %v2093 = vrot.slane %v2088, %v2092
        %v2094 = vlaneseq
        %v2095 = vshrl.u32 %v2094, 7
        %v2096 = vsub.s32 1, %v2095
        %v2097 = vrot.slane %v2088, %v2096
        %v2100 = vmul.f32 %v2080, %v2093
        %v2101 = vmul.f32 %v2084, %v2097
        %v2102 = vmul.f32 %v2081, %v2093
        %v2103 = vmul.f32 %v2085, %v2097
        %v2104 = vmul.f32 %v2082, %v2093
        %v2105 = vmul.f32 %v2086, %v2097
        %v2106 = vmul.f32 %v2083, %v2093
        %v2107 = vmul.f32 %v2087, %v2097
        %2108 = vst [vmem:[#allocation3 + $0x180] sm:$0xff] %v2100
        %2109 = vst [vmem:[#allocation3 + $0x188] sm:$0xff] %v2101
        %2110 = vst [vmem:[#allocation3 + $0x190] sm:$0xff] %v2102
        %2111 = vst [vmem:[#allocation3 + $0x198] sm:$0xff] %v2103
        %2112 = vst [vmem:[#allocation3 + $0x1a0] sm:$0xff] %v2104
        %2113 = vst [vmem:[#allocation3 + $0x1a8] sm:$0xff] %v2105
        %2114 = vst [vmem:[#allocation3 + $0x1b0] sm:$0xff] %v2106
        %2115 = vst [vmem:[#allocation3 + $0x1b8] sm:$0xff] %v2107
        %2116 = vrot.lane.b32.xlu0 %v1788, 112
        %v2117 = vpop.permute.xlu0 %2116
        %2118 = vrot.lane.b32.xlu0 %v1790, 112
        %v2119 = vpop.permute.xlu0 %2118
        %2120 = vrot.lane.b32.xlu0 %v1792, 112
        %v2121 = vpop.permute.xlu0 %2120
        %2122 = vrot.lane.b32.xlu0 %v1794, 112
        %v2123 = vpop.permute.xlu0 %2122
        %2124 = vrot.lane.b32.xlu0 %v1789, 112
        %v2125 = vpop.permute.xlu0 %2124
        %2126 = vrot.lane.b32.xlu0 %v1791, 112
        %v2127 = vpop.permute.xlu0 %2126
        %2128 = vrot.lane.b32.xlu0 %v1793, 112
        %v2129 = vpop.permute.xlu0 %2128
        %2130 = vrot.lane.b32.xlu0 %v1795, 112
        %v2131 = vpop.permute.xlu0 %2130
        %v2132 = vsel %vm633, %v2117, %v2125
        %v2133 = vsel %vm633, %v2119, %v2127
        %v2134 = vsel %vm633, %v2121, %v2129
        %v2135 = vsel %vm633, %v2123, %v2131
        %v2136 = vsel %vm633, %v2125, %v2117
        %v2137 = vsel %vm633, %v2127, %v2119
        %v2138 = vsel %vm633, %v2129, %v2121
        %v2139 = vsel %vm633, %v2131, %v2123
        %v2140 = vld [vmem:[%s642] ss:$8 sm:$0x3]
        %v2142 = vlaneseq
        %v2143 = vshrl.u32 %v2142, 7
        %v2144 = vsub.s32 0, %v2143
        %v2145 = vrot.slane %v2140, %v2144
        %v2146 = vlaneseq
        %v2147 = vshrl.u32 %v2146, 7
        %v2148 = vsub.s32 1, %v2147
        %v2149 = vrot.slane %v2140, %v2148
        %v2152 = vmul.f32 %v2132, %v2145
        %v2153 = vmul.f32 %v2136, %v2149
        %v2154 = vmul.f32 %v2133, %v2145
        %v2155 = vmul.f32 %v2137, %v2149
        %v2156 = vmul.f32 %v2134, %v2145
        %v2157 = vmul.f32 %v2138, %v2149
        %v2158 = vmul.f32 %v2135, %v2145
        %v2159 = vmul.f32 %v2139, %v2149
        %2160 = vst [vmem:[#allocation3 + $0x1c0] sm:$0xff] %v2152
        %2161 = vst [vmem:[#allocation3 + $0x1c8] sm:$0xff] %v2153
        %2162 = vst [vmem:[#allocation3 + $0x1d0] sm:$0xff] %v2154
        %2163 = vst [vmem:[#allocation3 + $0x1d8] sm:$0xff] %v2155
        %2164 = vst [vmem:[#allocation3 + $0x1e0] sm:$0xff] %v2156
        %2165 = vst [vmem:[#allocation3 + $0x1e8] sm:$0xff] %v2157
        %2166 = vst [vmem:[#allocation3 + $0x1f0] sm:$0xff] %v2158
        %2167 = vst [vmem:[#allocation3 + $0x1f8] sm:$0xff] %v2159
        %2168 = vrot.lane.b32.xlu0 %v1788, 111
        %v2169 = vpop.permute.xlu0 %2168
        %2170 = vrot.lane.b32.xlu0 %v1790, 111
        %v2171 = vpop.permute.xlu0 %2170
        %2172 = vrot.lane.b32.xlu0 %v1792, 111
        %v2173 = vpop.permute.xlu0 %2172
        %2174 = vrot.lane.b32.xlu0 %v1794, 111
        %v2175 = vpop.permute.xlu0 %2174
        %2176 = vrot.lane.b32.xlu0 %v1789, 111
        %v2177 = vpop.permute.xlu0 %2176
        %2178 = vrot.lane.b32.xlu0 %v1791, 111
        %v2179 = vpop.permute.xlu0 %2178
        %2180 = vrot.lane.b32.xlu0 %v1793, 111
        %v2181 = vpop.permute.xlu0 %2180
        %2182 = vrot.lane.b32.xlu0 %v1795, 111
        %v2183 = vpop.permute.xlu0 %2182
        %v2184 = vsel %vm687, %v2169, %v2177
        %v2185 = vsel %vm687, %v2171, %v2179
        %v2186 = vsel %vm687, %v2173, %v2181
        %v2187 = vsel %vm687, %v2175, %v2183
        %v2188 = vsel %vm687, %v2177, %v2169
        %v2189 = vsel %vm687, %v2179, %v2171
        %v2190 = vsel %vm687, %v2181, %v2173
        %v2191 = vsel %vm687, %v2183, %v2175
        %v2192 = vld [vmem:[%s696] ss:$8 sm:$0x3]
        %v2194 = vlaneseq
        %v2195 = vshrl.u32 %v2194, 7
        %v2196 = vsub.s32 0, %v2195
        %v2197 = vrot.slane %v2192, %v2196
        %v2198 = vlaneseq
        %v2199 = vshrl.u32 %v2198, 7
        %v2200 = vsub.s32 1, %v2199
        %v2201 = vrot.slane %v2192, %v2200
        %v2204 = vmul.f32 %v2184, %v2197
        %v2205 = vmul.f32 %v2188, %v2201
        %v2206 = vmul.f32 %v2185, %v2197
        %v2207 = vmul.f32 %v2189, %v2201
        %v2208 = vmul.f32 %v2186, %v2197
        %v2209 = vmul.f32 %v2190, %v2201
        %v2210 = vmul.f32 %v2187, %v2197
        %v2211 = vmul.f32 %v2191, %v2201
        %2212 = vst [vmem:[#allocation3 + $0x200] sm:$0xff] %v2204
        %2213 = vst [vmem:[#allocation3 + $0x208] sm:$0xff] %v2205
        %2214 = vst [vmem:[#allocation3 + $0x210] sm:$0xff] %v2206
        %2215 = vst [vmem:[#allocation3 + $0x218] sm:$0xff] %v2207
        %2216 = vst [vmem:[#allocation3 + $0x220] sm:$0xff] %v2208
        %2217 = vst [vmem:[#allocation3 + $0x228] sm:$0xff] %v2209
        %2218 = vst [vmem:[#allocation3 + $0x230] sm:$0xff] %v2210
        %2219 = vst [vmem:[#allocation3 + $0x238] sm:$0xff] %v2211
        %s2220 = scalar_lea.vmem [#allocation4], 192
        %v2221 = vld [vmem:[%s2220] sm:$0xff]
        %v2222 = vld [vmem:[%s2220 + $0x8] sm:$0xff]
        %v2223 = vld [vmem:[%s2220 + $0x10] sm:$0xff]
        %v2224 = vld [vmem:[%s2220 + $0x18] sm:$0xff]
        %v2225 = vld [vmem:[%s2220 + $0x20] sm:$0xff]
        %v2226 = vld [vmem:[%s2220 + $0x28] sm:$0xff]
        %v2227 = vld [vmem:[%s2220 + $0x30] sm:$0xff]
        %v2228 = vld [vmem:[%s2220 + $0x38] sm:$0xff]
        %v2229 = vld [vmem:[%s2220 + $0x40] sm:$0xff]
        %v2230 = vld [vmem:[%s2220 + $0x48] sm:$0xff]
        %v2231 = vld [vmem:[%s2220 + $0x50] sm:$0xff]
        %v2232 = vld [vmem:[%s2220 + $0x58] sm:$0xff]
        %v2233 = vld [vmem:[#allocation3] sm:$0xff]
        %v2234 = vld [vmem:[#allocation3 + $0x8] sm:$0xff]
        %v2235 = vld [vmem:[#allocation3 + $0x10] sm:$0xff]
        %v2236 = vld [vmem:[#allocation3 + $0x18] sm:$0xff]
        %v2237 = vld [vmem:[#allocation3 + $0x20] sm:$0xff]
        %v2238 = vld [vmem:[#allocation3 + $0x28] sm:$0xff]
        %v2239 = vld [vmem:[#allocation3 + $0x30] sm:$0xff]
        %v2240 = vld [vmem:[#allocation3 + $0x38] sm:$0xff]
        %v2241 = vld [vmem:[#allocation3 + $0x40] sm:$0xff]
        %v2242 = vld [vmem:[#allocation3 + $0x48] sm:$0xff]
        %v2243 = vld [vmem:[#allocation3 + $0x50] sm:$0xff]
        %v2244 = vld [vmem:[#allocation3 + $0x58] sm:$0xff]
        %v2245 = vld [vmem:[#allocation3 + $0x60] sm:$0xff]
        %v2246 = vld [vmem:[#allocation3 + $0x68] sm:$0xff]
        %v2247 = vld [vmem:[#allocation3 + $0x70] sm:$0xff]
        %v2248 = vld [vmem:[#allocation3 + $0x78] sm:$0xff]
        %v2249 = vld [vmem:[#allocation3 + $0x80] sm:$0xff]
        %v2250 = vld [vmem:[#allocation3 + $0x88] sm:$0xff]
        %v2251 = vld [vmem:[#allocation3 + $0x90] sm:$0xff]
        %v2252 = vld [vmem:[#allocation3 + $0x98] sm:$0xff]
        %v2253 = vld [vmem:[#allocation3 + $0xa0] sm:$0xff]
        %v2254 = vld [vmem:[#allocation3 + $0xa8] sm:$0xff]
        %v2255 = vld [vmem:[#allocation3 + $0xb0] sm:$0xff]
        %v2256 = vld [vmem:[#allocation3 + $0xb8] sm:$0xff]
        %v2257 = vld [vmem:[#allocation3 + $0xc0] sm:$0xff]
        %v2258 = vld [vmem:[#allocation3 + $0xc8] sm:$0xff]
        %v2259 = vld [vmem:[#allocation3 + $0xd0] sm:$0xff]
        %v2260 = vld [vmem:[#allocation3 + $0xd8] sm:$0xff]
        %v2261 = vld [vmem:[#allocation3 + $0xe0] sm:$0xff]
        %v2262 = vld [vmem:[#allocation3 + $0xe8] sm:$0xff]
        %v2263 = vld [vmem:[#allocation3 + $0xf0] sm:$0xff]
        %v2264 = vld [vmem:[#allocation3 + $0xf8] sm:$0xff]
        %v2265 = vld [vmem:[#allocation3 + $0x100] sm:$0xff]
        %v2266 = vld [vmem:[#allocation3 + $0x108] sm:$0xff]
        %v2267 = vld [vmem:[#allocation3 + $0x110] sm:$0xff]
        %v2268 = vld [vmem:[#allocation3 + $0x118] sm:$0xff]
        %v2269 = vld [vmem:[#allocation3 + $0x120] sm:$0xff]
        %v2270 = vld [vmem:[#allocation3 + $0x128] sm:$0xff]
        %v2271 = vld [vmem:[#allocation3 + $0x130] sm:$0xff]
        %v2272 = vld [vmem:[#allocation3 + $0x138] sm:$0xff]
        %v2273 = vld [vmem:[#allocation3 + $0x140] sm:$0xff]
        %v2274 = vld [vmem:[#allocation3 + $0x148] sm:$0xff]
        %v2275 = vld [vmem:[#allocation3 + $0x150] sm:$0xff]
        %v2276 = vld [vmem:[#allocation3 + $0x158] sm:$0xff]
        %v2277 = vld [vmem:[#allocation3 + $0x160] sm:$0xff]
        %v2278 = vld [vmem:[#allocation3 + $0x168] sm:$0xff]
        %v2279 = vld [vmem:[#allocation3 + $0x170] sm:$0xff]
        %v2280 = vld [vmem:[#allocation3 + $0x178] sm:$0xff]
        %v2281 = vld [vmem:[#allocation3 + $0x180] sm:$0xff]
        %v2282 = vld [vmem:[#allocation3 + $0x188] sm:$0xff]
        %v2283 = vld [vmem:[#allocation3 + $0x190] sm:$0xff]
        %v2284 = vld [vmem:[#allocation3 + $0x198] sm:$0xff]
        %v2285 = vld [vmem:[#allocation3 + $0x1a0] sm:$0xff]
        %v2286 = vld [vmem:[#allocation3 + $0x1a8] sm:$0xff]
        %v2287 = vld [vmem:[#allocation3 + $0x1b0] sm:$0xff]
        %v2288 = vld [vmem:[#allocation3 + $0x1b8] sm:$0xff]
        %v2289 = vld [vmem:[#allocation3 + $0x1c0] sm:$0xff]
        %v2290 = vld [vmem:[#allocation3 + $0x1c8] sm:$0xff]
        %v2291 = vld [vmem:[#allocation3 + $0x1d0] sm:$0xff]
        %v2292 = vld [vmem:[#allocation3 + $0x1d8] sm:$0xff]
        %v2293 = vld [vmem:[#allocation3 + $0x1e0] sm:$0xff]
        %v2294 = vld [vmem:[#allocation3 + $0x1e8] sm:$0xff]
        %v2295 = vld [vmem:[#allocation3 + $0x1f0] sm:$0xff]
        %v2296 = vld [vmem:[#allocation3 + $0x1f8] sm:$0xff]
        %v2297 = vld [vmem:[#allocation3 + $0x200] sm:$0xff]
        %v2298 = vld [vmem:[#allocation3 + $0x208] sm:$0xff]
        %v2299 = vld [vmem:[#allocation3 + $0x210] sm:$0xff]
        %v2300 = vld [vmem:[#allocation3 + $0x218] sm:$0xff]
        %v2301 = vld [vmem:[#allocation3 + $0x220] sm:$0xff]
        %v2302 = vld [vmem:[#allocation3 + $0x228] sm:$0xff]
        %v2303 = vld [vmem:[#allocation3 + $0x230] sm:$0xff]
        %v2304 = vld [vmem:[#allocation3 + $0x238] sm:$0xff]
        %s2305 = scalar_lea.vmem %s4, 64
        %v2306 = vld [vmem:[%s2305] sm:$0xff]
        %v2307 = vld [vmem:[%s2305 + $0x8] sm:$0xff]
        %v2308 = vld [vmem:[%s2305 + $0x10] sm:$0xff]
        %v2309 = vld [vmem:[%s2305 + $0x18] sm:$0xff]
        %2311 = vset.pattern.permute.xlu0 0
        %2312 = vperm.xlu0 %2311, %v2306
        %v2313 = vpop.permute.xlu0 %2312
        %2316 = vset.pattern.permute.xlu0 0
        %2317 = vperm.xlu0 %2316, %v2307
        %v2318 = vpop.permute.xlu0 %2317
        %2321 = vset.pattern.permute.xlu0 0
        %2322 = vperm.xlu0 %2321, %v2308
        %v2323 = vpop.permute.xlu0 %2322
        %2326 = vset.pattern.permute.xlu0 0
        %2327 = vperm.xlu0 %2326, %v2309
        %v2328 = vpop.permute.xlu0 %2327
        %v2331 = vsel %vm833, %v2223, 0
        %v2334 = vsel %vm833, %v2226, 0
        %v2337 = vsel %vm833, %v2229, 0
        %v2340 = vsel %vm833, %v2232, 0
        %2342 = vmatprep.subr.mxu0 %v2234
        %2343 = vmatpush1.msra.mxu0 %v2233
        %2344 = vmatprep.subr.mxu0 %v2236
        %2345 = vmatpush1.msra.mxu0 %v2235
        %2346 = vmatprep.subr.mxu0 %v2238
        %2347 = vmatpush1.msra.mxu0 %v2237
        %2348 = vmatprep.subr.mxu0 %v2240
        %2349 = vmatpush1.msra.mxu0 %v2239
        %2350 = vmatprep.subr.mxu0 %v2242
        %2351 = vmatpush1.msra.mxu0 %v2241
        %2352 = vmatprep.subr.mxu0 %v2244
        %2353 = vmatpush1.msra.mxu0 %v2243
        %2354 = vmatprep.subr.mxu0 %v2246
        %2355 = vmatpush1.msra.mxu0 %v2245
        %2356 = vmatprep.subr.mxu0 %v2248
        %2357 = vmatpush1.msra.mxu0 %v2247
        %2358 = vmatprep.subr.mxu0 %v2250
        %2359 = vmatpush1.msra.mxu0 %v2249
        %2360 = vmatprep.subr.mxu0 %v2252
        %2361 = vmatpush1.msra.mxu0 %v2251
        %2362 = vmatprep.subr.mxu0 %v2254
        %2363 = vmatpush1.msra.mxu0 %v2253
        %2364 = vmatprep.subr.mxu0 %v2256
        %2365 = vmatpush1.msra.mxu0 %v2255
        %2366 = vmatprep.subr.mxu0 %v2258
        %2367 = vmatpush1.msra.mxu0 %v2257
        %2368 = vmatprep.subr.mxu0 %v2260
        %2369 = vmatpush1.msra.mxu0 %v2259
        %2370 = vmatprep.subr.mxu0 %v2262
        %2371 = vmatpush1.msra.mxu0 %v2261
        %2372 = vmatprep.subr.mxu0 %v2264
        %2373 = vmatpush1.msra.mxu0 %v2263
        %2374 = vmatprep.subr.mxu0 %v2266
        %2375 = vmatpush1.msra.mxu0 %v2265
        %2376 = vmatprep.subr.mxu0 %v2268
        %2377 = vmatpush1.msra.mxu0 %v2267
        %2378 = vmatprep.subr.mxu0 %v2270
        %2379 = vmatpush1.msra.mxu0 %v2269
        %2380 = vmatprep.subr.mxu0 %v2272
        %2381 = vmatpush1.msra.mxu0 %v2271
        %2382 = vmatprep.subr.mxu0 %v2274
        %2383 = vmatpush1.msra.mxu0 %v2273
        %2384 = vmatprep.subr.mxu0 %v2276
        %2385 = vmatpush1.msra.mxu0 %v2275
        %2386 = vmatprep.subr.mxu0 %v2278
        %2387 = vmatpush1.msra.mxu0 %v2277
        %2388 = vmatprep.subr.mxu0 %v2280
        %2389 = vmatpush1.msra.mxu0 %v2279
        %2390 = vmatprep.subr.mxu0 %v2282
        %2391 = vmatpush1.msra.mxu0 %v2281
        %2392 = vmatprep.subr.mxu0 %v2284
        %2393 = vmatpush1.msra.mxu0 %v2283
        %2394 = vmatprep.subr.mxu0 %v2286
        %2395 = vmatpush1.msra.mxu0 %v2285
        %2396 = vmatprep.subr.mxu0 %v2288
        %2397 = vmatpush1.msra.mxu0 %v2287
        %2398 = vmatprep.subr.mxu0 %v2290
        %2399 = vmatpush1.msra.mxu0 %v2289
        %2400 = vmatprep.subr.mxu0 %v2292
        %2401 = vmatpush1.msra.mxu0 %v2291
        %2402 = vmatprep.subr.mxu0 %v2294
        %2403 = vmatpush1.msra.mxu0 %v2293
        %2404 = vmatprep.subr.mxu0 %v2296
        %2405 = vmatpush1.msra.mxu0 %v2295
        %2406 = vmatprep.mubr.f32.mxu0 %v2222
        %2407 = vmatmul.mubr.f32.gmra.mrb[0].mxu0 %v2221
        %v2408 = vpop.f32.mrb[0].mxu0
        %v2409 = vadd.f32 %v2313, %v2408
        %v2410 = vpop.f32.mrb[0].mxu0
        %v2411 = vadd.f32 %v2313, %v2410
        %2412 = vmatprep.mubr.f32.mxu0 %v2225
        %2413 = vmatmul.mubr.f32.gmra.mrb[0].mxu0 %v2224
        %v2414 = vpop.f32.mrb[0].mxu0
        %v2415 = vadd.f32 %v2318, %v2414
        %v2416 = vpop.f32.mrb[0].mxu0
        %v2417 = vadd.f32 %v2318, %v2416
        %2418 = vmatprep.mubr.f32.mxu0 %v2228
        %2419 = vmatmul.mubr.f32.gmra.mrb[0].mxu0 %v2227
        %v2420 = vpop.f32.mrb[0].mxu0
        %v2421 = vadd.f32 %v2323, %v2420
        %v2422 = vpop.f32.mrb[0].mxu0
        %v2423 = vadd.f32 %v2323, %v2422
        %2424 = vmatprep.mubr.f32.mxu0 %v2231
        %2425 = vmatmul.mubr.f32.gmra.mrb[0].mxu0 %v2230
        %v2426 = vpop.f32.mrb[0].mxu0
        %v2427 = vadd.f32 %v2328, %v2426
        %v2428 = vpop.f32.mrb[0].mxu0
        %v2429 = vadd.f32 %v2328, %v2428
        %2430 = vdwg.mxu0
        %2431 = vmatprep.subr.mxu0 %v2298
        %2432 = vmatpush1.msra.mxu0 %v2297
        %2433 = vmatprep.subr.mxu0 %v2300
        %2434 = vmatpush1.msra.mxu0 %v2299
        %2435 = vmatprep.subr.mxu0 %v2302
        %2436 = vmatpush1.msra.mxu0 %v2301
        %2437 = vmatprep.subr.mxu0 %v2304
        %2438 = vmatpush1.msra.mxu0 %v2303
        %2439 = vmatprep.subr.mxu0 0.0
        %2440 = vmatpush1.msra.mxu0 0.0
        %2441 = vmatprep.subr.mxu0 0.0
        %2442 = vmatpush1.msra.mxu0 0.0
        %2443 = vmatprep.subr.mxu0 0.0
        %2444 = vmatpush1.msra.mxu0 0.0
        %2445 = vmatprep.subr.mxu0 0.0
        %2446 = vmatpush1.msra.mxu0 0.0
        %2447 = vmatprep.subr.mxu0 0.0
        %2448 = vmatpush1.msra.mxu0 0.0
        %2449 = vmatprep.subr.mxu0 0.0
        %2450 = vmatpush1.msra.mxu0 0.0
        %2451 = vmatprep.subr.mxu0 0.0
        %2452 = vmatpush1.msra.mxu0 0.0
        %2453 = vmatprep.subr.mxu0 0.0
        %2454 = vmatpush1.msra.mxu0 0.0
        %2455 = vmatprep.subr.mxu0 0.0
        %2456 = vmatpush1.msra.mxu0 0.0
        %2457 = vmatprep.subr.mxu0 0.0
        %2458 = vmatpush1.msra.mxu0 0.0
        %2459 = vmatprep.subr.mxu0 0.0
        %2460 = vmatpush1.msra.mxu0 0.0
        %2461 = vmatprep.subr.mxu0 0.0
        %2462 = vmatpush1.msra.mxu0 0.0
        %2463 = vmatprep.subr.mxu0 0.0
        %2464 = vmatpush1.msra.mxu0 0.0
        %2465 = vmatprep.subr.mxu0 0.0
        %2466 = vmatpush1.msra.mxu0 0.0
        %2467 = vmatprep.subr.mxu0 0.0
        %2468 = vmatpush1.msra.mxu0 0.0
        %2469 = vmatprep.subr.mxu0 0.0
        %2470 = vmatpush1.msra.mxu0 0.0
        %2471 = vmatprep.subr.mxu0 0.0
        %2472 = vmatpush1.msra.mxu0 0.0
        %2473 = vmatprep.subr.mxu0 0.0
        %2474 = vmatpush1.msra.mxu0 0.0
        %2475 = vmatprep.subr.mxu0 0.0
        %2476 = vmatpush1.msra.mxu0 0.0
        %2477 = vmatprep.subr.mxu0 0.0
        %2478 = vmatpush1.msra.mxu0 0.0
        %2479 = vmatprep.subr.mxu0 0.0
        %2480 = vmatpush1.msra.mxu0 0.0
        %2481 = vmatprep.subr.mxu0 0.0
        %2482 = vmatpush1.msra.mxu0 0.0
        %2483 = vmatprep.subr.mxu0 0.0
        %2484 = vmatpush1.msra.mxu0 0.0
        %2485 = vmatprep.subr.mxu0 0.0
        %2486 = vmatpush1.msra.mxu0 0.0
        %2487 = vmatprep.subr.mxu0 0.0
        %2488 = vmatpush1.msra.mxu0 0.0
        %2489 = vmatprep.subr.mxu0 0.0
        %2490 = vmatpush1.msra.mxu0 0.0
        %2491 = vmatprep.subr.mxu0 0.0
        %2492 = vmatpush1.msra.mxu0 0.0
        %2493 = vmatprep.subr.mxu0 0.0
        %2494 = vmatpush1.msra.mxu0 0.0
        %2495 = vmatprep.mubr.f32.mxu0 0.0
        %2496 = vmatmul.mubr.f32.gmra.mrb[0].mxu0 %v2331
        %v2497 = vpop.f32.mrb[0].mxu0
        %v2498 = vadd.f32 %v2409, %v2497
        %v2499 = vpop.f32.mrb[0].mxu0
        %v2500 = vadd.f32 %v2411, %v2499
        %2501 = vmatprep.mubr.f32.mxu0 0.0
        %2502 = vmatmul.mubr.f32.gmra.mrb[0].mxu0 %v2334
        %v2503 = vpop.f32.mrb[0].mxu0
        %v2504 = vadd.f32 %v2415, %v2503
        %v2505 = vpop.f32.mrb[0].mxu0
        %v2506 = vadd.f32 %v2417, %v2505
        %2507 = vmatprep.mubr.f32.mxu0 0.0
        %2508 = vmatmul.mubr.f32.gmra.mrb[0].mxu0 %v2337
        %v2509 = vpop.f32.mrb[0].mxu0
        %v2510 = vadd.f32 %v2421, %v2509
        %v2511 = vpop.f32.mrb[0].mxu0
        %v2512 = vadd.f32 %v2423, %v2511
        %2513 = vmatprep.mubr.f32.mxu0 0.0
        %2514 = vmatmul.mubr.f32.gmra.mrb[0].mxu0 %v2340
        %v2515 = vpop.f32.mrb[0].mxu0
        %v2516 = vadd.f32 %v2427, %v2515
        %v2517 = vpop.f32.mrb[0].mxu0
        %v2518 = vadd.f32 %v2429, %v2517
        %2519 = vdwg.mxu0
        %v2520 = vmax.f32 %v2498, 0.0
        %v2521 = vmax.f32 %v2500, 0.0
        %v2522 = vmax.f32 %v2504, 0.0
        %v2523 = vmax.f32 %v2506, 0.0
        %v2524 = vmax.f32 %v2510, 0.0
        %v2525 = vmax.f32 %v2512, 0.0
        %v2526 = vmax.f32 %v2516, 0.0
        %v2527 = vmax.f32 %v2518, 0.0
        %2528 = vst [vmem:[#allocation2] sm:$0xff] %v2520
        %2529 = vst [vmem:[#allocation2 + $0x8] sm:$0xff] %v2521
        %2530 = vst [vmem:[#allocation2 + $0x10] sm:$0xff] %v2522
        %2531 = vst [vmem:[#allocation2 + $0x18] sm:$0xff] %v2523
        %2532 = vst [vmem:[#allocation2 + $0x20] sm:$0xff] %v2524
        %2533 = vst [vmem:[#allocation2 + $0x28] sm:$0xff] %v2525
        %2534 = vst [vmem:[#allocation2 + $0x30] sm:$0xff] %v2526
        %2535 = vst [vmem:[#allocation2 + $0x38] sm:$0xff] %v2527
        %v2536 = vld [vmem:[#allocation2] sm:$0xff]
        %v2537 = vld [vmem:[#allocation2 + $0x8] sm:$0xff]
        %v2538 = vld [vmem:[#allocation2 + $0x10] sm:$0xff]
        %v2539 = vld [vmem:[#allocation2 + $0x18] sm:$0xff]
        %v2540 = vld [vmem:[#allocation2 + $0x20] sm:$0xff]
        %v2541 = vld [vmem:[#allocation2 + $0x28] sm:$0xff]
        %v2542 = vld [vmem:[#allocation2 + $0x30] sm:$0xff]
        %v2543 = vld [vmem:[#allocation2 + $0x38] sm:$0xff]
        %2544 = vrot.lane.b32.xlu0 %v2536, 17
        %v2545 = vpop.permute.xlu0 %2544
        %2546 = vrot.lane.b32.xlu0 %v2538, 17
        %v2547 = vpop.permute.xlu0 %2546
        %2548 = vrot.lane.b32.xlu0 %v2540, 17
        %v2549 = vpop.permute.xlu0 %2548
        %2550 = vrot.lane.b32.xlu0 %v2542, 17
        %v2551 = vpop.permute.xlu0 %2550
        %2552 = vrot.lane.b32.xlu0 %v2537, 17
        %v2553 = vpop.permute.xlu0 %2552
        %2554 = vrot.lane.b32.xlu0 %v2539, 17
        %v2555 = vpop.permute.xlu0 %2554
        %2556 = vrot.lane.b32.xlu0 %v2541, 17
        %v2557 = vpop.permute.xlu0 %2556
        %2558 = vrot.lane.b32.xlu0 %v2543, 17
        %v2559 = vpop.permute.xlu0 %2558
        %v2560 = vsel %vm302, %v2545, %v2553
        %v2561 = vsel %vm302, %v2547, %v2555
        %v2562 = vsel %vm302, %v2549, %v2557
        %v2563 = vsel %vm302, %v2551, %v2559
        %v2564 = vsel %vm302, %v2553, %v2545
        %v2565 = vsel %vm302, %v2555, %v2547
        %v2566 = vsel %vm302, %v2557, %v2549
        %v2567 = vsel %vm302, %v2559, %v2551
        %v2568 = vld [vmem:[%s2] ss:$8 sm:$0x3]
        %v2570 = vlaneseq
        %v2571 = vshrl.u32 %v2570, 7
        %v2572 = vsub.s32 0, %v2571
        %v2573 = vrot.slane %v2568, %v2572
        %v2574 = vlaneseq
        %v2575 = vshrl.u32 %v2574, 7
        %v2576 = vsub.s32 1, %v2575
        %v2577 = vrot.slane %v2568, %v2576
        %v2580 = vmul.f32 %v2564, %v2573
        %v2581 = vmul.f32 %v2560, %v2577
        %v2582 = vmul.f32 %v2565, %v2573
        %v2583 = vmul.f32 %v2561, %v2577
        %v2584 = vmul.f32 %v2566, %v2573
        %v2585 = vmul.f32 %v2562, %v2577
        %v2586 = vmul.f32 %v2567, %v2573
        %v2587 = vmul.f32 %v2563, %v2577
        %2588 = vst [vmem:[#allocation3] sm:$0xff] %v2580
        %2589 = vst [vmem:[#allocation3 + $0x8] sm:$0xff] %v2581
        %2590 = vst [vmem:[#allocation3 + $0x10] sm:$0xff] %v2582
        %2591 = vst [vmem:[#allocation3 + $0x18] sm:$0xff] %v2583
        %2592 = vst [vmem:[#allocation3 + $0x20] sm:$0xff] %v2584
        %2593 = vst [vmem:[#allocation3 + $0x28] sm:$0xff] %v2585
        %2594 = vst [vmem:[#allocation3 + $0x30] sm:$0xff] %v2586
        %2595 = vst [vmem:[#allocation3 + $0x38] sm:$0xff] %v2587
        %2596 = vrot.lane.b32.xlu0 %v2536, 16
        %v2597 = vpop.permute.xlu0 %2596
        %2598 = vrot.lane.b32.xlu0 %v2538, 16
        %v2599 = vpop.permute.xlu0 %2598
        %2600 = vrot.lane.b32.xlu0 %v2540, 16
        %v2601 = vpop.permute.xlu0 %2600
        %2602 = vrot.lane.b32.xlu0 %v2542, 16
        %v2603 = vpop.permute.xlu0 %2602
        %2604 = vrot.lane.b32.xlu0 %v2537, 16
        %v2605 = vpop.permute.xlu0 %2604
        %2606 = vrot.lane.b32.xlu0 %v2539, 16
        %v2607 = vpop.permute.xlu0 %2606
        %2608 = vrot.lane.b32.xlu0 %v2541, 16
        %v2609 = vpop.permute.xlu0 %2608
        %2610 = vrot.lane.b32.xlu0 %v2543, 16
        %v2611 = vpop.permute.xlu0 %2610
        %v2612 = vsel %vm355, %v2597, %v2605
        %v2613 = vsel %vm355, %v2599, %v2607
        %v2614 = vsel %vm355, %v2601, %v2609
        %v2615 = vsel %vm355, %v2603, %v2611
        %v2616 = vsel %vm355, %v2605, %v2597
        %v2617 = vsel %vm355, %v2607, %v2599
        %v2618 = vsel %vm355, %v2609, %v2601
        %v2619 = vsel %vm355, %v2611, %v2603
        %v2620 = vld [vmem:[%s364] ss:$8 sm:$0x3]
        %v2622 = vlaneseq
        %v2623 = vshrl.u32 %v2622, 7
        %v2624 = vsub.s32 0, %v2623
        %v2625 = vrot.slane %v2620, %v2624
        %v2626 = vlaneseq
        %v2627 = vshrl.u32 %v2626, 7
        %v2628 = vsub.s32 1, %v2627
        %v2629 = vrot.slane %v2620, %v2628
        %v2632 = vmul.f32 %v2616, %v2625
        %v2633 = vmul.f32 %v2612, %v2629
        %v2634 = vmul.f32 %v2617, %v2625
        %v2635 = vmul.f32 %v2613, %v2629
        %v2636 = vmul.f32 %v2618, %v2625
        %v2637 = vmul.f32 %v2614, %v2629
        %v2638 = vmul.f32 %v2619, %v2625
        %v2639 = vmul.f32 %v2615, %v2629
        %2640 = vst [vmem:[#allocation3 + $0x40] sm:$0xff] %v2632
        %2641 = vst [vmem:[#allocation3 + $0x48] sm:$0xff] %v2633
        %2642 = vst [vmem:[#allocation3 + $0x50] sm:$0xff] %v2634
        %2643 = vst [vmem:[#allocation3 + $0x58] sm:$0xff] %v2635
        %2644 = vst [vmem:[#allocation3 + $0x60] sm:$0xff] %v2636
        %2645 = vst [vmem:[#allocation3 + $0x68] sm:$0xff] %v2637
        %2646 = vst [vmem:[#allocation3 + $0x70] sm:$0xff] %v2638
        %2647 = vst [vmem:[#allocation3 + $0x78] sm:$0xff] %v2639
        %2648 = vrot.lane.b32.xlu0 %v2536, 15
        %v2649 = vpop.permute.xlu0 %2648
        %2650 = vrot.lane.b32.xlu0 %v2538, 15
        %v2651 = vpop.permute.xlu0 %2650
        %2652 = vrot.lane.b32.xlu0 %v2540, 15
        %v2653 = vpop.permute.xlu0 %2652
        %2654 = vrot.lane.b32.xlu0 %v2542, 15
        %v2655 = vpop.permute.xlu0 %2654
        %2656 = vrot.lane.b32.xlu0 %v2537, 15
        %v2657 = vpop.permute.xlu0 %2656
        %2658 = vrot.lane.b32.xlu0 %v2539, 15
        %v2659 = vpop.permute.xlu0 %2658
        %2660 = vrot.lane.b32.xlu0 %v2541, 15
        %v2661 = vpop.permute.xlu0 %2660
        %2662 = vrot.lane.b32.xlu0 %v2543, 15
        %v2663 = vpop.permute.xlu0 %2662
        %v2664 = vsel %vm409, %v2649, %v2657
        %v2665 = vsel %vm409, %v2651, %v2659
        %v2666 = vsel %vm409, %v2653, %v2661
        %v2667 = vsel %vm409, %v2655, %v2663
        %v2668 = vsel %vm409, %v2657, %v2649
        %v2669 = vsel %vm409, %v2659, %v2651
        %v2670 = vsel %vm409, %v2661, %v2653
        %v2671 = vsel %vm409, %v2663, %v2655
        %v2672 = vld [vmem:[%s418] ss:$8 sm:$0x3]
        %v2674 = vlaneseq
        %v2675 = vshrl.u32 %v2674, 7
        %v2676 = vsub.s32 0, %v2675
        %v2677 = vrot.slane %v2672, %v2676
        %v2678 = vlaneseq
        %v2679 = vshrl.u32 %v2678, 7
        %v2680 = vsub.s32 1, %v2679
        %v2681 = vrot.slane %v2672, %v2680
        %v2684 = vmul.f32 %v2668, %v2677
        %v2685 = vmul.f32 %v2664, %v2681
        %v2686 = vmul.f32 %v2669, %v2677
        %v2687 = vmul.f32 %v2665, %v2681
        %v2688 = vmul.f32 %v2670, %v2677
        %v2689 = vmul.f32 %v2666, %v2681
        %v2690 = vmul.f32 %v2671, %v2677
        %v2691 = vmul.f32 %v2667, %v2681
        %2692 = vst [vmem:[#allocation3 + $0x80] sm:$0xff] %v2684
        %2693 = vst [vmem:[#allocation3 + $0x88] sm:$0xff] %v2685
        %2694 = vst [vmem:[#allocation3 + $0x90] sm:$0xff] %v2686
        %2695 = vst [vmem:[#allocation3 + $0x98] sm:$0xff] %v2687
        %2696 = vst [vmem:[#allocation3 + $0xa0] sm:$0xff] %v2688
        %2697 = vst [vmem:[#allocation3 + $0xa8] sm:$0xff] %v2689
        %2698 = vst [vmem:[#allocation3 + $0xb0] sm:$0xff] %v2690
        %2699 = vst [vmem:[#allocation3 + $0xb8] sm:$0xff] %v2691
        %2700 = vrot.lane.b32.xlu0 %v2536, 1
        %v2701 = vpop.permute.xlu0 %2700
        %2702 = vrot.lane.b32.xlu0 %v2538, 1
        %v2703 = vpop.permute.xlu0 %2702
        %2704 = vrot.lane.b32.xlu0 %v2540, 1
        %v2705 = vpop.permute.xlu0 %2704
        %2706 = vrot.lane.b32.xlu0 %v2542, 1
        %v2707 = vpop.permute.xlu0 %2706
        %2708 = vrot.lane.b32.xlu0 %v2537, 1
        %v2709 = vpop.permute.xlu0 %2708
        %2710 = vrot.lane.b32.xlu0 %v2539, 1
        %v2711 = vpop.permute.xlu0 %2710
        %2712 = vrot.lane.b32.xlu0 %v2541, 1
        %v2713 = vpop.permute.xlu0 %2712
        %2714 = vrot.lane.b32.xlu0 %v2543, 1
        %v2715 = vpop.permute.xlu0 %2714
        %v2716 = vsel %vm463, %v2701, %v2709
        %v2717 = vsel %vm463, %v2703, %v2711
        %v2718 = vsel %vm463, %v2705, %v2713
        %v2719 = vsel %vm463, %v2707, %v2715
        %v2720 = vsel %vm463, %v2709, %v2701
        %v2721 = vsel %vm463, %v2711, %v2703
        %v2722 = vsel %vm463, %v2713, %v2705
        %v2723 = vsel %vm463, %v2715, %v2707
        %v2724 = vld [vmem:[%s472] ss:$8 sm:$0x3]
        %v2726 = vlaneseq
        %v2727 = vshrl.u32 %v2726, 7
        %v2728 = vsub.s32 0, %v2727
        %v2729 = vrot.slane %v2724, %v2728
        %v2730 = vlaneseq
        %v2731 = vshrl.u32 %v2730, 7
        %v2732 = vsub.s32 1, %v2731
        %v2733 = vrot.slane %v2724, %v2732
        %v2736 = vmul.f32 %v2720, %v2729
        %v2737 = vmul.f32 %v2716, %v2733
        %v2738 = vmul.f32 %v2721, %v2729
        %v2739 = vmul.f32 %v2717, %v2733
        %v2740 = vmul.f32 %v2722, %v2729
        %v2741 = vmul.f32 %v2718, %v2733
        %v2742 = vmul.f32 %v2723, %v2729
        %v2743 = vmul.f32 %v2719, %v2733
        %2744 = vst [vmem:[#allocation3 + $0xc0] sm:$0xff] %v2736
        %2745 = vst [vmem:[#allocation3 + $0xc8] sm:$0xff] %v2737
        %2746 = vst [vmem:[#allocation3 + $0xd0] sm:$0xff] %v2738
        %2747 = vst [vmem:[#allocation3 + $0xd8] sm:$0xff] %v2739
        %2748 = vst [vmem:[#allocation3 + $0xe0] sm:$0xff] %v2740
        %2749 = vst [vmem:[#allocation3 + $0xe8] sm:$0xff] %v2741
        %2750 = vst [vmem:[#allocation3 + $0xf0] sm:$0xff] %v2742
        %2751 = vst [vmem:[#allocation3 + $0xf8] sm:$0xff] %v2743
        %2752 = vst [vmem:[#allocation3 + $0x100] sm:$0xff] %v2536
        %2753 = vst [vmem:[#allocation3 + $0x108] sm:$0xff] %v2537
        %2754 = vst [vmem:[#allocation3 + $0x110] sm:$0xff] %v2538
        %2755 = vst [vmem:[#allocation3 + $0x118] sm:$0xff] %v2539
        %2756 = vst [vmem:[#allocation3 + $0x120] sm:$0xff] %v2540
        %2757 = vst [vmem:[#allocation3 + $0x128] sm:$0xff] %v2541
        %2758 = vst [vmem:[#allocation3 + $0x130] sm:$0xff] %v2542
        %2759 = vst [vmem:[#allocation3 + $0x138] sm:$0xff] %v2543
        %2760 = vrot.lane.b32.xlu0 %v2536, 127
        %v2761 = vpop.permute.xlu0 %2760
        %2762 = vrot.lane.b32.xlu0 %v2538, 127
        %v2763 = vpop.permute.xlu0 %2762
        %2764 = vrot.lane.b32.xlu0 %v2540, 127
        %v2765 = vpop.permute.xlu0 %2764
        %2766 = vrot.lane.b32.xlu0 %v2542, 127
        %v2767 = vpop.permute.xlu0 %2766
        %2768 = vrot.lane.b32.xlu0 %v2537, 127
        %v2769 = vpop.permute.xlu0 %2768
        %2770 = vrot.lane.b32.xlu0 %v2539, 127
        %v2771 = vpop.permute.xlu0 %2770
        %2772 = vrot.lane.b32.xlu0 %v2541, 127
        %v2773 = vpop.permute.xlu0 %2772
        %2774 = vrot.lane.b32.xlu0 %v2543, 127
        %v2775 = vpop.permute.xlu0 %2774
        %v2776 = vsel %vm525, %v2761, %v2769
        %v2777 = vsel %vm525, %v2763, %v2771
        %v2778 = vsel %vm525, %v2765, %v2773
        %v2779 = vsel %vm525, %v2767, %v2775
        %v2780 = vsel %vm525, %v2769, %v2761
        %v2781 = vsel %vm525, %v2771, %v2763
        %v2782 = vsel %vm525, %v2773, %v2765
        %v2783 = vsel %vm525, %v2775, %v2767
        %v2784 = vld [vmem:[%s534] ss:$8 sm:$0x3]
        %v2786 = vlaneseq
        %v2787 = vshrl.u32 %v2786, 7
        %v2788 = vsub.s32 0, %v2787
        %v2789 = vrot.slane %v2784, %v2788
        %v2790 = vlaneseq
        %v2791 = vshrl.u32 %v2790, 7
        %v2792 = vsub.s32 1, %v2791
        %v2793 = vrot.slane %v2784, %v2792
        %v2796 = vmul.f32 %v2776, %v2789
        %v2797 = vmul.f32 %v2780, %v2793
        %v2798 = vmul.f32 %v2777, %v2789
        %v2799 = vmul.f32 %v2781, %v2793
        %v2800 = vmul.f32 %v2778, %v2789
        %v2801 = vmul.f32 %v2782, %v2793
        %v2802 = vmul.f32 %v2779, %v2789
        %v2803 = vmul.f32 %v2783, %v2793
        %2804 = vst [vmem:[#allocation3 + $0x140] sm:$0xff] %v2796
        %2805 = vst [vmem:[#allocation3 + $0x148] sm:$0xff] %v2797
        %2806 = vst [vmem:[#allocation3 + $0x150] sm:$0xff] %v2798
        %2807 = vst [vmem:[#allocation3 + $0x158] sm:$0xff] %v2799
        %2808 = vst [vmem:[#allocation3 + $0x160] sm:$0xff] %v2800
        %2809 = vst [vmem:[#allocation3 + $0x168] sm:$0xff] %v2801
        %2810 = vst [vmem:[#allocation3 + $0x170] sm:$0xff] %v2802
        %2811 = vst [vmem:[#allocation3 + $0x178] sm:$0xff] %v2803
        %2812 = vrot.lane.b32.xlu0 %v2536, 113
        %v2813 = vpop.permute.xlu0 %2812
        %2814 = vrot.lane.b32.xlu0 %v2538, 113
        %v2815 = vpop.permute.xlu0 %2814
        %2816 = vrot.lane.b32.xlu0 %v2540, 113
        %v2817 = vpop.permute.xlu0 %2816
        %2818 = vrot.lane.b32.xlu0 %v2542, 113
        %v2819 = vpop.permute.xlu0 %2818
        %2820 = vrot.lane.b32.xlu0 %v2537, 113
        %v2821 = vpop.permute.xlu0 %2820
        %2822 = vrot.lane.b32.xlu0 %v2539, 113
        %v2823 = vpop.permute.xlu0 %2822
        %2824 = vrot.lane.b32.xlu0 %v2541, 113
        %v2825 = vpop.permute.xlu0 %2824
        %2826 = vrot.lane.b32.xlu0 %v2543, 113
        %v2827 = vpop.permute.xlu0 %2826
        %v2828 = vsel %vm579, %v2813, %v2821
        %v2829 = vsel %vm579, %v2815, %v2823
        %v2830 = vsel %vm579, %v2817, %v2825
        %v2831 = vsel %vm579, %v2819, %v2827
        %v2832 = vsel %vm579, %v2821, %v2813
        %v2833 = vsel %vm579, %v2823, %v2815
        %v2834 = vsel %vm579, %v2825, %v2817
        %v2835 = vsel %vm579, %v2827, %v2819
        %v2836 = vld [vmem:[%s588] ss:$8 sm:$0x3]
        %v2838 = vlaneseq
        %v2839 = vshrl.u32 %v2838, 7
        %v2840 = vsub.s32 0, %v2839
        %v2841 = vrot.slane %v2836, %v2840
        %v2842 = vlaneseq
        %v2843 = vshrl.u32 %v2842, 7
        %v2844 = vsub.s32 1, %v2843
        %v2845 = vrot.slane %v2836, %v2844
        %v2848 = vmul.f32 %v2828, %v2841
        %v2849 = vmul.f32 %v2832, %v2845
        %v2850 = vmul.f32 %v2829, %v2841
        %v2851 = vmul.f32 %v2833, %v2845
        %v2852 = vmul.f32 %v2830, %v2841
        %v2853 = vmul.f32 %v2834, %v2845
        %v2854 = vmul.f32 %v2831, %v2841
        %v2855 = vmul.f32 %v2835, %v2845
        %2856 = vst [vmem:[#allocation3 + $0x180] sm:$0xff] %v2848
        %2857 = vst [vmem:[#allocation3 + $0x188] sm:$0xff] %v2849
        %2858 = vst [vmem:[#allocation3 + $0x190] sm:$0xff] %v2850
        %2859 = vst [vmem:[#allocation3 + $0x198] sm:$0xff] %v2851
        %2860 = vst [vmem:[#allocation3 + $0x1a0] sm:$0xff] %v2852
        %2861 = vst [vmem:[#allocation3 + $0x1a8] sm:$0xff] %v2853
        %2862 = vst [vmem:[#allocation3 + $0x1b0] sm:$0xff] %v2854
        %2863 = vst [vmem:[#allocation3 + $0x1b8] sm:$0xff] %v2855
        %2864 = vrot.lane.b32.xlu0 %v2536, 112
        %v2865 = vpop.permute.xlu0 %2864
        %2866 = vrot.lane.b32.xlu0 %v2538, 112
        %v2867 = vpop.permute.xlu0 %2866
        %2868 = vrot.lane.b32.xlu0 %v2540, 112
        %v2869 = vpop.permute.xlu0 %2868
        %2870 = vrot.lane.b32.xlu0 %v2542, 112
        %v2871 = vpop.permute.xlu0 %2870
        %2872 = vrot.lane.b32.xlu0 %v2537, 112
        %v2873 = vpop.permute.xlu0 %2872
        %2874 = vrot.lane.b32.xlu0 %v2539, 112
        %v2875 = vpop.permute.xlu0 %2874
        %2876 = vrot.lane.b32.xlu0 %v2541, 112
        %v2877 = vpop.permute.xlu0 %2876
        %2878 = vrot.lane.b32.xlu0 %v2543, 112
        %v2879 = vpop.permute.xlu0 %2878
        %v2880 = vsel %vm633, %v2865, %v2873
        %v2881 = vsel %vm633, %v2867, %v2875
        %v2882 = vsel %vm633, %v2869, %v2877
        %v2883 = vsel %vm633, %v2871, %v2879
        %v2884 = vsel %vm633, %v2873, %v2865
        %v2885 = vsel %vm633, %v2875, %v2867
        %v2886 = vsel %vm633, %v2877, %v2869
        %v2887 = vsel %vm633, %v2879, %v2871
        %v2888 = vld [vmem:[%s642] ss:$8 sm:$0x3]
        %v2890 = vlaneseq
        %v2891 = vshrl.u32 %v2890, 7
        %v2892 = vsub.s32 0, %v2891
        %v2893 = vrot.slane %v2888, %v2892
        %v2894 = vlaneseq
        %v2895 = vshrl.u32 %v2894, 7
        %v2896 = vsub.s32 1, %v2895
        %v2897 = vrot.slane %v2888, %v2896
        %v2900 = vmul.f32 %v2880, %v2893
        %v2901 = vmul.f32 %v2884, %v2897
        %v2902 = vmul.f32 %v2881, %v2893
        %v2903 = vmul.f32 %v2885, %v2897
        %v2904 = vmul.f32 %v2882, %v2893
        %v2905 = vmul.f32 %v2886, %v2897
        %v2906 = vmul.f32 %v2883, %v2893
        %v2907 = vmul.f32 %v2887, %v2897
        %2908 = vst [vmem:[#allocation3 + $0x1c0] sm:$0xff] %v2900
        %2909 = vst [vmem:[#allocation3 + $0x1c8] sm:$0xff] %v2901
        %2910 = vst [vmem:[#allocation3 + $0x1d0] sm:$0xff] %v2902
        %2911 = vst [vmem:[#allocation3 + $0x1d8] sm:$0xff] %v2903
        %2912 = vst [vmem:[#allocation3 + $0x1e0] sm:$0xff] %v2904
        %2913 = vst [vmem:[#allocation3 + $0x1e8] sm:$0xff] %v2905
        %2914 = vst [vmem:[#allocation3 + $0x1f0] sm:$0xff] %v2906
        %2915 = vst [vmem:[#allocation3 + $0x1f8] sm:$0xff] %v2907
        %2916 = vrot.lane.b32.xlu0 %v2536, 111
        %v2917 = vpop.permute.xlu0 %2916
        %2918 = vrot.lane.b32.xlu0 %v2538, 111
        %v2919 = vpop.permute.xlu0 %2918
        %2920 = vrot.lane.b32.xlu0 %v2540, 111
        %v2921 = vpop.permute.xlu0 %2920
        %2922 = vrot.lane.b32.xlu0 %v2542, 111
        %v2923 = vpop.permute.xlu0 %2922
        %2924 = vrot.lane.b32.xlu0 %v2537, 111
        %v2925 = vpop.permute.xlu0 %2924
        %2926 = vrot.lane.b32.xlu0 %v2539, 111
        %v2927 = vpop.permute.xlu0 %2926
        %2928 = vrot.lane.b32.xlu0 %v2541, 111
        %v2929 = vpop.permute.xlu0 %2928
        %2930 = vrot.lane.b32.xlu0 %v2543, 111
        %v2931 = vpop.permute.xlu0 %2930
        %v2932 = vsel %vm687, %v2917, %v2925
        %v2933 = vsel %vm687, %v2919, %v2927
        %v2934 = vsel %vm687, %v2921, %v2929
        %v2935 = vsel %vm687, %v2923, %v2931
        %v2936 = vsel %vm687, %v2925, %v2917
        %v2937 = vsel %vm687, %v2927, %v2919
        %v2938 = vsel %vm687, %v2929, %v2921
        %v2939 = vsel %vm687, %v2931, %v2923
        %v2940 = vld [vmem:[%s696] ss:$8 sm:$0x3]
        %v2942 = vlaneseq
        %v2943 = vshrl.u32 %v2942, 7
        %v2944 = vsub.s32 0, %v2943
        %v2945 = vrot.slane %v2940, %v2944
        %v2946 = vlaneseq
        %v2947 = vshrl.u32 %v2946, 7
        %v2948 = vsub.s32 1, %v2947
        %v2949 = vrot.slane %v2940, %v2948
        %v2952 = vmul.f32 %v2932, %v2945
        %v2953 = vmul.f32 %v2936, %v2949
        %v2954 = vmul.f32 %v2933, %v2945
        %v2955 = vmul.f32 %v2937, %v2949
        %v2956 = vmul.f32 %v2934, %v2945
        %v2957 = vmul.f32 %v2938, %v2949
        %v2958 = vmul.f32 %v2935, %v2945
        %v2959 = vmul.f32 %v2939, %v2949
        %2960 = vst [vmem:[#allocation3 + $0x200] sm:$0xff] %v2952
        %2961 = vst [vmem:[#allocation3 + $0x208] sm:$0xff] %v2953
        %2962 = vst [vmem:[#allocation3 + $0x210] sm:$0xff] %v2954
        %2963 = vst [vmem:[#allocation3 + $0x218] sm:$0xff] %v2955
        %2964 = vst [vmem:[#allocation3 + $0x220] sm:$0xff] %v2956
        %2965 = vst [vmem:[#allocation3 + $0x228] sm:$0xff] %v2957
        %2966 = vst [vmem:[#allocation3 + $0x230] sm:$0xff] %v2958
        %2967 = vst [vmem:[#allocation3 + $0x238] sm:$0xff] %v2959
        %s2968 = scalar_lea.vmem [#allocation4], 288
        %v2969 = vld [vmem:[%s2968] sm:$0xff]
        %v2970 = vld [vmem:[%s2968 + $0x8] sm:$0xff]
        %v2971 = vld [vmem:[%s2968 + $0x10] sm:$0xff]
        %v2972 = vld [vmem:[%s2968 + $0x18] sm:$0xff]
        %v2973 = vld [vmem:[%s2968 + $0x20] sm:$0xff]
        %v2974 = vld [vmem:[%s2968 + $0x28] sm:$0xff]
        %v2975 = vld [vmem:[%s2968 + $0x30] sm:$0xff]
        %v2976 = vld [vmem:[%s2968 + $0x38] sm:$0xff]
        %v2977 = vld [vmem:[%s2968 + $0x40] sm:$0xff]
        %v2978 = vld [vmem:[%s2968 + $0x48] sm:$0xff]
        %v2979 = vld [vmem:[%s2968 + $0x50] sm:$0xff]
        %v2980 = vld [vmem:[%s2968 + $0x58] sm:$0xff]
        %v2981 = vld [vmem:[#allocation3] sm:$0xff]
        %v2982 = vld [vmem:[#allocation3 + $0x8] sm:$0xff]
        %v2983 = vld [vmem:[#allocation3 + $0x10] sm:$0xff]
        %v2984 = vld [vmem:[#allocation3 + $0x18] sm:$0xff]
        %v2985 = vld [vmem:[#allocation3 + $0x20] sm:$0xff]
        %v2986 = vld [vmem:[#allocation3 + $0x28] sm:$0xff]
        %v2987 = vld [vmem:[#allocation3 + $0x30] sm:$0xff]
        %v2988 = vld [vmem:[#allocation3 + $0x38] sm:$0xff]
        %v2989 = vld [vmem:[#allocation3 + $0x40] sm:$0xff]
        %v2990 = vld [vmem:[#allocation3 + $0x48] sm:$0xff]
        %v2991 = vld [vmem:[#allocation3 + $0x50] sm:$0xff]
        %v2992 = vld [vmem:[#allocation3 + $0x58] sm:$0xff]
        %v2993 = vld [vmem:[#allocation3 + $0x60] sm:$0xff]
        %v2994 = vld [vmem:[#allocation3 + $0x68] sm:$0xff]
        %v2995 = vld [vmem:[#allocation3 + $0x70] sm:$0xff]
        %v2996 = vld [vmem:[#allocation3 + $0x78] sm:$0xff]
        %v2997 = vld [vmem:[#allocation3 + $0x80] sm:$0xff]
        %v2998 = vld [vmem:[#allocation3 + $0x88] sm:$0xff]
        %v2999 = vld [vmem:[#allocation3 + $0x90] sm:$0xff]
        %v3000 = vld [vmem:[#allocation3 + $0x98] sm:$0xff]
        %v3001 = vld [vmem:[#allocation3 + $0xa0] sm:$0xff]
        %v3002 = vld [vmem:[#allocation3 + $0xa8] sm:$0xff]
        %v3003 = vld [vmem:[#allocation3 + $0xb0] sm:$0xff]
        %v3004 = vld [vmem:[#allocation3 + $0xb8] sm:$0xff]
        %v3005 = vld [vmem:[#allocation3 + $0xc0] sm:$0xff]
        %v3006 = vld [vmem:[#allocation3 + $0xc8] sm:$0xff]
        %v3007 = vld [vmem:[#allocation3 + $0xd0] sm:$0xff]
        %v3008 = vld [vmem:[#allocation3 + $0xd8] sm:$0xff]
        %v3009 = vld [vmem:[#allocation3 + $0xe0] sm:$0xff]
        %v3010 = vld [vmem:[#allocation3 + $0xe8] sm:$0xff]
        %v3011 = vld [vmem:[#allocation3 + $0xf0] sm:$0xff]
        %v3012 = vld [vmem:[#allocation3 + $0xf8] sm:$0xff]
        %v3013 = vld [vmem:[#allocation3 + $0x100] sm:$0xff]
        %v3014 = vld [vmem:[#allocation3 + $0x108] sm:$0xff]
        %v3015 = vld [vmem:[#allocation3 + $0x110] sm:$0xff]
        %v3016 = vld [vmem:[#allocation3 + $0x118] sm:$0xff]
        %v3017 = vld [vmem:[#allocation3 + $0x120] sm:$0xff]
        %v3018 = vld [vmem:[#allocation3 + $0x128] sm:$0xff]
        %v3019 = vld [vmem:[#allocation3 + $0x130] sm:$0xff]
        %v3020 = vld [vmem:[#allocation3 + $0x138] sm:$0xff]
        %v3021 = vld [vmem:[#allocation3 + $0x140] sm:$0xff]
        %v3022 = vld [vmem:[#allocation3 + $0x148] sm:$0xff]
        %v3023 = vld [vmem:[#allocation3 + $0x150] sm:$0xff]
        %v3024 = vld [vmem:[#allocation3 + $0x158] sm:$0xff]
        %v3025 = vld [vmem:[#allocation3 + $0x160] sm:$0xff]
        %v3026 = vld [vmem:[#allocation3 + $0x168] sm:$0xff]
        %v3027 = vld [vmem:[#allocation3 + $0x170] sm:$0xff]
        %v3028 = vld [vmem:[#allocation3 + $0x178] sm:$0xff]
        %v3029 = vld [vmem:[#allocation3 + $0x180] sm:$0xff]
        %v3030 = vld [vmem:[#allocation3 + $0x188] sm:$0xff]
        %v3031 = vld [vmem:[#allocation3 + $0x190] sm:$0xff]
        %v3032 = vld [vmem:[#allocation3 + $0x198] sm:$0xff]
        %v3033 = vld [vmem:[#allocation3 + $0x1a0] sm:$0xff]
        %v3034 = vld [vmem:[#allocation3 + $0x1a8] sm:$0xff]
        %v3035 = vld [vmem:[#allocation3 + $0x1b0] sm:$0xff]
        %v3036 = vld [vmem:[#allocation3 + $0x1b8] sm:$0xff]
        %v3037 = vld [vmem:[#allocation3 + $0x1c0] sm:$0xff]
        %v3038 = vld [vmem:[#allocation3 + $0x1c8] sm:$0xff]
        %v3039 = vld [vmem:[#allocation3 + $0x1d0] sm:$0xff]
        %v3040 = vld [vmem:[#allocation3 + $0x1d8] sm:$0xff]
        %v3041 = vld [vmem:[#allocation3 + $0x1e0] sm:$0xff]
        %v3042 = vld [vmem:[#allocation3 + $0x1e8] sm:$0xff]
        %v3043 = vld [vmem:[#allocation3 + $0x1f0] sm:$0xff]
        %v3044 = vld [vmem:[#allocation3 + $0x1f8] sm:$0xff]
        %v3045 = vld [vmem:[#allocation3 + $0x200] sm:$0xff]
        %v3046 = vld [vmem:[#allocation3 + $0x208] sm:$0xff]
        %v3047 = vld [vmem:[#allocation3 + $0x210] sm:$0xff]
        %v3048 = vld [vmem:[#allocation3 + $0x218] sm:$0xff]
        %v3049 = vld [vmem:[#allocation3 + $0x220] sm:$0xff]
        %v3050 = vld [vmem:[#allocation3 + $0x228] sm:$0xff]
        %v3051 = vld [vmem:[#allocation3 + $0x230] sm:$0xff]
        %v3052 = vld [vmem:[#allocation3 + $0x238] sm:$0xff]
        %s3053 = scalar_lea.vmem %s4, 96
        %v3054 = vld [vmem:[%s3053] sm:$0xff]
        %v3055 = vld [vmem:[%s3053 + $0x8] sm:$0xff]
        %v3056 = vld [vmem:[%s3053 + $0x10] sm:$0xff]
        %v3057 = vld [vmem:[%s3053 + $0x18] sm:$0xff]
        %3059 = vset.pattern.permute.xlu0 0
        %3060 = vperm.xlu0 %3059, %v3054
        %v3061 = vpop.permute.xlu0 %3060
        %3064 = vset.pattern.permute.xlu0 0
        %3065 = vperm.xlu0 %3064, %v3055
        %v3066 = vpop.permute.xlu0 %3065
        %3069 = vset.pattern.permute.xlu0 0
        %3070 = vperm.xlu0 %3069, %v3056
        %v3071 = vpop.permute.xlu0 %3070
        %3074 = vset.pattern.permute.xlu0 0
        %3075 = vperm.xlu0 %3074, %v3057
        %v3076 = vpop.permute.xlu0 %3075
        %v3079 = vsel %vm833, %v2971, 0
        %v3082 = vsel %vm833, %v2974, 0
        %v3085 = vsel %vm833, %v2977, 0
        %v3088 = vsel %vm833, %v2980, 0
        %3090 = vmatprep.subr.mxu0 %v2982
        %3091 = vmatpush1.msra.mxu0 %v2981
        %3092 = vmatprep.subr.mxu0 %v2984
        %3093 = vmatpush1.msra.mxu0 %v2983
        %3094 = vmatprep.subr.mxu0 %v2986
        %3095 = vmatpush1.msra.mxu0 %v2985
        %3096 = vmatprep.subr.mxu0 %v2988
        %3097 = vmatpush1.msra.mxu0 %v2987
        %3098 = vmatprep.subr.mxu0 %v2990
        %3099 = vmatpush1.msra.mxu0 %v2989
        %3100 = vmatprep.subr.mxu0 %v2992
        %3101 = vmatpush1.msra.mxu0 %v2991
        %3102 = vmatprep.subr.mxu0 %v2994
        %3103 = vmatpush1.msra.mxu0 %v2993
        %3104 = vmatprep.subr.mxu0 %v2996
        %3105 = vmatpush1.msra.mxu0 %v2995
        %3106 = vmatprep.subr.mxu0 %v2998
        %3107 = vmatpush1.msra.mxu0 %v2997
        %3108 = vmatprep.subr.mxu0 %v3000
        %3109 = vmatpush1.msra.mxu0 %v2999
        %3110 = vmatprep.subr.mxu0 %v3002
        %3111 = vmatpush1.msra.mxu0 %v3001
        %3112 = vmatprep.subr.mxu0 %v3004
        %3113 = vmatpush1.msra.mxu0 %v3003
        %3114 = vmatprep.subr.mxu0 %v3006
        %3115 = vmatpush1.msra.mxu0 %v3005
        %3116 = vmatprep.subr.mxu0 %v3008
        %3117 = vmatpush1.msra.mxu0 %v3007
        %3118 = vmatprep.subr.mxu0 %v3010
        %3119 = vmatpush1.msra.mxu0 %v3009
        %3120 = vmatprep.subr.mxu0 %v3012
        %3121 = vmatpush1.msra.mxu0 %v3011
        %3122 = vmatprep.subr.mxu0 %v3014
        %3123 = vmatpush1.msra.mxu0 %v3013
        %3124 = vmatprep.subr.mxu0 %v3016
        %3125 = vmatpush1.msra.mxu0 %v3015
        %3126 = vmatprep.subr.mxu0 %v3018
        %3127 = vmatpush1.msra.mxu0 %v3017
        %3128 = vmatprep.subr.mxu0 %v3020
        %3129 = vmatpush1.msra.mxu0 %v3019
        %3130 = vmatprep.subr.mxu0 %v3022
        %3131 = vmatpush1.msra.mxu0 %v3021
        %3132 = vmatprep.subr.mxu0 %v3024
        %3133 = vmatpush1.msra.mxu0 %v3023
        %3134 = vmatprep.subr.mxu0 %v3026
        %3135 = vmatpush1.msra.mxu0 %v3025
        %3136 = vmatprep.subr.mxu0 %v3028
        %3137 = vmatpush1.msra.mxu0 %v3027
        %3138 = vmatprep.subr.mxu0 %v3030
        %3139 = vmatpush1.msra.mxu0 %v3029
        %3140 = vmatprep.subr.mxu0 %v3032
        %3141 = vmatpush1.msra.mxu0 %v3031
        %3142 = vmatprep.subr.mxu0 %v3034
        %3143 = vmatpush1.msra.mxu0 %v3033
        %3144 = vmatprep.subr.mxu0 %v3036
        %3145 = vmatpush1.msra.mxu0 %v3035
        %3146 = vmatprep.subr.mxu0 %v3038
        %3147 = vmatpush1.msra.mxu0 %v3037
        %3148 = vmatprep.subr.mxu0 %v3040
        %3149 = vmatpush1.msra.mxu0 %v3039
        %3150 = vmatprep.subr.mxu0 %v3042
        %3151 = vmatpush1.msra.mxu0 %v3041
        %3152 = vmatprep.subr.mxu0 %v3044
        %3153 = vmatpush1.msra.mxu0 %v3043
        %3154 = vmatprep.mubr.f32.mxu0 %v2970
        %3155 = vmatmul.mubr.f32.gmra.mrb[0].mxu0 %v2969
        %v3156 = vpop.f32.mrb[0].mxu0
        %v3157 = vadd.f32 %v3061, %v3156
        %v3158 = vpop.f32.mrb[0].mxu0
        %v3159 = vadd.f32 %v3061, %v3158
        %3160 = vmatprep.mubr.f32.mxu0 %v2973
        %3161 = vmatmul.mubr.f32.gmra.mrb[0].mxu0 %v2972
        %v3162 = vpop.f32.mrb[0].mxu0
        %v3163 = vadd.f32 %v3066, %v3162
        %v3164 = vpop.f32.mrb[0].mxu0
        %v3165 = vadd.f32 %v3066, %v3164
        %3166 = vmatprep.mubr.f32.mxu0 %v2976
        %3167 = vmatmul.mubr.f32.gmra.mrb[0].mxu0 %v2975
        %v3168 = vpop.f32.mrb[0].mxu0
        %v3169 = vadd.f32 %v3071, %v3168
        %v3170 = vpop.f32.mrb[0].mxu0
        %v3171 = vadd.f32 %v3071, %v3170
        %3172 = vmatprep.mubr.f32.mxu0 %v2979
        %3173 = vmatmul.mubr.f32.gmra.mrb[0].mxu0 %v2978
        %v3174 = vpop.f32.mrb[0].mxu0
        %v3175 = vadd.f32 %v3076, %v3174
        %v3176 = vpop.f32.mrb[0].mxu0
        %v3177 = vadd.f32 %v3076, %v3176
        %3178 = vdwg.mxu0
        %3179 = vmatprep.subr.mxu0 %v3046
        %3180 = vmatpush1.msra.mxu0 %v3045
        %3181 = vmatprep.subr.mxu0 %v3048
        %3182 = vmatpush1.msra.mxu0 %v3047
        %3183 = vmatprep.subr.mxu0 %v3050
        %3184 = vmatpush1.msra.mxu0 %v3049
        %3185 = vmatprep.subr.mxu0 %v3052
        %3186 = vmatpush1.msra.mxu0 %v3051
        %3187 = vmatprep.subr.mxu0 0.0
        %3188 = vmatpush1.msra.mxu0 0.0
        %3189 = vmatprep.subr.mxu0 0.0
        %3190 = vmatpush1.msra.mxu0 0.0
        %3191 = vmatprep.subr.mxu0 0.0
        %3192 = vmatpush1.msra.mxu0 0.0
        %3193 = vmatprep.subr.mxu0 0.0
        %3194 = vmatpush1.msra.mxu0 0.0
        %3195 = vmatprep.subr.mxu0 0.0
        %3196 = vmatpush1.msra.mxu0 0.0
        %3197 = vmatprep.subr.mxu0 0.0
        %3198 = vmatpush1.msra.mxu0 0.0
        %3199 = vmatprep.subr.mxu0 0.0
        %3200 = vmatpush1.msra.mxu0 0.0
        %3201 = vmatprep.subr.mxu0 0.0
        %3202 = vmatpush1.msra.mxu0 0.0
        %3203 = vmatprep.subr.mxu0 0.0
        %3204 = vmatpush1.msra.mxu0 0.0
        %3205 = vmatprep.subr.mxu0 0.0
        %3206 = vmatpush1.msra.mxu0 0.0
        %3207 = vmatprep.subr.mxu0 0.0
        %3208 = vmatpush1.msra.mxu0 0.0
        %3209 = vmatprep.subr.mxu0 0.0
        %3210 = vmatpush1.msra.mxu0 0.0
        %3211 = vmatprep.subr.mxu0 0.0
        %3212 = vmatpush1.msra.mxu0 0.0
        %3213 = vmatprep.subr.mxu0 0.0
        %3214 = vmatpush1.msra.mxu0 0.0
        %3215 = vmatprep.subr.mxu0 0.0
        %3216 = vmatpush1.msra.mxu0 0.0
        %3217 = vmatprep.subr.mxu0 0.0
        %3218 = vmatpush1.msra.mxu0 0.0
        %3219 = vmatprep.subr.mxu0 0.0
        %3220 = vmatpush1.msra.mxu0 0.0
        %3221 = vmatprep.subr.mxu0 0.0
        %3222 = vmatpush1.msra.mxu0 0.0
        %3223 = vmatprep.subr.mxu0 0.0
        %3224 = vmatpush1.msra.mxu0 0.0
        %3225 = vmatprep.subr.mxu0 0.0
        %3226 = vmatpush1.msra.mxu0 0.0
        %3227 = vmatprep.subr.mxu0 0.0
        %3228 = vmatpush1.msra.mxu0 0.0
        %3229 = vmatprep.subr.mxu0 0.0
        %3230 = vmatpush1.msra.mxu0 0.0
        %3231 = vmatprep.subr.mxu0 0.0
        %3232 = vmatpush1.msra.mxu0 0.0
        %3233 = vmatprep.subr.mxu0 0.0
        %3234 = vmatpush1.msra.mxu0 0.0
        %3235 = vmatprep.subr.mxu0 0.0
        %3236 = vmatpush1.msra.mxu0 0.0
        %3237 = vmatprep.subr.mxu0 0.0
        %3238 = vmatpush1.msra.mxu0 0.0
        %3239 = vmatprep.subr.mxu0 0.0
        %3240 = vmatpush1.msra.mxu0 0.0
        %3241 = vmatprep.subr.mxu0 0.0
        %3242 = vmatpush1.msra.mxu0 0.0
        %3243 = vmatprep.mubr.f32.mxu0 0.0
        %3244 = vmatmul.mubr.f32.gmra.mrb[0].mxu0 %v3079
        %v3245 = vpop.f32.mrb[0].mxu0
        %v3246 = vadd.f32 %v3157, %v3245
        %v3247 = vpop.f32.mrb[0].mxu0
        %v3248 = vadd.f32 %v3159, %v3247
        %3249 = vmatprep.mubr.f32.mxu0 0.0
        %3250 = vmatmul.mubr.f32.gmra.mrb[0].mxu0 %v3082
        %v3251 = vpop.f32.mrb[0].mxu0
        %v3252 = vadd.f32 %v3163, %v3251
        %v3253 = vpop.f32.mrb[0].mxu0
        %v3254 = vadd.f32 %v3165, %v3253
        %3255 = vmatprep.mubr.f32.mxu0 0.0
        %3256 = vmatmul.mubr.f32.gmra.mrb[0].mxu0 %v3085
        %v3257 = vpop.f32.mrb[0].mxu0
        %v3258 = vadd.f32 %v3169, %v3257
        %v3259 = vpop.f32.mrb[0].mxu0
        %v3260 = vadd.f32 %v3171, %v3259
        %3261 = vmatprep.mubr.f32.mxu0 0.0
        %3262 = vmatmul.mubr.f32.gmra.mrb[0].mxu0 %v3088
        %v3263 = vpop.f32.mrb[0].mxu0
        %v3264 = vadd.f32 %v3175, %v3263
        %v3265 = vpop.f32.mrb[0].mxu0
        %v3266 = vadd.f32 %v3177, %v3265
        %3267 = vdwg.mxu0
        %v3268 = vmax.f32 %v3246, 0.0
        %v3269 = vmax.f32 %v3248, 0.0
        %v3270 = vmax.f32 %v3252, 0.0
        %v3271 = vmax.f32 %v3254, 0.0
        %v3272 = vmax.f32 %v3258, 0.0
        %v3273 = vmax.f32 %v3260, 0.0
        %v3274 = vmax.f32 %v3264, 0.0
        %v3275 = vmax.f32 %v3266, 0.0
        %3276 = vst [vmem:[#allocation2] sm:$0xff] %v3268
        %3277 = vst [vmem:[#allocation2 + $0x8] sm:$0xff] %v3269
        %3278 = vst [vmem:[#allocation2 + $0x10] sm:$0xff] %v3270
        %3279 = vst [vmem:[#allocation2 + $0x18] sm:$0xff] %v3271
        %3280 = vst [vmem:[#allocation2 + $0x20] sm:$0xff] %v3272
        %3281 = vst [vmem:[#allocation2 + $0x28] sm:$0xff] %v3273
        %3282 = vst [vmem:[#allocation2 + $0x30] sm:$0xff] %v3274
        %3283 = vst [vmem:[#allocation2 + $0x38] sm:$0xff] %v3275
        %v3284 = vld [vmem:[#allocation2] sm:$0xff]
        %v3285 = vld [vmem:[#allocation2 + $0x8] sm:$0xff]
        %v3286 = vld [vmem:[#allocation2 + $0x10] sm:$0xff]
        %v3287 = vld [vmem:[#allocation2 + $0x18] sm:$0xff]
        %v3288 = vld [vmem:[#allocation2 + $0x20] sm:$0xff]
        %v3289 = vld [vmem:[#allocation2 + $0x28] sm:$0xff]
        %v3290 = vld [vmem:[#allocation2 + $0x30] sm:$0xff]
        %v3291 = vld [vmem:[#allocation2 + $0x38] sm:$0xff]
        %3292 = vrot.lane.b32.xlu0 %v3284, 17
        %v3293 = vpop.permute.xlu0 %3292
        %3294 = vrot.lane.b32.xlu0 %v3286, 17
        %v3295 = vpop.permute.xlu0 %3294
        %3296 = vrot.lane.b32.xlu0 %v3288, 17
        %v3297 = vpop.permute.xlu0 %3296
        %3298 = vrot.lane.b32.xlu0 %v3290, 17
        %v3299 = vpop.permute.xlu0 %3298
        %3300 = vrot.lane.b32.xlu0 %v3285, 17
        %v3301 = vpop.permute.xlu0 %3300
        %3302 = vrot.lane.b32.xlu0 %v3287, 17
        %v3303 = vpop.permute.xlu0 %3302
        %3304 = vrot.lane.b32.xlu0 %v3289, 17
        %v3305 = vpop.permute.xlu0 %3304
        %3306 = vrot.lane.b32.xlu0 %v3291, 17
        %v3307 = vpop.permute.xlu0 %3306
        %v3308 = vsel %vm302, %v3293, %v3301
        %v3309 = vsel %vm302, %v3295, %v3303
        %v3310 = vsel %vm302, %v3297, %v3305
        %v3311 = vsel %vm302, %v3299, %v3307
        %v3312 = vsel %vm302, %v3301, %v3293
        %v3313 = vsel %vm302, %v3303, %v3295
        %v3314 = vsel %vm302, %v3305, %v3297
        %v3315 = vsel %vm302, %v3307, %v3299
        %v3316 = vld [vmem:[%s2] ss:$8 sm:$0x3]
        %v3318 = vlaneseq
        %v3319 = vshrl.u32 %v3318, 7
        %v3320 = vsub.s32 0, %v3319
        %v3321 = vrot.slane %v3316, %v3320
        %v3322 = vlaneseq
        %v3323 = vshrl.u32 %v3322, 7
        %v3324 = vsub.s32 1, %v3323
        %v3325 = vrot.slane %v3316, %v3324
        %v3328 = vmul.f32 %v3312, %v3321
        %v3329 = vmul.f32 %v3308, %v3325
        %v3330 = vmul.f32 %v3313, %v3321
        %v3331 = vmul.f32 %v3309, %v3325
        %v3332 = vmul.f32 %v3314, %v3321
        %v3333 = vmul.f32 %v3310, %v3325
        %v3334 = vmul.f32 %v3315, %v3321
        %v3335 = vmul.f32 %v3311, %v3325
        %3336 = vst [vmem:[#allocation3] sm:$0xff] %v3328
        %3337 = vst [vmem:[#allocation3 + $0x8] sm:$0xff] %v3329
        %3338 = vst [vmem:[#allocation3 + $0x10] sm:$0xff] %v3330
        %3339 = vst [vmem:[#allocation3 + $0x18] sm:$0xff] %v3331
        %3340 = vst [vmem:[#allocation3 + $0x20] sm:$0xff] %v3332
        %3341 = vst [vmem:[#allocation3 + $0x28] sm:$0xff] %v3333
        %3342 = vst [vmem:[#allocation3 + $0x30] sm:$0xff] %v3334
        %3343 = vst [vmem:[#allocation3 + $0x38] sm:$0xff] %v3335
        %3344 = vrot.lane.b32.xlu0 %v3284, 16
        %v3345 = vpop.permute.xlu0 %3344
        %3346 = vrot.lane.b32.xlu0 %v3286, 16
        %v3347 = vpop.permute.xlu0 %3346
        %3348 = vrot.lane.b32.xlu0 %v3288, 16
        %v3349 = vpop.permute.xlu0 %3348
        %3350 = vrot.lane.b32.xlu0 %v3290, 16
        %v3351 = vpop.permute.xlu0 %3350
        %3352 = vrot.lane.b32.xlu0 %v3285, 16
        %v3353 = vpop.permute.xlu0 %3352
        %3354 = vrot.lane.b32.xlu0 %v3287, 16
        %v3355 = vpop.permute.xlu0 %3354
        %3356 = vrot.lane.b32.xlu0 %v3289, 16
        %v3357 = vpop.permute.xlu0 %3356
        %3358 = vrot.lane.b32.xlu0 %v3291, 16
        %v3359 = vpop.permute.xlu0 %3358
        %v3360 = vsel %vm355, %v3345, %v3353
        %v3361 = vsel %vm355, %v3347, %v3355
        %v3362 = vsel %vm355, %v3349, %v3357
        %v3363 = vsel %vm355, %v3351, %v3359
        %v3364 = vsel %vm355, %v3353, %v3345
        %v3365 = vsel %vm355, %v3355, %v3347
        %v3366 = vsel %vm355, %v3357, %v3349
        %v3367 = vsel %vm355, %v3359, %v3351
        %v3368 = vld [vmem:[%s364] ss:$8 sm:$0x3]
        %v3370 = vlaneseq
        %v3371 = vshrl.u32 %v3370, 7
        %v3372 = vsub.s32 0, %v3371
        %v3373 = vrot.slane %v3368, %v3372
        %v3374 = vlaneseq
        %v3375 = vshrl.u32 %v3374, 7
        %v3376 = vsub.s32 1, %v3375
        %v3377 = vrot.slane %v3368, %v3376
        %v3380 = vmul.f32 %v3364, %v3373
        %v3381 = vmul.f32 %v3360, %v3377
        %v3382 = vmul.f32 %v3365, %v3373
        %v3383 = vmul.f32 %v3361, %v3377
        %v3384 = vmul.f32 %v3366, %v3373
        %v3385 = vmul.f32 %v3362, %v3377
        %v3386 = vmul.f32 %v3367, %v3373
        %v3387 = vmul.f32 %v3363, %v3377
        %3388 = vst [vmem:[#allocation3 + $0x40] sm:$0xff] %v3380
        %3389 = vst [vmem:[#allocation3 + $0x48] sm:$0xff] %v3381
        %3390 = vst [vmem:[#allocation3 + $0x50] sm:$0xff] %v3382
        %3391 = vst [vmem:[#allocation3 + $0x58] sm:$0xff] %v3383
        %3392 = vst [vmem:[#allocation3 + $0x60] sm:$0xff] %v3384
        %3393 = vst [vmem:[#allocation3 + $0x68] sm:$0xff] %v3385
        %3394 = vst [vmem:[#allocation3 + $0x70] sm:$0xff] %v3386
        %3395 = vst [vmem:[#allocation3 + $0x78] sm:$0xff] %v3387
        %3396 = vrot.lane.b32.xlu0 %v3284, 15
        %v3397 = vpop.permute.xlu0 %3396
        %3398 = vrot.lane.b32.xlu0 %v3286, 15
        %v3399 = vpop.permute.xlu0 %3398
        %3400 = vrot.lane.b32.xlu0 %v3288, 15
        %v3401 = vpop.permute.xlu0 %3400
        %3402 = vrot.lane.b32.xlu0 %v3290, 15
        %v3403 = vpop.permute.xlu0 %3402
        %3404 = vrot.lane.b32.xlu0 %v3285, 15
        %v3405 = vpop.permute.xlu0 %3404
        %3406 = vrot.lane.b32.xlu0 %v3287, 15
        %v3407 = vpop.permute.xlu0 %3406
        %3408 = vrot.lane.b32.xlu0 %v3289, 15
        %v3409 = vpop.permute.xlu0 %3408
        %3410 = vrot.lane.b32.xlu0 %v3291, 15
        %v3411 = vpop.permute.xlu0 %3410
        %v3412 = vsel %vm409, %v3397, %v3405
        %v3413 = vsel %vm409, %v3399, %v3407
        %v3414 = vsel %vm409, %v3401, %v3409
        %v3415 = vsel %vm409, %v3403, %v3411
        %v3416 = vsel %vm409, %v3405, %v3397
        %v3417 = vsel %vm409, %v3407, %v3399
        %v3418 = vsel %vm409, %v3409, %v3401
        %v3419 = vsel %vm409, %v3411, %v3403
        %v3420 = vld [vmem:[%s418] ss:$8 sm:$0x3]
        %v3422 = vlaneseq
        %v3423 = vshrl.u32 %v3422, 7
        %v3424 = vsub.s32 0, %v3423
        %v3425 = vrot.slane %v3420, %v3424
        %v3426 = vlaneseq
        %v3427 = vshrl.u32 %v3426, 7
        %v3428 = vsub.s32 1, %v3427
        %v3429 = vrot.slane %v3420, %v3428
        %v3432 = vmul.f32 %v3416, %v3425
        %v3433 = vmul.f32 %v3412, %v3429
        %v3434 = vmul.f32 %v3417, %v3425
        %v3435 = vmul.f32 %v3413, %v3429
        %v3436 = vmul.f32 %v3418, %v3425
        %v3437 = vmul.f32 %v3414, %v3429
        %v3438 = vmul.f32 %v3419, %v3425
        %v3439 = vmul.f32 %v3415, %v3429
        %3440 = vst [vmem:[#allocation3 + $0x80] sm:$0xff] %v3432
        %3441 = vst [vmem:[#allocation3 + $0x88] sm:$0xff] %v3433
        %3442 = vst [vmem:[#allocation3 + $0x90] sm:$0xff] %v3434
        %3443 = vst [vmem:[#allocation3 + $0x98] sm:$0xff] %v3435
        %3444 = vst [vmem:[#allocation3 + $0xa0] sm:$0xff] %v3436
        %3445 = vst [vmem:[#allocation3 + $0xa8] sm:$0xff] %v3437
        %3446 = vst [vmem:[#allocation3 + $0xb0] sm:$0xff] %v3438
        %3447 = vst [vmem:[#allocation3 + $0xb8] sm:$0xff] %v3439
        %3448 = vrot.lane.b32.xlu0 %v3284, 1
        %v3449 = vpop.permute.xlu0 %3448
        %3450 = vrot.lane.b32.xlu0 %v3286, 1
        %v3451 = vpop.permute.xlu0 %3450
        %3452 = vrot.lane.b32.xlu0 %v3288, 1
        %v3453 = vpop.permute.xlu0 %3452
        %3454 = vrot.lane.b32.xlu0 %v3290, 1
        %v3455 = vpop.permute.xlu0 %3454
        %3456 = vrot.lane.b32.xlu0 %v3285, 1
        %v3457 = vpop.permute.xlu0 %3456
        %3458 = vrot.lane.b32.xlu0 %v3287, 1
        %v3459 = vpop.permute.xlu0 %3458
        %3460 = vrot.lane.b32.xlu0 %v3289, 1
        %v3461 = vpop.permute.xlu0 %3460
        %3462 = vrot.lane.b32.xlu0 %v3291, 1
        %v3463 = vpop.permute.xlu0 %3462
        %v3464 = vsel %vm463, %v3449, %v3457
        %v3465 = vsel %vm463, %v3451, %v3459
        %v3466 = vsel %vm463, %v3453, %v3461
        %v3467 = vsel %vm463, %v3455, %v3463
        %v3468 = vsel %vm463, %v3457, %v3449
        %v3469 = vsel %vm463, %v3459, %v3451
        %v3470 = vsel %vm463, %v3461, %v3453
        %v3471 = vsel %vm463, %v3463, %v3455
        %v3472 = vld [vmem:[%s472] ss:$8 sm:$0x3]
        %v3474 = vlaneseq
        %v3475 = vshrl.u32 %v3474, 7
        %v3476 = vsub.s32 0, %v3475
        %v3477 = vrot.slane %v3472, %v3476
        %v3478 = vlaneseq
        %v3479 = vshrl.u32 %v3478, 7
        %v3480 = vsub.s32 1, %v3479
        %v3481 = vrot.slane %v3472, %v3480
        %v3484 = vmul.f32 %v3468, %v3477
        %v3485 = vmul.f32 %v3464, %v3481
        %v3486 = vmul.f32 %v3469, %v3477
        %v3487 = vmul.f32 %v3465, %v3481
        %v3488 = vmul.f32 %v3470, %v3477
        %v3489 = vmul.f32 %v3466, %v3481
        %v3490 = vmul.f32 %v3471, %v3477
        %v3491 = vmul.f32 %v3467, %v3481
        %3492 = vst [vmem:[#allocation3 + $0xc0] sm:$0xff] %v3484
        %3493 = vst [vmem:[#allocation3 + $0xc8] sm:$0xff] %v3485
        %3494 = vst [vmem:[#allocation3 + $0xd0] sm:$0xff] %v3486
        %3495 = vst [vmem:[#allocation3 + $0xd8] sm:$0xff] %v3487
        %3496 = vst [vmem:[#allocation3 + $0xe0] sm:$0xff] %v3488
        %3497 = vst [vmem:[#allocation3 + $0xe8] sm:$0xff] %v3489
        %3498 = vst [vmem:[#allocation3 + $0xf0] sm:$0xff] %v3490
        %3499 = vst [vmem:[#allocation3 + $0xf8] sm:$0xff] %v3491
        %3500 = vst [vmem:[#allocation3 + $0x100] sm:$0xff] %v3284
        %3501 = vst [vmem:[#allocation3 + $0x108] sm:$0xff] %v3285
        %3502 = vst [vmem:[#allocation3 + $0x110] sm:$0xff] %v3286
        %3503 = vst [vmem:[#allocation3 + $0x118] sm:$0xff] %v3287
        %3504 = vst [vmem:[#allocation3 + $0x120] sm:$0xff] %v3288
        %3505 = vst [vmem:[#allocation3 + $0x128] sm:$0xff] %v3289
        %3506 = vst [vmem:[#allocation3 + $0x130] sm:$0xff] %v3290
        %3507 = vst [vmem:[#allocation3 + $0x138] sm:$0xff] %v3291
        %3508 = vrot.lane.b32.xlu0 %v3284, 127
        %v3509 = vpop.permute.xlu0 %3508
        %3510 = vrot.lane.b32.xlu0 %v3286, 127
        %v3511 = vpop.permute.xlu0 %3510
        %3512 = vrot.lane.b32.xlu0 %v3288, 127
        %v3513 = vpop.permute.xlu0 %3512
        %3514 = vrot.lane.b32.xlu0 %v3290, 127
        %v3515 = vpop.permute.xlu0 %3514
        %3516 = vrot.lane.b32.xlu0 %v3285, 127
        %v3517 = vpop.permute.xlu0 %3516
        %3518 = vrot.lane.b32.xlu0 %v3287, 127
        %v3519 = vpop.permute.xlu0 %3518
        %3520 = vrot.lane.b32.xlu0 %v3289, 127
        %v3521 = vpop.permute.xlu0 %3520
        %3522 = vrot.lane.b32.xlu0 %v3291, 127
        %v3523 = vpop.permute.xlu0 %3522
        %v3524 = vsel %vm525, %v3509, %v3517
        %v3525 = vsel %vm525, %v3511, %v3519
        %v3526 = vsel %vm525, %v3513, %v3521
        %v3527 = vsel %vm525, %v3515, %v3523
        %v3528 = vsel %vm525, %v3517, %v3509
        %v3529 = vsel %vm525, %v3519, %v3511
        %v3530 = vsel %vm525, %v3521, %v3513
        %v3531 = vsel %vm525, %v3523, %v3515
        %v3532 = vld [vmem:[%s534] ss:$8 sm:$0x3]
        %v3534 = vlaneseq
        %v3535 = vshrl.u32 %v3534, 7
        %v3536 = vsub.s32 0, %v3535
        %v3537 = vrot.slane %v3532, %v3536
        %v3538 = vlaneseq
        %v3539 = vshrl.u32 %v3538, 7
        %v3540 = vsub.s32 1, %v3539
        %v3541 = vrot.slane %v3532, %v3540
        %v3544 = vmul.f32 %v3524, %v3537
        %v3545 = vmul.f32 %v3528, %v3541
        %v3546 = vmul.f32 %v3525, %v3537
        %v3547 = vmul.f32 %v3529, %v3541
        %v3548 = vmul.f32 %v3526, %v3537
        %v3549 = vmul.f32 %v3530, %v3541
        %v3550 = vmul.f32 %v3527, %v3537
        %v3551 = vmul.f32 %v3531, %v3541
        %3552 = vst [vmem:[#allocation3 + $0x140] sm:$0xff] %v3544
        %3553 = vst [vmem:[#allocation3 + $0x148] sm:$0xff] %v3545
        %3554 = vst [vmem:[#allocation3 + $0x150] sm:$0xff] %v3546
        %3555 = vst [vmem:[#allocation3 + $0x158] sm:$0xff] %v3547
        %3556 = vst [vmem:[#allocation3 + $0x160] sm:$0xff] %v3548
        %3557 = vst [vmem:[#allocation3 + $0x168] sm:$0xff] %v3549
        %3558 = vst [vmem:[#allocation3 + $0x170] sm:$0xff] %v3550
        %3559 = vst [vmem:[#allocation3 + $0x178] sm:$0xff] %v3551
        %3560 = vrot.lane.b32.xlu0 %v3284, 113
        %v3561 = vpop.permute.xlu0 %3560
        %3562 = vrot.lane.b32.xlu0 %v3286, 113
        %v3563 = vpop.permute.xlu0 %3562
        %3564 = vrot.lane.b32.xlu0 %v3288, 113
        %v3565 = vpop.permute.xlu0 %3564
        %3566 = vrot.lane.b32.xlu0 %v3290, 113
        %v3567 = vpop.permute.xlu0 %3566
        %3568 = vrot.lane.b32.xlu0 %v3285, 113
        %v3569 = vpop.permute.xlu0 %3568
        %3570 = vrot.lane.b32.xlu0 %v3287, 113
        %v3571 = vpop.permute.xlu0 %3570
        %3572 = vrot.lane.b32.xlu0 %v3289, 113
        %v3573 = vpop.permute.xlu0 %3572
        %3574 = vrot.lane.b32.xlu0 %v3291, 113
        %v3575 = vpop.permute.xlu0 %3574
        %v3576 = vsel %vm579, %v3561, %v3569
        %v3577 = vsel %vm579, %v3563, %v3571
        %v3578 = vsel %vm579, %v3565, %v3573
        %v3579 = vsel %vm579, %v3567, %v3575
        %v3580 = vsel %vm579, %v3569, %v3561
        %v3581 = vsel %vm579, %v3571, %v3563
        %v3582 = vsel %vm579, %v3573, %v3565
        %v3583 = vsel %vm579, %v3575, %v3567
        %v3584 = vld [vmem:[%s588] ss:$8 sm:$0x3]
        %v3586 = vlaneseq
        %v3587 = vshrl.u32 %v3586, 7
        %v3588 = vsub.s32 0, %v3587
        %v3589 = vrot.slane %v3584, %v3588
        %v3590 = vlaneseq
        %v3591 = vshrl.u32 %v3590, 7
        %v3592 = vsub.s32 1, %v3591
        %v3593 = vrot.slane %v3584, %v3592
        %v3596 = vmul.f32 %v3576, %v3589
        %v3597 = vmul.f32 %v3580, %v3593
        %v3598 = vmul.f32 %v3577, %v3589
        %v3599 = vmul.f32 %v3581, %v3593
        %v3600 = vmul.f32 %v3578, %v3589
        %v3601 = vmul.f32 %v3582, %v3593
        %v3602 = vmul.f32 %v3579, %v3589
        %v3603 = vmul.f32 %v3583, %v3593
        %3604 = vst [vmem:[#allocation3 + $0x180] sm:$0xff] %v3596
        %3605 = vst [vmem:[#allocation3 + $0x188] sm:$0xff] %v3597
        %3606 = vst [vmem:[#allocation3 + $0x190] sm:$0xff] %v3598
        %3607 = vst [vmem:[#allocation3 + $0x198] sm:$0xff] %v3599
        %3608 = vst [vmem:[#allocation3 + $0x1a0] sm:$0xff] %v3600
        %3609 = vst [vmem:[#allocation3 + $0x1a8] sm:$0xff] %v3601
        %3610 = vst [vmem:[#allocation3 + $0x1b0] sm:$0xff] %v3602
        %3611 = vst [vmem:[#allocation3 + $0x1b8] sm:$0xff] %v3603
        %3612 = vrot.lane.b32.xlu0 %v3284, 112
        %v3613 = vpop.permute.xlu0 %3612
        %3614 = vrot.lane.b32.xlu0 %v3286, 112
        %v3615 = vpop.permute.xlu0 %3614
        %3616 = vrot.lane.b32.xlu0 %v3288, 112
        %v3617 = vpop.permute.xlu0 %3616
        %3618 = vrot.lane.b32.xlu0 %v3290, 112
        %v3619 = vpop.permute.xlu0 %3618
        %3620 = vrot.lane.b32.xlu0 %v3285, 112
        %v3621 = vpop.permute.xlu0 %3620
        %3622 = vrot.lane.b32.xlu0 %v3287, 112
        %v3623 = vpop.permute.xlu0 %3622
        %3624 = vrot.lane.b32.xlu0 %v3289, 112
        %v3625 = vpop.permute.xlu0 %3624
        %3626 = vrot.lane.b32.xlu0 %v3291, 112
        %v3627 = vpop.permute.xlu0 %3626
        %v3628 = vsel %vm633, %v3613, %v3621
        %v3629 = vsel %vm633, %v3615, %v3623
        %v3630 = vsel %vm633, %v3617, %v3625
        %v3631 = vsel %vm633, %v3619, %v3627
        %v3632 = vsel %vm633, %v3621, %v3613
        %v3633 = vsel %vm633, %v3623, %v3615
        %v3634 = vsel %vm633, %v3625, %v3617
        %v3635 = vsel %vm633, %v3627, %v3619
        %v3636 = vld [vmem:[%s642] ss:$8 sm:$0x3]
        %v3638 = vlaneseq
        %v3639 = vshrl.u32 %v3638, 7
        %v3640 = vsub.s32 0, %v3639
        %v3641 = vrot.slane %v3636, %v3640
        %v3642 = vlaneseq
        %v3643 = vshrl.u32 %v3642, 7
        %v3644 = vsub.s32 1, %v3643
        %v3645 = vrot.slane %v3636, %v3644
        %v3648 = vmul.f32 %v3628, %v3641
        %v3649 = vmul.f32 %v3632, %v3645
        %v3650 = vmul.f32 %v3629, %v3641
        %v3651 = vmul.f32 %v3633, %v3645
        %v3652 = vmul.f32 %v3630, %v3641
        %v3653 = vmul.f32 %v3634, %v3645
        %v3654 = vmul.f32 %v3631, %v3641
        %v3655 = vmul.f32 %v3635, %v3645
        %3656 = vst [vmem:[#allocation3 + $0x1c0] sm:$0xff] %v3648
        %3657 = vst [vmem:[#allocation3 + $0x1c8] sm:$0xff] %v3649
        %3658 = vst [vmem:[#allocation3 + $0x1d0] sm:$0xff] %v3650
        %3659 = vst [vmem:[#allocation3 + $0x1d8] sm:$0xff] %v3651
        %3660 = vst [vmem:[#allocation3 + $0x1e0] sm:$0xff] %v3652
        %3661 = vst [vmem:[#allocation3 + $0x1e8] sm:$0xff] %v3653
        %3662 = vst [vmem:[#allocation3 + $0x1f0] sm:$0xff] %v3654
        %3663 = vst [vmem:[#allocation3 + $0x1f8] sm:$0xff] %v3655
        %3664 = vrot.lane.b32.xlu0 %v3284, 111
        %v3665 = vpop.permute.xlu0 %3664
        %3666 = vrot.lane.b32.xlu0 %v3286, 111
        %v3667 = vpop.permute.xlu0 %3666
        %3668 = vrot.lane.b32.xlu0 %v3288, 111
        %v3669 = vpop.permute.xlu0 %3668
        %3670 = vrot.lane.b32.xlu0 %v3290, 111
        %v3671 = vpop.permute.xlu0 %3670
        %3672 = vrot.lane.b32.xlu0 %v3285, 111
        %v3673 = vpop.permute.xlu0 %3672
        %3674 = vrot.lane.b32.xlu0 %v3287, 111
        %v3675 = vpop.permute.xlu0 %3674
        %3676 = vrot.lane.b32.xlu0 %v3289, 111
        %v3677 = vpop.permute.xlu0 %3676
        %3678 = vrot.lane.b32.xlu0 %v3291, 111
        %v3679 = vpop.permute.xlu0 %3678
        %v3680 = vsel %vm687, %v3665, %v3673
        %v3681 = vsel %vm687, %v3667, %v3675
        %v3682 = vsel %vm687, %v3669, %v3677
        %v3683 = vsel %vm687, %v3671, %v3679
        %v3684 = vsel %vm687, %v3673, %v3665
        %v3685 = vsel %vm687, %v3675, %v3667
        %v3686 = vsel %vm687, %v3677, %v3669
        %v3687 = vsel %vm687, %v3679, %v3671
        %v3688 = vld [vmem:[%s696] ss:$8 sm:$0x3]
        %v3690 = vlaneseq
        %v3691 = vshrl.u32 %v3690, 7
        %v3692 = vsub.s32 0, %v3691
        %v3693 = vrot.slane %v3688, %v3692
        %v3694 = vlaneseq
        %v3695 = vshrl.u32 %v3694, 7
        %v3696 = vsub.s32 1, %v3695
        %v3697 = vrot.slane %v3688, %v3696
        %v3700 = vmul.f32 %v3680, %v3693
        %v3701 = vmul.f32 %v3684, %v3697
        %v3702 = vmul.f32 %v3681, %v3693
        %v3703 = vmul.f32 %v3685, %v3697
        %v3704 = vmul.f32 %v3682, %v3693
        %v3705 = vmul.f32 %v3686, %v3697
        %v3706 = vmul.f32 %v3683, %v3693
        %v3707 = vmul.f32 %v3687, %v3697
        %3708 = vst [vmem:[#allocation3 + $0x200] sm:$0xff] %v3700
        %3709 = vst [vmem:[#allocation3 + $0x208] sm:$0xff] %v3701
        %3710 = vst [vmem:[#allocation3 + $0x210] sm:$0xff] %v3702
        %3711 = vst [vmem:[#allocation3 + $0x218] sm:$0xff] %v3703
        %3712 = vst [vmem:[#allocation3 + $0x220] sm:$0xff] %v3704
        %3713 = vst [vmem:[#allocation3 + $0x228] sm:$0xff] %v3705
        %3714 = vst [vmem:[#allocation3 + $0x230] sm:$0xff] %v3706
        %3715 = vst [vmem:[#allocation3 + $0x238] sm:$0xff] %v3707
        %s3716 = scalar_lea.vmem [#allocation4], 384
        %v3717 = vld [vmem:[%s3716] sm:$0xff]
        %v3718 = vld [vmem:[%s3716 + $0x8] sm:$0xff]
        %v3719 = vld [vmem:[%s3716 + $0x10] sm:$0xff]
        %v3720 = vld [vmem:[%s3716 + $0x18] sm:$0xff]
        %v3721 = vld [vmem:[%s3716 + $0x20] sm:$0xff]
        %v3722 = vld [vmem:[%s3716 + $0x28] sm:$0xff]
        %v3723 = vld [vmem:[%s3716 + $0x30] sm:$0xff]
        %v3724 = vld [vmem:[%s3716 + $0x38] sm:$0xff]
        %v3725 = vld [vmem:[%s3716 + $0x40] sm:$0xff]
        %v3726 = vld [vmem:[%s3716 + $0x48] sm:$0xff]
        %v3727 = vld [vmem:[%s3716 + $0x50] sm:$0xff]
        %v3728 = vld [vmem:[%s3716 + $0x58] sm:$0xff]
        %v3729 = vld [vmem:[#allocation3] sm:$0xff]
        %v3730 = vld [vmem:[#allocation3 + $0x8] sm:$0xff]
        %v3731 = vld [vmem:[#allocation3 + $0x10] sm:$0xff]
        %v3732 = vld [vmem:[#allocation3 + $0x18] sm:$0xff]
        %v3733 = vld [vmem:[#allocation3 + $0x20] sm:$0xff]
        %v3734 = vld [vmem:[#allocation3 + $0x28] sm:$0xff]
        %v3735 = vld [vmem:[#allocation3 + $0x30] sm:$0xff]
        %v3736 = vld [vmem:[#allocation3 + $0x38] sm:$0xff]
        %v3737 = vld [vmem:[#allocation3 + $0x40] sm:$0xff]
        %v3738 = vld [vmem:[#allocation3 + $0x48] sm:$0xff]
        %v3739 = vld [vmem:[#allocation3 + $0x50] sm:$0xff]
        %v3740 = vld [vmem:[#allocation3 + $0x58] sm:$0xff]
        %v3741 = vld [vmem:[#allocation3 + $0x60] sm:$0xff]
        %v3742 = vld [vmem:[#allocation3 + $0x68] sm:$0xff]
        %v3743 = vld [vmem:[#allocation3 + $0x70] sm:$0xff]
        %v3744 = vld [vmem:[#allocation3 + $0x78] sm:$0xff]
        %v3745 = vld [vmem:[#allocation3 + $0x80] sm:$0xff]
        %v3746 = vld [vmem:[#allocation3 + $0x88] sm:$0xff]
        %v3747 = vld [vmem:[#allocation3 + $0x90] sm:$0xff]
        %v3748 = vld [vmem:[#allocation3 + $0x98] sm:$0xff]
        %v3749 = vld [vmem:[#allocation3 + $0xa0] sm:$0xff]
        %v3750 = vld [vmem:[#allocation3 + $0xa8] sm:$0xff]
        %v3751 = vld [vmem:[#allocation3 + $0xb0] sm:$0xff]
        %v3752 = vld [vmem:[#allocation3 + $0xb8] sm:$0xff]
        %v3753 = vld [vmem:[#allocation3 + $0xc0] sm:$0xff]
        %v3754 = vld [vmem:[#allocation3 + $0xc8] sm:$0xff]
        %v3755 = vld [vmem:[#allocation3 + $0xd0] sm:$0xff]
        %v3756 = vld [vmem:[#allocation3 + $0xd8] sm:$0xff]
        %v3757 = vld [vmem:[#allocation3 + $0xe0] sm:$0xff]
        %v3758 = vld [vmem:[#allocation3 + $0xe8] sm:$0xff]
        %v3759 = vld [vmem:[#allocation3 + $0xf0] sm:$0xff]
        %v3760 = vld [vmem:[#allocation3 + $0xf8] sm:$0xff]
        %v3761 = vld [vmem:[#allocation3 + $0x100] sm:$0xff]
        %v3762 = vld [vmem:[#allocation3 + $0x108] sm:$0xff]
        %v3763 = vld [vmem:[#allocation3 + $0x110] sm:$0xff]
        %v3764 = vld [vmem:[#allocation3 + $0x118] sm:$0xff]
        %v3765 = vld [vmem:[#allocation3 + $0x120] sm:$0xff]
        %v3766 = vld [vmem:[#allocation3 + $0x128] sm:$0xff]
        %v3767 = vld [vmem:[#allocation3 + $0x130] sm:$0xff]
        %v3768 = vld [vmem:[#allocation3 + $0x138] sm:$0xff]
        %v3769 = vld [vmem:[#allocation3 + $0x140] sm:$0xff]
        %v3770 = vld [vmem:[#allocation3 + $0x148] sm:$0xff]
        %v3771 = vld [vmem:[#allocation3 + $0x150] sm:$0xff]
        %v3772 = vld [vmem:[#allocation3 + $0x158] sm:$0xff]
        %v3773 = vld [vmem:[#allocation3 + $0x160] sm:$0xff]
        %v3774 = vld [vmem:[#allocation3 + $0x168] sm:$0xff]
        %v3775 = vld [vmem:[#allocation3 + $0x170] sm:$0xff]
        %v3776 = vld [vmem:[#allocation3 + $0x178] sm:$0xff]
        %v3777 = vld [vmem:[#allocation3 + $0x180] sm:$0xff]
        %v3778 = vld [vmem:[#allocation3 + $0x188] sm:$0xff]
        %v3779 = vld [vmem:[#allocation3 + $0x190] sm:$0xff]
        %v3780 = vld [vmem:[#allocation3 + $0x198] sm:$0xff]
        %v3781 = vld [vmem:[#allocation3 + $0x1a0] sm:$0xff]
        %v3782 = vld [vmem:[#allocation3 + $0x1a8] sm:$0xff]
        %v3783 = vld [vmem:[#allocation3 + $0x1b0] sm:$0xff]
        %v3784 = vld [vmem:[#allocation3 + $0x1b8] sm:$0xff]
        %v3785 = vld [vmem:[#allocation3 + $0x1c0] sm:$0xff]
        %v3786 = vld [vmem:[#allocation3 + $0x1c8] sm:$0xff]
        %v3787 = vld [vmem:[#allocation3 + $0x1d0] sm:$0xff]
        %v3788 = vld [vmem:[#allocation3 + $0x1d8] sm:$0xff]
        %v3789 = vld [vmem:[#allocation3 + $0x1e0] sm:$0xff]
        %v3790 = vld [vmem:[#allocation3 + $0x1e8] sm:$0xff]
        %v3791 = vld [vmem:[#allocation3 + $0x1f0] sm:$0xff]
        %v3792 = vld [vmem:[#allocation3 + $0x1f8] sm:$0xff]
        %v3793 = vld [vmem:[#allocation3 + $0x200] sm:$0xff]
        %v3794 = vld [vmem:[#allocation3 + $0x208] sm:$0xff]
        %v3795 = vld [vmem:[#allocation3 + $0x210] sm:$0xff]
        %v3796 = vld [vmem:[#allocation3 + $0x218] sm:$0xff]
        %v3797 = vld [vmem:[#allocation3 + $0x220] sm:$0xff]
        %v3798 = vld [vmem:[#allocation3 + $0x228] sm:$0xff]
        %v3799 = vld [vmem:[#allocation3 + $0x230] sm:$0xff]
        %v3800 = vld [vmem:[#allocation3 + $0x238] sm:$0xff]
        %s3801 = scalar_lea.vmem %s4, 128
        %v3802 = vld [vmem:[%s3801] sm:$0xff]
        %v3803 = vld [vmem:[%s3801 + $0x8] sm:$0xff]
        %v3804 = vld [vmem:[%s3801 + $0x10] sm:$0xff]
        %v3805 = vld [vmem:[%s3801 + $0x18] sm:$0xff]
        %3807 = vset.pattern.permute.xlu0 0
        %3808 = vperm.xlu0 %3807, %v3802
        %v3809 = vpop.permute.xlu0 %3808
        %3812 = vset.pattern.permute.xlu0 0
        %3813 = vperm.xlu0 %3812, %v3803
        %v3814 = vpop.permute.xlu0 %3813
        %3816 = vset.pattern.permute.xlu0 0
        %3817 = vperm.xlu0 %3816, %v3804
        %v3818 = vpop.permute.xlu0 %3817
        %3820 = vset.pattern.permute.xlu0 0
        %3821 = vperm.xlu0 %3820, %v3805
        %v3822 = vpop.permute.xlu0 %3821
        %v3824 = vsel %vm833, %v3719, 0
        %v3827 = vsel %vm833, %v3722, 0
        %v3830 = vsel %vm833, %v3725, 0
        %v3833 = vsel %vm833, %v3728, 0
        %3835 = vmatprep.subr.mxu0 %v3730
        %3836 = vmatpush1.msra.mxu0 %v3729
        %3837 = vmatprep.subr.mxu0 %v3732
        %3838 = vmatpush1.msra.mxu0 %v3731
        %3839 = vmatprep.subr.mxu0 %v3734
        %3840 = vmatpush1.msra.mxu0 %v3733
        %3841 = vmatprep.subr.mxu0 %v3736
        %3842 = vmatpush1.msra.mxu0 %v3735
        %3843 = vmatprep.subr.mxu0 %v3738
        %3844 = vmatpush1.msra.mxu0 %v3737
        %3845 = vmatprep.subr.mxu0 %v3740
        %3846 = vmatpush1.msra.mxu0 %v3739
        %3847 = vmatprep.subr.mxu0 %v3742
        %3848 = vmatpush1.msra.mxu0 %v3741
        %3849 = vmatprep.subr.mxu0 %v3744
        %3850 = vmatpush1.msra.mxu0 %v3743
        %3851 = vmatprep.subr.mxu0 %v3746
        %3852 = vmatpush1.msra.mxu0 %v3745
        %3853 = vmatprep.subr.mxu0 %v3748
        %3854 = vmatpush1.msra.mxu0 %v3747
        %3855 = vmatprep.subr.mxu0 %v3750
        %3856 = vmatpush1.msra.mxu0 %v3749
        %3857 = vmatprep.subr.mxu0 %v3752
        %3858 = vmatpush1.msra.mxu0 %v3751
        %3859 = vmatprep.subr.mxu0 %v3754
        %3860 = vmatpush1.msra.mxu0 %v3753
        %3861 = vmatprep.subr.mxu0 %v3756
        %3862 = vmatpush1.msra.mxu0 %v3755
        %3863 = vmatprep.subr.mxu0 %v3758
        %3864 = vmatpush1.msra.mxu0 %v3757
        %3865 = vmatprep.subr.mxu0 %v3760
        %3866 = vmatpush1.msra.mxu0 %v3759
        %3867 = vmatprep.subr.mxu0 %v3762
        %3868 = vmatpush1.msra.mxu0 %v3761
        %3869 = vmatprep.subr.mxu0 %v3764
        %3870 = vmatpush1.msra.mxu0 %v3763
        %3871 = vmatprep.subr.mxu0 %v3766
        %3872 = vmatpush1.msra.mxu0 %v3765
        %3873 = vmatprep.subr.mxu0 %v3768
        %3874 = vmatpush1.msra.mxu0 %v3767
        %3875 = vmatprep.subr.mxu0 %v3770
        %3876 = vmatpush1.msra.mxu0 %v3769
        %3877 = vmatprep.subr.mxu0 %v3772
        %3878 = vmatpush1.msra.mxu0 %v3771
        %3879 = vmatprep.subr.mxu0 %v3774
        %3880 = vmatpush1.msra.mxu0 %v3773
        %3881 = vmatprep.subr.mxu0 %v3776
        %3882 = vmatpush1.msra.mxu0 %v3775
        %3883 = vmatprep.subr.mxu0 %v3778
        %3884 = vmatpush1.msra.mxu0 %v3777
        %3885 = vmatprep.subr.mxu0 %v3780
        %3886 = vmatpush1.msra.mxu0 %v3779
        %3887 = vmatprep.subr.mxu0 %v3782
        %3888 = vmatpush1.msra.mxu0 %v3781
        %3889 = vmatprep.subr.mxu0 %v3784
        %3890 = vmatpush1.msra.mxu0 %v3783
        %3891 = vmatprep.subr.mxu0 %v3786
        %3892 = vmatpush1.msra.mxu0 %v3785
        %3893 = vmatprep.subr.mxu0 %v3788
        %3894 = vmatpush1.msra.mxu0 %v3787
        %3895 = vmatprep.subr.mxu0 %v3790
        %3896 = vmatpush1.msra.mxu0 %v3789
        %3897 = vmatprep.subr.mxu0 %v3792
        %3898 = vmatpush1.msra.mxu0 %v3791
        %3899 = vmatprep.mubr.f32.mxu0 %v3718
        %3900 = vmatmul.mubr.f32.gmra.mrb[0].mxu0 %v3717
        %v3901 = vpop.f32.mrb[0].mxu0
        %v3902 = vadd.f32 %v3809, %v3901
        %v3903 = vpop.f32.mrb[0].mxu0
        %v3904 = vadd.f32 %v3809, %v3903
        %3905 = vmatprep.mubr.f32.mxu0 %v3721
        %3906 = vmatmul.mubr.f32.gmra.mrb[0].mxu0 %v3720
        %v3907 = vpop.f32.mrb[0].mxu0
        %v3908 = vpop.f32.mrb[0].mxu0
        %3909 = vmatprep.mubr.f32.mxu0 %v3724
        %3910 = vmatmul.mubr.f32.gmra.mrb[0].mxu0 %v3723
        %v3911 = vpop.f32.mrb[0].mxu0
        %v3912 = vpop.f32.mrb[0].mxu0
        %3913 = vmatprep.mubr.f32.mxu0 %v3727
        %3914 = vmatmul.mubr.f32.gmra.mrb[0].mxu0 %v3726
        %v3915 = vpop.f32.mrb[0].mxu0
        %v3916 = vpop.f32.mrb[0].mxu0
        %3917 = vdwg.mxu0
        %3918 = vmatprep.subr.mxu0 %v3794
        %3919 = vmatpush1.msra.mxu0 %v3793
        %3920 = vmatprep.subr.mxu0 %v3796
        %3921 = vmatpush1.msra.mxu0 %v3795
        %3922 = vmatprep.subr.mxu0 %v3798
        %3923 = vmatpush1.msra.mxu0 %v3797
        %3924 = vmatprep.subr.mxu0 %v3800
        %3925 = vmatpush1.msra.mxu0 %v3799
        %3926 = vmatprep.subr.mxu0 0.0
        %3927 = vmatpush1.msra.mxu0 0.0
        %3928 = vmatprep.subr.mxu0 0.0
        %3929 = vmatpush1.msra.mxu0 0.0
        %3930 = vmatprep.subr.mxu0 0.0
        %3931 = vmatpush1.msra.mxu0 0.0
        %3932 = vmatprep.subr.mxu0 0.0
        %3933 = vmatpush1.msra.mxu0 0.0
        %3934 = vmatprep.subr.mxu0 0.0
        %3935 = vmatpush1.msra.mxu0 0.0
        %3936 = vmatprep.subr.mxu0 0.0
        %3937 = vmatpush1.msra.mxu0 0.0
        %3938 = vmatprep.subr.mxu0 0.0
        %3939 = vmatpush1.msra.mxu0 0.0
        %3940 = vmatprep.subr.mxu0 0.0
        %3941 = vmatpush1.msra.mxu0 0.0
        %3942 = vmatprep.subr.mxu0 0.0
        %3943 = vmatpush1.msra.mxu0 0.0
        %3944 = vmatprep.subr.mxu0 0.0
        %3945 = vmatpush1.msra.mxu0 0.0
        %3946 = vmatprep.subr.mxu0 0.0
        %3947 = vmatpush1.msra.mxu0 0.0
        %3948 = vmatprep.subr.mxu0 0.0
        %3949 = vmatpush1.msra.mxu0 0.0
        %3950 = vmatprep.subr.mxu0 0.0
        %3951 = vmatpush1.msra.mxu0 0.0
        %3952 = vmatprep.subr.mxu0 0.0
        %3953 = vmatpush1.msra.mxu0 0.0
        %3954 = vmatprep.subr.mxu0 0.0
        %3955 = vmatpush1.msra.mxu0 0.0
        %3956 = vmatprep.subr.mxu0 0.0
        %3957 = vmatpush1.msra.mxu0 0.0
        %3958 = vmatprep.subr.mxu0 0.0
        %3959 = vmatpush1.msra.mxu0 0.0
        %3960 = vmatprep.subr.mxu0 0.0
        %3961 = vmatpush1.msra.mxu0 0.0
        %3962 = vmatprep.subr.mxu0 0.0
        %3963 = vmatpush1.msra.mxu0 0.0
        %3964 = vmatprep.subr.mxu0 0.0
        %3965 = vmatpush1.msra.mxu0 0.0
        %3966 = vmatprep.subr.mxu0 0.0
        %3967 = vmatpush1.msra.mxu0 0.0
        %3968 = vmatprep.subr.mxu0 0.0
        %3969 = vmatpush1.msra.mxu0 0.0
        %3970 = vmatprep.subr.mxu0 0.0
        %3971 = vmatpush1.msra.mxu0 0.0
        %3972 = vmatprep.subr.mxu0 0.0
        %3973 = vmatpush1.msra.mxu0 0.0
        %3974 = vmatprep.subr.mxu0 0.0
        %3975 = vmatpush1.msra.mxu0 0.0
        %3976 = vmatprep.subr.mxu0 0.0
        %3977 = vmatpush1.msra.mxu0 0.0
        %3978 = vmatprep.subr.mxu0 0.0
        %3979 = vmatpush1.msra.mxu0 0.0
        %3980 = vmatprep.subr.mxu0 0.0
        %3981 = vmatpush1.msra.mxu0 0.0
        %3982 = vmatprep.mubr.f32.mxu0 0.0
        %3983 = vmatmul.mubr.f32.gmra.mrb[0].mxu0 %v3824
        %v3984 = vpop.f32.mrb[0].mxu0
        %v3985 = vadd.f32 %v3902, %v3984
        %v3986 = vpop.f32.mrb[0].mxu0
        %v3987 = vadd.f32 %v3904, %v3986
        %3988 = vmatprep.mubr.f32.mxu0 0.0
        %3989 = vmatmul.mubr.f32.gmra.mrb[0].mxu0 %v3827
        %v3990 = vpop.f32.mrb[0].mxu0
        %v3991 = vpop.f32.mrb[0].mxu0
        %3992 = vmatprep.mubr.f32.mxu0 0.0
        %3993 = vmatmul.mubr.f32.gmra.mrb[0].mxu0 %v3830
        %v3994 = vpop.f32.mrb[0].mxu0
        %v3995 = vpop.f32.mrb[0].mxu0
        %3996 = vmatprep.mubr.f32.mxu0 0.0
        %3997 = vmatmul.mubr.f32.gmra.mrb[0].mxu0 %v3833
        %v3998 = vpop.f32.mrb[0].mxu0
        %v3999 = vpop.f32.mrb[0].mxu0
        %4000 = vdwg.mxu0
        %v4001 = vlaneseq
        %v4002 = vshrl.u32 %v4001, 7
        %v4003 = vsub.s32 0, %v4002
        %v4004 = vrot.slane %v3985, %v4003
        %v4005 = vlaneseq
        %v4006 = vshrl.u32 %v4005, 7
        %v4007 = vsub.s32 0, %v4006
        %v4008 = vrot.slane %v3987, %v4007
        %v4011 = vcombine.low %v4004, %v4008
        %v4013 = vadd.f32 %v262, %v4011
        %4014 = vst [vmem:[%s259] sm:$0x77] %v4013
        %p4015 = scmp.lt.s32.totalorder %s17, 1
        %s4016 = scalar_select %p4015, %s17, 1
        %s4017 = smul.addr %s4016, 2
        %s4018 = smul.addr %s4017, 4
        %s4019 = scalar_lea.vmem %s5, %s4018
        // Predicated region
        $region45: #{tpu_custom_call.1} parent=39 // pred_check
          %p4020 = pneg %p150
        $region46: #{tpu_custom_call.1} parent=39 // pred_check_branch
          %4022 = sbr.rel (%p4020) target = $region48
        $region47: #{tpu_custom_call.1} parent=39 // pred_region
          _
        $region48: #{tpu_custom_call.1} parent=39 // pred_fallthru
          _
      $region40: #{tpu_custom_call.1} parent=5 // pred_fallthru
        _
      %p4023 = scmp.le.s32.totalorder 2, %s12
      // Predicated region
      $region49: #{tpu_custom_call.1} parent=5 // pred_check
        %p4024 = pneg %p4023
      $region50: #{tpu_custom_call.1} parent=5 // pred_check_branch
        %4026 = sbr.rel (%p4024) target = $region52
      $region51: #{tpu_custom_call.1} parent=5 // pred_region
        %s4027 = ssub.s32 %s12, 2
        // Predicated region
        $region53: #{tpu_custom_call.1} parent=51 // pred_check
          %p4028 = pneg %p156
        $region54: #{tpu_custom_call.1} parent=51 // pred_check_branch
          %4030 = sbr.rel (%p4028) target = $region56
        $region55: #{tpu_custom_call.1} parent=51 // pred_region
          %p4031 = scmp.lt.s32.totalorder %s18, 1
          %s4032 = scalar_select %p4031, %s18, 1
          %s4033 = smul.addr %s4032, 2
          %s4034 = smul.addr %s4033, 4
          %s4035 = scalar_lea.vmem %s5, %s4034
        $region56: #{tpu_custom_call.1} parent=51 // pred_fallthru
          _
      $region52: #{tpu_custom_call.1} parent=5 // pred_fallthru
        _
    $region6: #{tpu_custom_call.1} parent=1 // loop_footer
      %s16 = sadd.s32 1, %s12
    $region7: #{tpu_custom_call.1} parent=1 // loop_footer_branch
      %11 = sbr.rel target = $region3
    $region8: #{tpu_custom_call.1} parent=1 // loop_exit
      _
    %4036 = vsyncpa [#allocation5], 1
    %s4037 = scalar_lea.sflag [#allocation5], 1
    %4038 = vsyncpa %s4037, 1

</llo_original>
